<compile_context>
chip_gen: v6e
topology: v6e:2x2x1
jax: 0.10.0
libtpu: 0.0.40
codegen_flags: <defaults>
</compile_context>

<pallas_src>
import functools

import numpy as np
import jax
import jax.numpy as jnp
from jax.experimental import pallas as pl
from jax.experimental.pallas import tpu as pltpu

EPS = 1e-5      # torch.nn.BatchNorm2d default eps
LANE = 128


def _round_up(x, m):
    return (x + m - 1) // m * m


def _pick_geometry(mtot, padrows, cp_max, k):
    """Generation-aware row-tile sizing (VMEM budget + enough grid steps)."""
    halo_up = _round_up(max(padrows, 8), 8)
    try:
        vmem_cap = int(pltpu.get_tpu_info().vmem_capacity_bytes)
    except Exception:
        vmem_cap = 64 * 1024 * 1024          # conservative (v7x per-TC VMEM)
    vmem_limit = int(min(vmem_cap * 3 // 4, 100 * 1024 * 1024))

    # Bytes that scale with tile rows: f32 in/out streams (double buffered)
    # + f32 slab + compute-dtype im2col scratch (assume 4B, conservative).
    bpr = 4 * (2 * cp_max + 2 * cp_max) + 4 * (cp_max + k * k * cp_max)
    fixed = (2 * k * k * cp_max * cp_max * 4      # weights (double buffered)
             + 8 * halo_up * cp_max * 4           # head/tail halo streams
             + 64 * cp_max * 4)                   # scale/shift, stats, misc
    budget = max(vmem_limit * 3 // 4 - fixed, bpr * halo_up)
    tm_vmem = max(halo_up, budget // bpr // halo_up * halo_up)
    # Aim for >= ~8 grid steps total (>= 4 per TensorCore on a 2-TC v7x chip,
    # i.e. 2x the double-buffer pipeline depth); tiny inputs fall back.
    tm_steps = max(halo_up, mtot // (8 * halo_up) * halo_up)
    tm = int(max(halo_up, min(tm_vmem, tm_steps, 2048)))
    n_tiles = -(-mtot // tm)
    return tm, halo_up, n_tiles, vmem_limit


# --------------------------------------------------------------- kernels ----

def _conv_bn_stats_kernel(xh_ref, xm_ref, xt_ref, mh_ref, mm_ref, mt_ref,
                          ss_ref, w_ref, y_ref, sum_ref, sq_ref,
                          xslab, imcol,
                          *, k, wp, tm, halo_up, cp, prologue, compute_dtype):
    """(prev-layer BN+ReLU+mask prologue) -> conv (one big-K matmul) -> stats."""
    if prologue:
        scale = ss_ref[0:1, :]
        shift = ss_ref[1:2, :]

        def prep(x_r, m_r):
            # Previous layer's BatchNorm + ReLU, then re-zero the spatial pad
            # rows so the conv taps see proper zero padding.
            return jnp.maximum(x_r[...] * scale + shift, 0.0) * m_r[...]
    else:
        def prep(x_r, m_r):
            del m_r                      # layer-1 input already zero-padded
            return x_r[...]

    # Contiguous f32 slab of halo_up + tm + halo_up input rows.
    xslab[0:halo_up, :] = prep(xh_ref, mh_ref)
    xslab[halo_up:halo_up + tm, :] = prep(xm_ref, mm_ref)
    xslab[halo_up + tm:halo_up + tm + halo_up, :] = prep(xt_ref, mt_ref)

    # In-VMEM im2col: lane-aligned scatter of the k*k shifted row windows into
    # one (tm, k*k*cp) slab -> a single K = k*k*cp MXU contraction.
    p = (k - 1) // 2
    base = halo_up - (p * wp + p)
    for t in range(k * k):
        kh, kw = t // k, t % k
        off = base + kh * wp + kw                       # static tap offset
        imcol[:, t * cp:(t + 1) * cp] = (
            xslab[off:off + tm, :].astype(compute_dtype))

    y = jnp.dot(imcol[...], w_ref[...], preferred_element_type=jnp.float32)
    y_ref[...] = y

    # Per-tile partial BatchNorm statistics over valid (non-pad) rows, taken
    # from the live f32 accumulator (no reload of the output tile).
    m = mm_ref[...]                                     # (tm, 1), 0/1
    ym = y * m
    sum_ref[...] = jnp.sum(ym, axis=0, keepdims=True)[None]
    sq_ref[...] = jnp.sum(ym * y, axis=0, keepdims=True)[None]


def _bn_relu_kernel(y_ref, ss_ref, o_ref):
    """Final layer only: y*scale + shift, ReLU (pad rows are sliced off later)."""
    scale = ss_ref[0:1, :]
    shift = ss_ref[1:2, :]
    o_ref[...] = jnp.maximum(y_ref[...] * scale + shift, 0.0)


# ------------------------------------------------------------ layer logic ---

def _conv_layer_call(x, mask, ss, w2, *, n_tiles, tm, halo_up, cp, coutp, wp, k,
                     prologue, compute_dtype, vmem_limit):
    mg = n_tiles * tm
    q = tm // halo_up            # main-block size in halo_up units
    nb = mg // halo_up           # number of halo_up-sized row blocks

    def head_map(i):             # rows [i*tm - halo_up, i*tm), clamped at 0
        return (jnp.maximum(i * q - 1, 0), 0)

    def lo_map(i):               # rows [i*tm, (i+1)*tm)
        return (i, 0)

    def tail_map(i):             # rows [(i+1)*tm, (i+1)*tm + halo_up), clamped
        return (jnp.minimum((i + 1) * q, nb - 1), 0)

    kernel = functools.partial(
        _conv_bn_stats_kernel, k=k, wp=wp, tm=tm, halo_up=halo_up, cp=cp,
        prologue=prologue, compute_dtype=compute_dtype)

    cparams = pltpu.CompilerParams(
        dimension_semantics=("parallel",), vmem_limit_bytes=vmem_limit)

    return pl.pallas_call(
        kernel,
        grid=(n_tiles,),
        in_specs=[
            pl.BlockSpec((halo_up, cp), head_map),               # head halo
            pl.BlockSpec((tm, cp), lo_map),                      # main rows
            pl.BlockSpec((halo_up, cp), tail_map),               # tail halo
            pl.BlockSpec((halo_up, 1), head_map),                # masks (same
            pl.BlockSpec((tm, 1), lo_map),                       #  windows)
            pl.BlockSpec((halo_up, 1), tail_map),
            pl.BlockSpec((8, cp), lambda i: (0, 0)),             # prev scale/shift
            pl.BlockSpec((k * k * cp, coutp), lambda i: (0, 0)), # weights
        ],
        out_specs=[
            pl.BlockSpec((tm, coutp), lambda i: (i, 0)),         # pre-BN conv
            pl.BlockSpec((1, 1, coutp), lambda i: (i, 0, 0)),    # partial sum
            pl.BlockSpec((1, 1, coutp), lambda i: (i, 0, 0)),    # partial sumsq
        ],
        out_shape=[
            jax.ShapeDtypeStruct((mg, coutp), jnp.float32),
            jax.ShapeDtypeStruct((n_tiles, 1, coutp), jnp.float32),
            jax.ShapeDtypeStruct((n_tiles, 1, coutp), jnp.float32),
        ],
        scratch_shapes=[
            pltpu.VMEM((tm + 2 * halo_up, cp), jnp.float32),     # row slab
            pltpu.VMEM((tm, k * k * cp), compute_dtype),         # im2col slab
        ],
        compiler_params=cparams,
    )(x, x, x, mask, mask, mask, ss, w2)


def _bn_relu_call(y_pre, ss, *, n_tiles, tm, coutp, vmem_limit):
    mg = n_tiles * tm
    return pl.pallas_call(
        _bn_relu_kernel,
        grid=(n_tiles,),
        in_specs=[pl.BlockSpec((tm, coutp), lambda i: (i, 0)),
                  pl.BlockSpec((8, coutp), lambda i: (0, 0))],
        out_specs=pl.BlockSpec((tm, coutp), lambda i: (i, 0)),
        out_shape=jax.ShapeDtypeStruct((mg, coutp), jnp.float32),
        compiler_params=pltpu.CompilerParams(
            dimension_semantics=("parallel",), vmem_limit_bytes=vmem_limit),
    )(y_pre, ss)


def _fold_bn(psum, psq, gamma_p, beta_p, count):
    """Tiny Cout-sized glue: partial stats -> (scale, shift) for y*s + b."""
    coutp = psum.shape[-1]
    total = jnp.sum(psum, axis=(0, 1))
    total_sq = jnp.sum(psq, axis=(0, 1))
    mean = total / count
    var = jnp.maximum(total_sq / count - mean * mean, 0.0)   # biased (train)
    scale = gamma_p * jax.lax.rsqrt(var + EPS)
    shift = beta_p - mean * scale
    return jnp.zeros((8, coutp), jnp.float32).at[0].set(scale).at[1].set(shift)


def conv_block_forward(x_nchw, params, kernel_size=3,
                       compute_dtype=jnp.bfloat16):
    """Pallas implementation of Conv_block.forward (training-mode BN)."""
    n, cin, h, w = x_nchw.shape
    k = kernel_size
    p = (k - 1) // 2
    hp, wp = h + 2 * p, w + 2 * p
    mtot = n * hp * wp                       # rows in padded flat layout
    padrows = p * wp + p                     # reach of the conv taps in rows
    count = float(n * h * w)                 # valid rows per BN reduction

    cp0 = _round_up(cin, LANE)
    cp_max = max([cp0] + [_round_up(wl.shape[3], LANE) for (wl, _, _, _) in params])
    tm, halo_up, n_tiles, vmem_limit = _pick_geometry(mtot, padrows, cp_max, k)
    mg = n_tiles * tm
    assert halo_up >= padrows and tm % halo_up == 0

    # Validity mask of each padded-coordinate row (same for every layer).
    idx = np.arange(mg)
    rr = (idx % (hp * wp)) // wp
    cc = idx % wp
    valid = (idx < mtot) & (rr >= p) & (rr < p + h) & (cc >= p) & (cc < p + w)
    mask = jnp.asarray(valid.astype(np.float32).reshape(mg, 1))

    # First layer input: NCHW -> NHWC -> spatial pad -> flatten -> row/ch pad.
    fts = jnp.transpose(x_nchw, (0, 2, 3, 1))
    ap = jnp.pad(fts, ((0, 0), (p, p), (p, p), (0, 0)))
    x_cur = jnp.pad(ap.reshape(mtot, cin), ((0, mg - mtot), (0, cp0 - cin)))

    ss_prev = jnp.zeros((8, cp0), jnp.float32)   # unused by layer 1 (prologue off)
    y_pre = None
    cout = coutp = None
    for li, (w_hwio, _bias, gamma, beta) in enumerate(params):
        # _bias intentionally unused: training-mode BatchNorm subtracts the
        # batch mean, which absorbs the conv bias exactly (train mode only!).
        kk, _, ci, co = w_hwio.shape
        assert kk == k
        cp = _round_up(ci, LANE)
        coutp = _round_up(co, LANE)
        assert cp == x_cur.shape[1]
        w2 = jnp.pad(w_hwio, ((0, 0), (0, 0), (0, cp - ci), (0, coutp - co)))
        w2 = w2.reshape(k * k * cp, coutp).astype(compute_dtype)
        gamma_p = jnp.pad(gamma, (0, coutp - co))
        beta_p = jnp.pad(beta, (0, coutp - co))

        y_pre, psum, psq = _conv_layer_call(
            x_cur, mask, ss_prev, w2, n_tiles=n_tiles, tm=tm, halo_up=halo_up,
            cp=cp, coutp=coutp, wp=wp, k=k, prologue=(li > 0),
            compute_dtype=compute_dtype, vmem_limit=vmem_limit)

        ss_prev = _fold_bn(psum, psq, gamma_p, beta_p, count)
        x_cur = y_pre                      # consumed directly (no pad copy)
        cout = co

    # Only the last layer needs a standalone normalize pass.
    y_out = _bn_relu_call(y_pre, ss_prev, n_tiles=n_tiles, tm=tm, coutp=coutp,
                          vmem_limit=vmem_limit)

    y = y_out[:mtot].reshape(n, hp, wp, coutp)[:, p:p + h, p:p + w, :cout]
    return jnp.transpose(y, (0, 3, 1, 2))


# ------------------------------------------------------ params & reference --

def init_params(key, num_in, num_out, kernel_size, num_layers):
    """Deterministic synthetic parameters with the shapes Conv_block implies."""
    params = []
    cin = num_in
    for _ in range(num_layers):
        key, k1, k2, k3, k4 = jax.random.split(key, 5)
        w = 0.2 * jax.random.normal(
            k1, (kernel_size, kernel_size, cin, num_out), jnp.float32)
        b = 0.1 * jax.random.normal(k2, (num_out,), jnp.float32)
        g = 1.0 + 0.1 * jax.random.normal(k3, (num_out,), jnp.float32)
        beta = 0.1 * jax.random.normal(k4, (num_out,), jnp.float32)
        params.append((w, b, g, beta))
        cin = num_out
    return params


def ref_forward(x_nchw, params, kernel_size=3, compute_dtype=jnp.float32):
    """Pure-JAX reference (PyTorch forward in train mode).  `compute_dtype`
    rounds the conv operands the same way the Pallas kernel does (f32 acc)."""
    n_pad = (kernel_size - 1) // 2
    fts = jnp.transpose(x_nchw, (0, 2, 3, 1))
    for (w, b, g, beta) in params:
        xp = jnp.pad(fts, ((0, 0), (n_pad, n_pad), (n_pad, n_pad), (0, 0)))
        y = jax.lax.conv_general_dilated(
            xp.astype(compute_dtype), w.astype(compute_dtype),
            window_strides=(1, 1), padding='VALID',
            dimension_numbers=('NHWC', 'HWIO', 'NHWC'),
            preferred_element_type=jnp.float32) + b
        mean = jnp.mean(y, axis=(0, 1, 2), keepdims=True)
        var = jnp.mean(jnp.square(y - mean), axis=(0, 1, 2), keepdims=True)
        y = (y - mean) * jax.lax.rsqrt(var + EPS) * g + beta
        fts = jnp.maximum(y, 0.0)
    return jnp.transpose(fts, (0, 3, 1, 2))


if __name__ == "__main__":
    key = jax.random.PRNGKey(0)
    kx, kp = jax.random.split(key)

    N, C_IN, C_OUT, H, W = 2, 4, 4, 16, 16
    KERNEL_SIZE, NUM_LAYERS = 3, 2

    x = jax.random.normal(kx, (N, C_IN, H, W), jnp.float32)   # NCHW like PyTorch
    params = init_params(kp, C_IN, C_OUT, KERNEL_SIZE, NUM_LAYERS)

    # 1) Exact-semantics check: f32 MXU operands vs the f32 reference.
    fwd_f32 = jax.jit(functools.partial(
        conv_block_forward, kernel_size=KERNEL_SIZE, compute_dtype=jnp.float32))
    out_f32 = jax.block_until_ready(fwd_f32(x, params))
    assert out_f32.shape == (N, C_OUT, H, W)
    ref_f32 = ref_forward(x, params, KERNEL_SIZE, jnp.float32)
    np.testing.assert_allclose(np.asarray(out_f32), np.asarray(ref_f32),
                               rtol=1e-4, atol=1e-4)

    # 2) Fast path: bf16 MXU operands (f32 accumulate), checked against a
    #    reference that rounds the conv operands to bf16 at the same points.
    #    Tolerance reflects bf16 operand rounding of intermediate activations.
    fwd_bf16 = jax.jit(functools.partial(
        conv_block_forward, kernel_size=KERNEL_SIZE, compute_dtype=jnp.bfloat16))
    out_bf16 = jax.block_until_ready(fwd_bf16(x, params))
    assert out_bf16.shape == (N, C_OUT, H, W)
    ref_bf16 = ref_forward(x, params, KERNEL_SIZE, jnp.bfloat16)
    np.testing.assert_allclose(np.asarray(out_bf16), np.asarray(ref_bf16),
                               rtol=1e-2, atol=1e-2)

    print("KERNEL_OK")
</pallas_src>

<mosaic_0001>
module attributes {stable_mosaic.version = 11 : i64} {
  func.func @_conv_bn_stats_kernel(%arg0: i32, %arg1: memref<24x128xf32, #tpu.memory_space<vmem>>, %arg2: memref<72x128xf32, #tpu.memory_space<vmem>>, %arg3: memref<24x128xf32, #tpu.memory_space<vmem>>, %arg4: memref<24x1xf32, #tpu.memory_space<vmem>>, %arg5: memref<72x1xf32, #tpu.memory_space<vmem>>, %arg6: memref<24x1xf32, #tpu.memory_space<vmem>>, %arg7: memref<8x128xf32, #tpu.memory_space<vmem>>, %arg8: memref<1152x128xf32, #tpu.memory_space<vmem>>, %arg9: memref<72x128xf32, #tpu.memory_space<vmem>>, %arg10: memref<1x1x128xf32, #tpu.memory_space<vmem>>, %arg11: memref<1x1x128xf32, #tpu.memory_space<vmem>>, %arg12: memref<120x128xf32, #tpu.memory_space<vmem>>, %arg13: memref<72x1152xf32, #tpu.memory_space<vmem>>) attributes {dimension_semantics = [#tpu.dimension_semantics<parallel>], iteration_bounds = array<i64: 9>, scalar_prefetch = 0 : i64, scratch_operands = 2 : i64, tpu.core_type = #tpu.core_type<tc>, window_params = [{transform_indices = @transform_0, window_bounds = array<i64: 24, 128>}, {transform_indices = @transform_1, window_bounds = array<i64: 72, 128>}, {transform_indices = @transform_2, window_bounds = array<i64: 24, 128>}, {transform_indices = @transform_3, window_bounds = array<i64: 24, 1>}, {transform_indices = @transform_4, window_bounds = array<i64: 72, 1>}, {transform_indices = @transform_5, window_bounds = array<i64: 24, 1>}, {pipeline_mode = #tpu.pipeline_mode<synchronous>, transform_indices = @transform_6, window_bounds = array<i64: 8, 128>}, {pipeline_mode = #tpu.pipeline_mode<synchronous>, transform_indices = @transform_7, window_bounds = array<i64: 1152, 128>}, {transform_indices = @transform_8, window_bounds = array<i64: 72, 128>}, {transform_indices = @transform_9, window_bounds = array<i64: 1, 1, 128>}, {transform_indices = @transform_10, window_bounds = array<i64: 1, 1, 128>}]} {
    %c0 = arith.constant 0 : index
    %c0_0 = arith.constant 0 : index
    %0 = vector.load %arg1[%c0, %c0_0] : memref<24x128xf32, #tpu.memory_space<vmem>>, vector<24x128xf32>
    %c0_1 = arith.constant 0 : index
    %c0_2 = arith.constant 0 : index
    %1 = vector.load %arg12[%c0_1, %c0_2] : memref<120x128xf32, #tpu.memory_space<vmem>>, vector<24x128xf32>
    tpu.vector_store %arg12[%c0_1, %c0_2], %0 {strides = array<i32>} : memref<120x128xf32, #tpu.memory_space<vmem>>, vector<24x128xf32>,
    %c0_3 = arith.constant 0 : index
    %c0_4 = arith.constant 0 : index
    %2 = vector.load %arg2[%c0_3, %c0_4] : memref<72x128xf32, #tpu.memory_space<vmem>>, vector<72x128xf32>
    %c24 = arith.constant 24 : index
    %c0_5 = arith.constant 0 : index
    %3 = vector.load %arg12[%c24, %c0_5] : memref<120x128xf32, #tpu.memory_space<vmem>>, vector<72x128xf32>
    tpu.vector_store %arg12[%c24, %c0_5], %2 {strides = array<i32>} : memref<120x128xf32, #tpu.memory_space<vmem>>, vector<72x128xf32>,
    %c0_6 = arith.constant 0 : index
    %c0_7 = arith.constant 0 : index
    %4 = vector.load %arg3[%c0_6, %c0_7] : memref<24x128xf32, #tpu.memory_space<vmem>>, vector<24x128xf32>
    %c96 = arith.constant 96 : index
    %c0_8 = arith.constant 0 : index
    %5 = vector.load %arg12[%c96, %c0_8] : memref<120x128xf32, #tpu.memory_space<vmem>>, vector<24x128xf32>
    tpu.vector_store %arg12[%c96, %c0_8], %4 {strides = array<i32>} : memref<120x128xf32, #tpu.memory_space<vmem>>, vector<24x128xf32>,
    %c5 = arith.constant 5 : index
    %c0_9 = arith.constant 0 : index
    %6 = vector.load %arg12[%c5, %c0_9] : memref<120x128xf32, #tpu.memory_space<vmem>>, vector<72x128xf32>
    %c0_10 = arith.constant 0 : index
    %c0_11 = arith.constant 0 : index
    %7 = vector.load %arg13[%c0_10, %c0_11] : memref<72x1152xf32, #tpu.memory_space<vmem>>, vector<72x128xf32>
    tpu.vector_store %arg13[%c0_10, %c0_11], %6 {strides = array<i32>} : memref<72x1152xf32, #tpu.memory_space<vmem>>, vector<72x128xf32>,
    %c6 = arith.constant 6 : index
    %c0_12 = arith.constant 0 : index
    %8 = vector.load %arg12[%c6, %c0_12] : memref<120x128xf32, #tpu.memory_space<vmem>>, vector<72x128xf32>
    %c0_13 = arith.constant 0 : index
    %c128 = arith.constant 128 : index
    %9 = vector.load %arg13[%c0_13, %c128] : memref<72x1152xf32, #tpu.memory_space<vmem>>, vector<72x128xf32>
    tpu.vector_store %arg13[%c0_13, %c128], %8 {strides = array<i32>} : memref<72x1152xf32, #tpu.memory_space<vmem>>, vector<72x128xf32>,
    %c7 = arith.constant 7 : index
    %c0_14 = arith.constant 0 : index
    %10 = vector.load %arg12[%c7, %c0_14] : memref<120x128xf32, #tpu.memory_space<vmem>>, vector<72x128xf32>
    %c0_15 = arith.constant 0 : index
    %c256 = arith.constant 256 : index
    %11 = vector.load %arg13[%c0_15, %c256] : memref<72x1152xf32, #tpu.memory_space<vmem>>, vector<72x128xf32>
    tpu.vector_store %arg13[%c0_15, %c256], %10 {strides = array<i32>} : memref<72x1152xf32, #tpu.memory_space<vmem>>, vector<72x128xf32>,
    %c23 = arith.constant 23 : index
    %c0_16 = arith.constant 0 : index
    %12 = vector.load %arg12[%c23, %c0_16] : memref<120x128xf32, #tpu.memory_space<vmem>>, vector<72x128xf32>
    %c0_17 = arith.constant 0 : index
    %c384 = arith.constant 384 : index
    %13 = vector.load %arg13[%c0_17, %c384] : memref<72x1152xf32, #tpu.memory_space<vmem>>, vector<72x128xf32>
    tpu.vector_store %arg13[%c0_17, %c384], %12 {strides = array<i32>} : memref<72x1152xf32, #tpu.memory_space<vmem>>, vector<72x128xf32>,
    %c24_18 = arith.constant 24 : index
    %c0_19 = arith.constant 0 : index
    %14 = vector.load %arg12[%c24_18, %c0_19] : memref<120x128xf32, #tpu.memory_space<vmem>>, vector<72x128xf32>
    %c0_20 = arith.constant 0 : index
    %c512 = arith.constant 512 : index
    %15 = vector.load %arg13[%c0_20, %c512] : memref<72x1152xf32, #tpu.memory_space<vmem>>, vector<72x128xf32>
    tpu.vector_store %arg13[%c0_20, %c512], %14 {strides = array<i32>} : memref<72x1152xf32, #tpu.memory_space<vmem>>, vector<72x128xf32>,
    %c25 = arith.constant 25 : index
    %c0_21 = arith.constant 0 : index
    %16 = vector.load %arg12[%c25, %c0_21] : memref<120x128xf32, #tpu.memory_space<vmem>>, vector<72x128xf32>
    %c0_22 = arith.constant 0 : index
    %c640 = arith.constant 640 : index
    %17 = vector.load %arg13[%c0_22, %c640] : memref<72x1152xf32, #tpu.memory_space<vmem>>, vector<72x128xf32>
    tpu.vector_store %arg13[%c0_22, %c640], %16 {strides = array<i32>} : memref<72x1152xf32, #tpu.memory_space<vmem>>, vector<72x128xf32>,
    %c41 = arith.constant 41 : index
    %c0_23 = arith.constant 0 : index
    %18 = vector.load %arg12[%c41, %c0_23] : memref<120x128xf32, #tpu.memory_space<vmem>>, vector<72x128xf32>
    %c0_24 = arith.constant 0 : index
    %c768 = arith.constant 768 : index
    %19 = vector.load %arg13[%c0_24, %c768] : memref<72x1152xf32, #tpu.memory_space<vmem>>, vector<72x128xf32>
    tpu.vector_store %arg13[%c0_24, %c768], %18 {strides = array<i32>} : memref<72x1152xf32, #tpu.memory_space<vmem>>, vector<72x128xf32>,
    %c42 = arith.constant 42 : index
    %c0_25 = arith.constant 0 : index
    %20 = vector.load %arg12[%c42, %c0_25] : memref<120x128xf32, #tpu.memory_space<vmem>>, vector<72x128xf32>
    %c0_26 = arith.constant 0 : index
    %c896 = arith.constant 896 : index
    %21 = vector.load %arg13[%c0_26, %c896] : memref<72x1152xf32, #tpu.memory_space<vmem>>, vector<72x128xf32>
    tpu.vector_store %arg13[%c0_26, %c896], %20 {strides = array<i32>} : memref<72x1152xf32, #tpu.memory_space<vmem>>, vector<72x128xf32>,
    %c43 = arith.constant 43 : index
    %c0_27 = arith.constant 0 : index
    %22 = vector.load %arg12[%c43, %c0_27] : memref<120x128xf32, #tpu.memory_space<vmem>>, vector<72x128xf32>
    %c0_28 = arith.constant 0 : index
    %c1024 = arith.constant 1024 : index
    %23 = vector.load %arg13[%c0_28, %c1024] : memref<72x1152xf32, #tpu.memory_space<vmem>>, vector<72x128xf32>
    tpu.vector_store %arg13[%c0_28, %c1024], %22 {strides = array<i32>} : memref<72x1152xf32, #tpu.memory_space<vmem>>, vector<72x128xf32>,
    %c0_29 = arith.constant 0 : index
    %c0_30 = arith.constant 0 : index
    %24 = vector.load %arg13[%c0_29, %c0_30] : memref<72x1152xf32, #tpu.memory_space<vmem>>, vector<72x1152xf32>
    %c0_31 = arith.constant 0 : index
    %c0_32 = arith.constant 0 : index
    %25 = vector.load %arg8[%c0_31, %c0_32] : memref<1152x128xf32, #tpu.memory_space<vmem>>, vector<1152x128xf32>
    %cst = arith.constant dense<0.000000e+00> : vector<72x128xf32>
    %26 = tpu.matmul %24, %25, %cst {dimension_numbers = #tpu.dot_dimension_numbers<[1], [0], [0], [1], [0, 0, 1, 1], [], []>} : vector<72x1152xf32>, vector<1152x128xf32>, vector<72x128xf32> -> vector<72x128xf32>
    %c0_33 = arith.constant 0 : index
    %c0_34 = arith.constant 0 : index
    %27 = vector.load %arg9[%c0_33, %c0_34] : memref<72x128xf32, #tpu.memory_space<vmem>>, vector<72x128xf32>
    tpu.vector_store %arg9[%c0_33, %c0_34], %26 {strides = array<i32>} : memref<72x128xf32, #tpu.memory_space<vmem>>, vector<72x128xf32>,
    %c0_35 = arith.constant 0 : index
    %c0_36 = arith.constant 0 : index
    %28 = vector.load %arg5[%c0_35, %c0_36] : memref<72x1xf32, #tpu.memory_space<vmem>>, vector<72x1xf32>
    %29 = vector.broadcast %28 : vector<72x1xf32> to vector<72x128xf32>
    %30 = arith.mulf %26, %29 : vector<72x128xf32>
    %cst_37 = arith.constant dense<0.000000e+00> : vector<128xf32>
    %31 = vector.multi_reduction <add>, %30, %cst_37 [0] : vector<72x128xf32> to vector<128xf32>
    %32 = vector.shape_cast %31 : vector<128xf32> to vector<1x128xf32>
    %33 = vector.shape_cast %32 : vector<1x128xf32> to vector<1x1x128xf32>
    %c0_38 = arith.constant 0 : index
    %c0_39 = arith.constant 0 : index
    %c0_40 = arith.constant 0 : index
    %34 = vector.load %arg10[%c0_38, %c0_39, %c0_40] : memref<1x1x128xf32, #tpu.memory_space<vmem>>, vector<1x1x128xf32>
    tpu.vector_store %arg10[%c0_38, %c0_39, %c0_40], %33 {strides = array<i32>} : memref<1x1x128xf32, #tpu.memory_space<vmem>>, vector<1x1x128xf32>,
    %35 = arith.mulf %30, %26 : vector<72x128xf32>
    %cst_41 = arith.constant dense<0.000000e+00> : vector<128xf32>
    %36 = vector.multi_reduction <add>, %35, %cst_41 [0] : vector<72x128xf32> to vector<128xf32>
    %37 = vector.shape_cast %36 : vector<128xf32> to vector<1x128xf32>
    %38 = vector.shape_cast %37 : vector<1x128xf32> to vector<1x1x128xf32>
    %c0_42 = arith.constant 0 : index
    %c0_43 = arith.constant 0 : index
    %c0_44 = arith.constant 0 : index
    %39 = vector.load %arg11[%c0_42, %c0_43, %c0_44] : memref<1x1x128xf32, #tpu.memory_space<vmem>>, vector<1x1x128xf32>
    tpu.vector_store %arg11[%c0_42, %c0_43, %c0_44], %38 {strides = array<i32>} : memref<1x1x128xf32, #tpu.memory_space<vmem>>, vector<1x1x128xf32>,
    return
  }
  func.func @transform_0(%arg0: i32) -> (i32, i32) {
    %c3_i32 = arith.constant 3 : i32
    %0 = arith.muli %arg0, %c3_i32 : i32
    %c1_i32 = arith.constant 1 : i32
    %1 = arith.subi %0, %c1_i32 : i32
    %c0_i32 = arith.constant 0 : i32
    %2 = arith.maxsi %1, %c0_i32 : i32
    %c0_i32_0 = arith.constant 0 : i32
    %c0_i32_1 = arith.constant 0 : i32
    return %2, %c0_i32_0 : i32, i32
  }
  func.func @transform_1(%arg0: i32) -> (i32, i32) {
    %c0_i32 = arith.constant 0 : i32
    %c0_i32_0 = arith.constant 0 : i32
    return %arg0, %c0_i32 : i32, i32
  }
  func.func @transform_2(%arg0: i32) -> (i32, i32) {
    %c1_i32 = arith.constant 1 : i32
    %0 = arith.addi %arg0, %c1_i32 : i32
    %c3_i32 = arith.constant 3 : i32
    %1 = arith.muli %0, %c3_i32 : i32
    %c26_i32 = arith.constant 26 : i32
    %2 = arith.minsi %1, %c26_i32 : i32
    %c0_i32 = arith.constant 0 : i32
    %c0_i32_0 = arith.constant 0 : i32
    return %2, %c0_i32 : i32, i32
  }
  func.func @transform_3(%arg0: i32) -> (i32, i32) {
    %c3_i32 = arith.constant 3 : i32
    %0 = arith.muli %arg0, %c3_i32 : i32
    %c1_i32 = arith.constant 1 : i32
    %1 = arith.subi %0, %c1_i32 : i32
    %c0_i32 = arith.constant 0 : i32
    %2 = arith.maxsi %1, %c0_i32 : i32
    %c0_i32_0 = arith.constant 0 : i32
    %c0_i32_1 = arith.constant 0 : i32
    return %2, %c0_i32_0 : i32, i32
  }
  func.func @transform_4(%arg0: i32) -> (i32, i32) {
    %c0_i32 = arith.constant 0 : i32
    %c0_i32_0 = arith.constant 0 : i32
    return %arg0, %c0_i32 : i32, i32
  }
  func.func @transform_5(%arg0: i32) -> (i32, i32) {
    %c1_i32 = arith.constant 1 : i32
    %0 = arith.addi %arg0, %c1_i32 : i32
    %c3_i32 = arith.constant 3 : i32
    %1 = arith.muli %0, %c3_i32 : i32
    %c26_i32 = arith.constant 26 : i32
    %2 = arith.minsi %1, %c26_i32 : i32
    %c0_i32 = arith.constant 0 : i32
    %c0_i32_0 = arith.constant 0 : i32
    return %2, %c0_i32 : i32, i32
  }
  func.func @transform_6(%arg0: i32) -> (i32, i32) {
    %c0_i32 = arith.constant 0 : i32
    %c0_i32_0 = arith.constant 0 : i32
    %c0_i32_1 = arith.constant 0 : i32
    return %c0_i32, %c0_i32_0 : i32, i32
  }
  func.func @transform_7(%arg0: i32) -> (i32, i32) {
    %c0_i32 = arith.constant 0 : i32
    %c0_i32_0 = arith.constant 0 : i32
    %c0_i32_1 = arith.constant 0 : i32
    return %c0_i32, %c0_i32_0 : i32, i32
  }
  func.func @transform_8(%arg0: i32) -> (i32, i32) {
    %c0_i32 = arith.constant 0 : i32
    %c0_i32_0 = arith.constant 0 : i32
    return %arg0, %c0_i32 : i32, i32
  }
  func.func @transform_9(%arg0: i32) -> (i32, i32, i32) {
    %c0_i32 = arith.constant 0 : i32
    %c0_i32_0 = arith.constant 0 : i32
    %c0_i32_1 = arith.constant 0 : i32
    return %arg0, %c0_i32, %c0_i32_0 : i32, i32, i32
  }
  func.func @transform_10(%arg0: i32) -> (i32, i32, i32) {
    %c0_i32 = arith.constant 0 : i32
    %c0_i32_0 = arith.constant 0 : i32
    %c0_i32_1 = arith.constant 0 : i32
    return %arg0, %c0_i32, %c0_i32_0 : i32, i32, i32
  }
}

module attributes {stable_mosaic.version = 11 : i64} {
  func.func @_bn_relu_kernel(%arg0: i32, %arg1: memref<72x128xf32, #tpu.memory_space<vmem>>, %arg2: memref<8x128xf32, #tpu.memory_space<vmem>>, %arg3: memref<72x128xf32, #tpu.memory_space<vmem>>) attributes {dimension_semantics = [#tpu.dimension_semantics<parallel>], iteration_bounds = array<i64: 9>, scalar_prefetch = 0 : i64, scratch_operands = 0 : i64, tpu.core_type = #tpu.core_type<tc>, window_params = [{transform_indices = @transform_0, window_bounds = array<i64: 72, 128>}, {pipeline_mode = #tpu.pipeline_mode<synchronous>, transform_indices = @transform_1, window_bounds = array<i64: 8, 128>}, {transform_indices = @transform_2, window_bounds = array<i64: 72, 128>}]} {
    %c0 = arith.constant 0 : index
    %c0_0 = arith.constant 0 : index
    %0 = vector.load %arg2[%c0, %c0_0] : memref<8x128xf32, #tpu.memory_space<vmem>>, vector<1x128xf32>
    %c1 = arith.constant 1 : index
    %c0_1 = arith.constant 0 : index
    %1 = vector.load %arg2[%c1, %c0_1] : memref<8x128xf32, #tpu.memory_space<vmem>>, vector<1x128xf32>
    %c0_2 = arith.constant 0 : index
    %c0_3 = arith.constant 0 : index
    %2 = vector.load %arg1[%c0_2, %c0_3] : memref<72x128xf32, #tpu.memory_space<vmem>>, vector<72x128xf32>
    %3 = vector.broadcast %0 : vector<1x128xf32> to vector<72x128xf32>
    %4 = arith.mulf %2, %3 : vector<72x128xf32>
    %5 = vector.broadcast %1 : vector<1x128xf32> to vector<72x128xf32>
    %6 = arith.addf %4, %5 : vector<72x128xf32>
    %cst = arith.constant 0.000000e+00 : f32
    %7 = vector.broadcast %cst : f32 to vector<72x128xf32>
    %8 = arith.maximumf %6, %7 : vector<72x128xf32>
    %c0_4 = arith.constant 0 : index
    %c0_5 = arith.constant 0 : index
    %9 = vector.load %arg3[%c0_4, %c0_5] : memref<72x128xf32, #tpu.memory_space<vmem>>, vector<72x128xf32>
    tpu.vector_store %arg3[%c0_4, %c0_5], %8 {strides = array<i32>} : memref<72x128xf32, #tpu.memory_space<vmem>>, vector<72x128xf32>,
    return
  }
  func.func @transform_0(%arg0: i32) -> (i32, i32) {
    %c0_i32 = arith.constant 0 : i32
    %c0_i32_0 = arith.constant 0 : i32
    return %arg0, %c0_i32 : i32, i32
  }
  func.func @transform_1(%arg0: i32) -> (i32, i32) {
    %c0_i32 = arith.constant 0 : i32
    %c0_i32_0 = arith.constant 0 : i32
    %c0_i32_1 = arith.constant 0 : i32
    return %c0_i32, %c0_i32_0 : i32, i32
  }
  func.func @transform_2(%arg0: i32) -> (i32, i32) {
    %c0_i32 = arith.constant 0 : i32
    %c0_i32_0 = arith.constant 0 : i32
    return %arg0, %c0_i32 : i32, i32
  }
}

module attributes {stable_mosaic.version = 11 : i64} {
  func.func @_conv_bn_stats_kernel(%arg0: i32, %arg1: memref<24x128xf32, #tpu.memory_space<vmem>>, %arg2: memref<72x128xf32, #tpu.memory_space<vmem>>, %arg3: memref<24x128xf32, #tpu.memory_space<vmem>>, %arg4: memref<24x1xf32, #tpu.memory_space<vmem>>, %arg5: memref<72x1xf32, #tpu.memory_space<vmem>>, %arg6: memref<24x1xf32, #tpu.memory_space<vmem>>, %arg7: memref<8x128xf32, #tpu.memory_space<vmem>>, %arg8: memref<1152x128xf32, #tpu.memory_space<vmem>>, %arg9: memref<72x128xf32, #tpu.memory_space<vmem>>, %arg10: memref<1x1x128xf32, #tpu.memory_space<vmem>>, %arg11: memref<1x1x128xf32, #tpu.memory_space<vmem>>, %arg12: memref<120x128xf32, #tpu.memory_space<vmem>>, %arg13: memref<72x1152xf32, #tpu.memory_space<vmem>>) attributes {dimension_semantics = [#tpu.dimension_semantics<parallel>], iteration_bounds = array<i64: 9>, scalar_prefetch = 0 : i64, scratch_operands = 2 : i64, tpu.core_type = #tpu.core_type<tc>, window_params = [{transform_indices = @transform_0, window_bounds = array<i64: 24, 128>}, {transform_indices = @transform_1, window_bounds = array<i64: 72, 128>}, {transform_indices = @transform_2, window_bounds = array<i64: 24, 128>}, {transform_indices = @transform_3, window_bounds = array<i64: 24, 1>}, {transform_indices = @transform_4, window_bounds = array<i64: 72, 1>}, {transform_indices = @transform_5, window_bounds = array<i64: 24, 1>}, {pipeline_mode = #tpu.pipeline_mode<synchronous>, transform_indices = @transform_6, window_bounds = array<i64: 8, 128>}, {pipeline_mode = #tpu.pipeline_mode<synchronous>, transform_indices = @transform_7, window_bounds = array<i64: 1152, 128>}, {transform_indices = @transform_8, window_bounds = array<i64: 72, 128>}, {transform_indices = @transform_9, window_bounds = array<i64: 1, 1, 128>}, {transform_indices = @transform_10, window_bounds = array<i64: 1, 1, 128>}]} {
    %c0 = arith.constant 0 : index
    %c0_0 = arith.constant 0 : index
    %0 = vector.load %arg7[%c0, %c0_0] : memref<8x128xf32, #tpu.memory_space<vmem>>, vector<1x128xf32>
    %c1 = arith.constant 1 : index
    %c0_1 = arith.constant 0 : index
    %1 = vector.load %arg7[%c1, %c0_1] : memref<8x128xf32, #tpu.memory_space<vmem>>, vector<1x128xf32>
    %c0_2 = arith.constant 0 : index
    %c0_3 = arith.constant 0 : index
    %2 = vector.load %arg1[%c0_2, %c0_3] : memref<24x128xf32, #tpu.memory_space<vmem>>, vector<24x128xf32>
    %3 = vector.broadcast %0 : vector<1x128xf32> to vector<24x128xf32>
    %4 = arith.mulf %2, %3 : vector<24x128xf32>
    %5 = vector.broadcast %1 : vector<1x128xf32> to vector<24x128xf32>
    %6 = arith.addf %4, %5 : vector<24x128xf32>
    %cst = arith.constant 0.000000e+00 : f32
    %7 = vector.broadcast %cst : f32 to vector<24x128xf32>
    %8 = arith.maximumf %6, %7 : vector<24x128xf32>
    %c0_4 = arith.constant 0 : index
    %c0_5 = arith.constant 0 : index
    %9 = vector.load %arg4[%c0_4, %c0_5] : memref<24x1xf32, #tpu.memory_space<vmem>>, vector<24x1xf32>
    %10 = vector.broadcast %9 : vector<24x1xf32> to vector<24x128xf32>
    %11 = arith.mulf %8, %10 : vector<24x128xf32>
    %c0_6 = arith.constant 0 : index
    %c0_7 = arith.constant 0 : index
    %12 = vector.load %arg12[%c0_6, %c0_7] : memref<120x128xf32, #tpu.memory_space<vmem>>, vector<24x128xf32>
    tpu.vector_store %arg12[%c0_6, %c0_7], %11 {strides = array<i32>} : memref<120x128xf32, #tpu.memory_space<vmem>>, vector<24x128xf32>,
    %c0_8 = arith.constant 0 : index
    %c0_9 = arith.constant 0 : index
    %13 = vector.load %arg2[%c0_8, %c0_9] : memref<72x128xf32, #tpu.memory_space<vmem>>, vector<72x128xf32>
    %14 = vector.broadcast %0 : vector<1x128xf32> to vector<72x128xf32>
    %15 = arith.mulf %13, %14 : vector<72x128xf32>
    %16 = vector.broadcast %1 : vector<1x128xf32> to vector<72x128xf32>
    %17 = arith.addf %15, %16 : vector<72x128xf32>
    %cst_10 = arith.constant 0.000000e+00 : f32
    %18 = vector.broadcast %cst_10 : f32 to vector<72x128xf32>
    %19 = arith.maximumf %17, %18 : vector<72x128xf32>
    %c0_11 = arith.constant 0 : index
    %c0_12 = arith.constant 0 : index
    %20 = vector.load %arg5[%c0_11, %c0_12] : memref<72x1xf32, #tpu.memory_space<vmem>>, vector<72x1xf32>
    %21 = vector.broadcast %20 : vector<72x1xf32> to vector<72x128xf32>
    %22 = arith.mulf %19, %21 : vector<72x128xf32>
    %c24 = arith.constant 24 : index
    %c0_13 = arith.constant 0 : index
    %23 = vector.load %arg12[%c24, %c0_13] : memref<120x128xf32, #tpu.memory_space<vmem>>, vector<72x128xf32>
    tpu.vector_store %arg12[%c24, %c0_13], %22 {strides = array<i32>} : memref<120x128xf32, #tpu.memory_space<vmem>>, vector<72x128xf32>,
    %c0_14 = arith.constant 0 : index
    %c0_15 = arith.constant 0 : index
    %24 = vector.load %arg3[%c0_14, %c0_15] : memref<24x128xf32, #tpu.memory_space<vmem>>, vector<24x128xf32>
    %25 = vector.broadcast %0 : vector<1x128xf32> to vector<24x128xf32>
    %26 = arith.mulf %24, %25 : vector<24x128xf32>
    %27 = vector.broadcast %1 : vector<1x128xf32> to vector<24x128xf32>
    %28 = arith.addf %26, %27 : vector<24x128xf32>
    %cst_16 = arith.constant 0.000000e+00 : f32
    %29 = vector.broadcast %cst_16 : f32 to vector<24x128xf32>
    %30 = arith.maximumf %28, %29 : vector<24x128xf32>
    %c0_17 = arith.constant 0 : index
    %c0_18 = arith.constant 0 : index
    %31 = vector.load %arg6[%c0_17, %c0_18] : memref<24x1xf32, #tpu.memory_space<vmem>>, vector<24x1xf32>
    %32 = vector.broadcast %31 : vector<24x1xf32> to vector<24x128xf32>
    %33 = arith.mulf %30, %32 : vector<24x128xf32>
    %c96 = arith.constant 96 : index
    %c0_19 = arith.constant 0 : index
    %34 = vector.load %arg12[%c96, %c0_19] : memref<120x128xf32, #tpu.memory_space<vmem>>, vector<24x128xf32>
    tpu.vector_store %arg12[%c96, %c0_19], %33 {strides = array<i32>} : memref<120x128xf32, #tpu.memory_space<vmem>>, vector<24x128xf32>,
    %c5 = arith.constant 5 : index
    %c0_20 = arith.constant 0 : index
    %35 = vector.load %arg12[%c5, %c0_20] : memref<120x128xf32, #tpu.memory_space<vmem>>, vector<72x128xf32>
    %c0_21 = arith.constant 0 : index
    %c0_22 = arith.constant 0 : index
    %36 = vector.load %arg13[%c0_21, %c0_22] : memref<72x1152xf32, #tpu.memory_space<vmem>>, vector<72x128xf32>
    tpu.vector_store %arg13[%c0_21, %c0_22], %35 {strides = array<i32>} : memref<72x1152xf32, #tpu.memory_space<vmem>>, vector<72x128xf32>,
    %c6 = arith.constant 6 : index
    %c0_23 = arith.constant 0 : index
    %37 = vector.load %arg12[%c6, %c0_23] : memref<120x128xf32, #tpu.memory_space<vmem>>, vector<72x128xf32>
    %c0_24 = arith.constant 0 : index
    %c128 = arith.constant 128 : index
    %38 = vector.load %arg13[%c0_24, %c128] : memref<72x1152xf32, #tpu.memory_space<vmem>>, vector<72x128xf32>
    tpu.vector_store %arg13[%c0_24, %c128], %37 {strides = array<i32>} : memref<72x1152xf32, #tpu.memory_space<vmem>>, vector<72x128xf32>,
    %c7 = arith.constant 7 : index
    %c0_25 = arith.constant 0 : index
    %39 = vector.load %arg12[%c7, %c0_25] : memref<120x128xf32, #tpu.memory_space<vmem>>, vector<72x128xf32>
    %c0_26 = arith.constant 0 : index
    %c256 = arith.constant 256 : index
    %40 = vector.load %arg13[%c0_26, %c256] : memref<72x1152xf32, #tpu.memory_space<vmem>>, vector<72x128xf32>
    tpu.vector_store %arg13[%c0_26, %c256], %39 {strides = array<i32>} : memref<72x1152xf32, #tpu.memory_space<vmem>>, vector<72x128xf32>,
    %c23 = arith.constant 23 : index
    %c0_27 = arith.constant 0 : index
    %41 = vector.load %arg12[%c23, %c0_27] : memref<120x128xf32, #tpu.memory_space<vmem>>, vector<72x128xf32>
    %c0_28 = arith.constant 0 : index
    %c384 = arith.constant 384 : index
    %42 = vector.load %arg13[%c0_28, %c384] : memref<72x1152xf32, #tpu.memory_space<vmem>>, vector<72x128xf32>
    tpu.vector_store %arg13[%c0_28, %c384], %41 {strides = array<i32>} : memref<72x1152xf32, #tpu.memory_space<vmem>>, vector<72x128xf32>,
    %c24_29 = arith.constant 24 : index
    %c0_30 = arith.constant 0 : index
    %43 = vector.load %arg12[%c24_29, %c0_30] : memref<120x128xf32, #tpu.memory_space<vmem>>, vector<72x128xf32>
    %c0_31 = arith.constant 0 : index
    %c512 = arith.constant 512 : index
    %44 = vector.load %arg13[%c0_31, %c512] : memref<72x1152xf32, #tpu.memory_space<vmem>>, vector<72x128xf32>
    tpu.vector_store %arg13[%c0_31, %c512], %43 {strides = array<i32>} : memref<72x1152xf32, #tpu.memory_space<vmem>>, vector<72x128xf32>,
    %c25 = arith.constant 25 : index
    %c0_32 = arith.constant 0 : index
    %45 = vector.load %arg12[%c25, %c0_32] : memref<120x128xf32, #tpu.memory_space<vmem>>, vector<72x128xf32>
    %c0_33 = arith.constant 0 : index
    %c640 = arith.constant 640 : index
    %46 = vector.load %arg13[%c0_33, %c640] : memref<72x1152xf32, #tpu.memory_space<vmem>>, vector<72x128xf32>
    tpu.vector_store %arg13[%c0_33, %c640], %45 {strides = array<i32>} : memref<72x1152xf32, #tpu.memory_space<vmem>>, vector<72x128xf32>,
    %c41 = arith.constant 41 : index
    %c0_34 = arith.constant 0 : index
    %47 = vector.load %arg12[%c41, %c0_34] : memref<120x128xf32, #tpu.memory_space<vmem>>, vector<72x128xf32>
    %c0_35 = arith.constant 0 : index
    %c768 = arith.constant 768 : index
    %48 = vector.load %arg13[%c0_35, %c768] : memref<72x1152xf32, #tpu.memory_space<vmem>>, vector<72x128xf32>
    tpu.vector_store %arg13[%c0_35, %c768], %47 {strides = array<i32>} : memref<72x1152xf32, #tpu.memory_space<vmem>>, vector<72x128xf32>,
    %c42 = arith.constant 42 : index
    %c0_36 = arith.constant 0 : index
    %49 = vector.load %arg12[%c42, %c0_36] : memref<120x128xf32, #tpu.memory_space<vmem>>, vector<72x128xf32>
    %c0_37 = arith.constant 0 : index
    %c896 = arith.constant 896 : index
    %50 = vector.load %arg13[%c0_37, %c896] : memref<72x1152xf32, #tpu.memory_space<vmem>>, vector<72x128xf32>
    tpu.vector_store %arg13[%c0_37, %c896], %49 {strides = array<i32>} : memref<72x1152xf32, #tpu.memory_space<vmem>>, vector<72x128xf32>,
    %c43 = arith.constant 43 : index
    %c0_38 = arith.constant 0 : index
    %51 = vector.load %arg12[%c43, %c0_38] : memref<120x128xf32, #tpu.memory_space<vmem>>, vector<72x128xf32>
    %c0_39 = arith.constant 0 : index
    %c1024 = arith.constant 1024 : index
    %52 = vector.load %arg13[%c0_39, %c1024] : memref<72x1152xf32, #tpu.memory_space<vmem>>, vector<72x128xf32>
    tpu.vector_store %arg13[%c0_39, %c1024], %51 {strides = array<i32>} : memref<72x1152xf32, #tpu.memory_space<vmem>>, vector<72x128xf32>,
    %c0_40 = arith.constant 0 : index
    %c0_41 = arith.constant 0 : index
    %53 = vector.load %arg13[%c0_40, %c0_41] : memref<72x1152xf32, #tpu.memory_space<vmem>>, vector<72x1152xf32>
    %c0_42 = arith.constant 0 : index
    %c0_43 = arith.constant 0 : index
    %54 = vector.load %arg8[%c0_42, %c0_43] : memref<1152x128xf32, #tpu.memory_space<vmem>>, vector<1152x128xf32>
    %cst_44 = arith.constant dense<0.000000e+00> : vector<72x128xf32>
    %55 = tpu.matmul %53, %54, %cst_44 {dimension_numbers = #tpu.dot_dimension_numbers<[1], [0], [0], [1], [0, 0, 1, 1], [], []>} : vector<72x1152xf32>, vector<1152x128xf32>, vector<72x128xf32> -> vector<72x128xf32>
    %c0_45 = arith.constant 0 : index
    %c0_46 = arith.constant 0 : index
    %56 = vector.load %arg9[%c0_45, %c0_46] : memref<72x128xf32, #tpu.memory_space<vmem>>, vector<72x128xf32>
    tpu.vector_store %arg9[%c0_45, %c0_46], %55 {strides = array<i32>} : memref<72x128xf32, #tpu.memory_space<vmem>>, vector<72x128xf32>,
    %c0_47 = arith.constant 0 : index
    %c0_48 = arith.constant 0 : index
    %57 = vector.load %arg5[%c0_47, %c0_48] : memref<72x1xf32, #tpu.memory_space<vmem>>, vector<72x1xf32>
    %58 = vector.broadcast %57 : vector<72x1xf32> to vector<72x128xf32>
    %59 = arith.mulf %55, %58 : vector<72x128xf32>
    %cst_49 = arith.constant dense<0.000000e+00> : vector<128xf32>
    %60 = vector.multi_reduction <add>, %59, %cst_49 [0] : vector<72x128xf32> to vector<128xf32>
    %61 = vector.shape_cast %60 : vector<128xf32> to vector<1x128xf32>
    %62 = vector.shape_cast %61 : vector<1x128xf32> to vector<1x1x128xf32>
    %c0_50 = arith.constant 0 : index
    %c0_51 = arith.constant 0 : index
    %c0_52 = arith.constant 0 : index
    %63 = vector.load %arg10[%c0_50, %c0_51, %c0_52] : memref<1x1x128xf32, #tpu.memory_space<vmem>>, vector<1x1x128xf32>
    tpu.vector_store %arg10[%c0_50, %c0_51, %c0_52], %62 {strides = array<i32>} : memref<1x1x128xf32, #tpu.memory_space<vmem>>, vector<1x1x128xf32>,
    %64 = arith.mulf %59, %55 : vector<72x128xf32>
    %cst_53 = arith.constant dense<0.000000e+00> : vector<128xf32>
    %65 = vector.multi_reduction <add>, %64, %cst_53 [0] : vector<72x128xf32> to vector<128xf32>
    %66 = vector.shape_cast %65 : vector<128xf32> to vector<1x128xf32>
    %67 = vector.shape_cast %66 : vector<1x128xf32> to vector<1x1x128xf32>
    %c0_54 = arith.constant 0 : index
    %c0_55 = arith.constant 0 : index
    %c0_56 = arith.constant 0 : index
    %68 = vector.load %arg11[%c0_54, %c0_55, %c0_56] : memref<1x1x128xf32, #tpu.memory_space<vmem>>, vector<1x1x128xf32>
    tpu.vector_store %arg11[%c0_54, %c0_55, %c0_56], %67 {strides = array<i32>} : memref<1x1x128xf32, #tpu.memory_space<vmem>>, vector<1x1x128xf32>,
    return
  }
  func.func @transform_0(%arg0: i32) -> (i32, i32) {
    %c3_i32 = arith.constant 3 : i32
    %0 = arith.muli %arg0, %c3_i32 : i32
    %c1_i32 = arith.constant 1 : i32
    %1 = arith.subi %0, %c1_i32 : i32
    %c0_i32 = arith.constant 0 : i32
    %2 = arith.maxsi %1, %c0_i32 : i32
    %c0_i32_0 = arith.constant 0 : i32
    %c0_i32_1 = arith.constant 0 : i32
    return %2, %c0_i32_0 : i32, i32
  }
  func.func @transform_1(%arg0: i32) -> (i32, i32) {
    %c0_i32 = arith.constant 0 : i32
    %c0_i32_0 = arith.constant 0 : i32
    return %arg0, %c0_i32 : i32, i32
  }
  func.func @transform_2(%arg0: i32) -> (i32, i32) {
    %c1_i32 = arith.constant 1 : i32
    %0 = arith.addi %arg0, %c1_i32 : i32
    %c3_i32 = arith.constant 3 : i32
    %1 = arith.muli %0, %c3_i32 : i32
    %c26_i32 = arith.constant 26 : i32
    %2 = arith.minsi %1, %c26_i32 : i32
    %c0_i32 = arith.constant 0 : i32
    %c0_i32_0 = arith.constant 0 : i32
    return %2, %c0_i32 : i32, i32
  }
  func.func @transform_3(%arg0: i32) -> (i32, i32) {
    %c3_i32 = arith.constant 3 : i32
    %0 = arith.muli %arg0, %c3_i32 : i32
    %c1_i32 = arith.constant 1 : i32
    %1 = arith.subi %0, %c1_i32 : i32
    %c0_i32 = arith.constant 0 : i32
    %2 = arith.maxsi %1, %c0_i32 : i32
    %c0_i32_0 = arith.constant 0 : i32
    %c0_i32_1 = arith.constant 0 : i32
    return %2, %c0_i32_0 : i32, i32
  }
  func.func @transform_4(%arg0: i32) -> (i32, i32) {
    %c0_i32 = arith.constant 0 : i32
    %c0_i32_0 = arith.constant 0 : i32
    return %arg0, %c0_i32 : i32, i32
  }
  func.func @transform_5(%arg0: i32) -> (i32, i32) {
    %c1_i32 = arith.constant 1 : i32
    %0 = arith.addi %arg0, %c1_i32 : i32
    %c3_i32 = arith.constant 3 : i32
    %1 = arith.muli %0, %c3_i32 : i32
    %c26_i32 = arith.constant 26 : i32
    %2 = arith.minsi %1, %c26_i32 : i32
    %c0_i32 = arith.constant 0 : i32
    %c0_i32_0 = arith.constant 0 : i32
    return %2, %c0_i32 : i32, i32
  }
  func.func @transform_6(%arg0: i32) -> (i32, i32) {
    %c0_i32 = arith.constant 0 : i32
    %c0_i32_0 = arith.constant 0 : i32
    %c0_i32_1 = arith.constant 0 : i32
    return %c0_i32, %c0_i32_0 : i32, i32
  }
  func.func @transform_7(%arg0: i32) -> (i32, i32) {
    %c0_i32 = arith.constant 0 : i32
    %c0_i32_0 = arith.constant 0 : i32
    %c0_i32_1 = arith.constant 0 : i32
    return %c0_i32, %c0_i32_0 : i32, i32
  }
  func.func @transform_8(%arg0: i32) -> (i32, i32) {
    %c0_i32 = arith.constant 0 : i32
    %c0_i32_0 = arith.constant 0 : i32
    return %arg0, %c0_i32 : i32, i32
  }
  func.func @transform_9(%arg0: i32) -> (i32, i32, i32) {
    %c0_i32 = arith.constant 0 : i32
    %c0_i32_0 = arith.constant 0 : i32
    %c0_i32_1 = arith.constant 0 : i32
    return %arg0, %c0_i32, %c0_i32_0 : i32, i32, i32
  }
  func.func @transform_10(%arg0: i32) -> (i32, i32, i32) {
    %c0_i32 = arith.constant 0 : i32
    %c0_i32_0 = arith.constant 0 : i32
    %c0_i32_1 = arith.constant 0 : i32
    return %arg0, %c0_i32, %c0_i32_0 : i32, i32, i32
  }
}

</mosaic_0001>

<llo_original>
// kernel: conv_block_forward.5
$region0: #{conv_block_forward.5}
  #allocation0 [shape = 'u32[]', space=smem, size = 0x4, offset = 0x4, fixed_abs, tag = 'smem constant byte address 0x4 - core index']
  #allocation1 [shape = 'u32[144,128]{1,0:T(1,128)}', space=vmem, size = 0x12000, scoped, tag = 'internal scratch']
  %s0 = inlined_call_operand.vmem [shape: f32[648,128], index: 0, kind: input, shape index: {}]
  %s1 = inlined_call_operand.vmem [shape: f32[8,128], index: 1, kind: input, shape index: {}]
  %s2 = inlined_call_operand.vmem [shape: f32[648,128], index: 2, kind: output, shape index: {}]
  %s3 = sld [smem:[#allocation0]]
  $region41: #{conv_block_forward.5} parent=0
    _
  %s5 = ssub.s32 1, %s3
  %s6 = scalar_select 0, %s5, %s3
  loop: start=0, step=1, limit=11
  $region2: #{conv_block_forward.5} parent=0 // loop_pre_header
    _
  $region3: #{conv_block_forward.5} parent=0 // loop_header
    %s8 = sphi 0, %s12
    %p9 = scmp.ge.s32.totalorder %s8, 11
    %s18 = sphi 0, %s20
    %s21 = sphi 0, %s18
    %s22 = sphi 0, %s21
    %s38 = sphi 0, %s22
    %s42 = sphi 0, %s42
    %s44 = sphi 0, %s42
    %s45 = sphi 0, %s44
    %s59 = sphi 0, %s45
    %s65 = sphi 0, %s67
    %s68 = sphi 0, %s65
    %s69 = sphi 0, %s68
    %s85 = sphi 0, %s69
  $region4: #{conv_block_forward.5} parent=0 // loop_header_branch
    %11 = sbr.rel (%p9) target = $region8
  $region5: #{conv_block_forward.5} parent=0 // loop_body
    %s13 = ssub.s32 %s8, 1
    %s14 = ssub.s32 %s8, 2
    %s15 = sadd.s32 %s8, 1
    %s16 = ssub.s32 %s8, %s15
    %p17 = scmp.eq.s32.totalorder %s16, 0
    %s19 = sadd.s32 %s18, 1
    %s20 = scalar_select %p17, %s18, %s19
    %p23 = pneg %p17
    %p24 = scmp.eq.s32.totalorder %s8, 8
    %p25 = por %p23, %p24
    %p26 = scmp.ne.s32.totalorder %s18, %s21
    %p27 = scmp.eq.s32.totalorder %s8, 0
    %p28 = por %p26, %p27
    %p29 = scmp.ne.s32.totalorder %s18, %s21
    %p30 = scmp.eq.s32.totalorder %s13, 8
    %p31 = por %p29, %p30
    %p32 = scmp.ne.s32.totalorder %s21, %s22
    %p33 = scmp.eq.s32.totalorder %s13, 0
    %p34 = por %p32, %p33
    %p35 = scmp.ne.s32.totalorder %s21, %s22
    %p36 = scmp.eq.s32.totalorder %s14, 8
    %p37 = por %p35, %p36
    %p39 = scmp.ne.s32.totalorder %s22, %s38
    %p40 = scmp.eq.s32.totalorder %s14, 0
    %p41 = por %p39, %p40
    %s43 = sadd.s32 %s42, 1
    %p46 = scmp.eq.s32.totalorder %s8, 8
    %p47 = scmp.ne.s32.totalorder %s42, %s44
    %p48 = scmp.eq.s32.totalorder %s8, 0
    %p49 = por %p47, %p48
    %p50 = scmp.ne.s32.totalorder %s42, %s44
    %p51 = scmp.eq.s32.totalorder %s13, 8
    %p52 = por %p50, %p51
    %p53 = scmp.ne.s32.totalorder %s44, %s45
    %p54 = scmp.eq.s32.totalorder %s13, 0
    %p55 = por %p53, %p54
    %p56 = scmp.ne.s32.totalorder %s44, %s45
    %p57 = scmp.eq.s32.totalorder %s14, 8
    %p58 = por %p56, %p57
    %p60 = scmp.ne.s32.totalorder %s45, %s59
    %p61 = scmp.eq.s32.totalorder %s14, 0
    %p62 = por %p60, %p61
    %s63 = ssub.s32 %s8, %s15
    %p64 = scmp.eq.s32.totalorder %s63, 0
    %s66 = sadd.s32 %s65, 1
    %s67 = scalar_select %p64, %s65, %s66
    %p70 = pneg %p64
    %p71 = scmp.eq.s32.totalorder %s8, 8
    %p72 = por %p70, %p71
    %p73 = scmp.ne.s32.totalorder %s65, %s68
    %p74 = scmp.eq.s32.totalorder %s8, 0
    %p75 = por %p73, %p74
    %p76 = scmp.ne.s32.totalorder %s65, %s68
    %p77 = scmp.eq.s32.totalorder %s13, 8
    %p78 = por %p76, %p77
    %p79 = scmp.ne.s32.totalorder %s68, %s69
    %p80 = scmp.eq.s32.totalorder %s13, 0
    %p81 = por %p79, %p80
    %p82 = scmp.ne.s32.totalorder %s68, %s69
    %p83 = scmp.eq.s32.totalorder %s14, 8
    %p84 = por %p82, %p83
    %p86 = scmp.ne.s32.totalorder %s69, %s85
    %p87 = scmp.eq.s32.totalorder %s14, 0
    %p88 = por %p86, %p87
    %p89 = scmp.le.s32.totalorder 1, %s8
    %p90 = scmp.lt.s32.totalorder %s8, 10
    %p91 = pnand %p89, %p90
    %p92 = pneg %p91
    // Predicated region
    $region9: #{conv_block_forward.5} parent=5 // pred_check
      _
    $region10: #{conv_block_forward.5} parent=5 // pred_check_branch
      %94 = sbr.rel (%p91) target = $region12
    $region11: #{conv_block_forward.5} parent=5 // pred_region
      %s95 = ssub.s32 %s8, 1
      // Predicated region
      $region13: #{conv_block_forward.5} parent=11 // pred_check
        %p96 = pneg %p55
      $region14: #{conv_block_forward.5} parent=11 // pred_check_branch
        %98 = sbr.rel (%p96) target = $region16
      $region15: #{conv_block_forward.5} parent=11 // pred_region
        _
      $region16: #{conv_block_forward.5} parent=11 // pred_fallthru
        _
    $region12: #{conv_block_forward.5} parent=5 // pred_fallthru
      _
    %p99 = scmp.lt.s32.totalorder %s8, 9
    // Predicated region
    $region17: #{conv_block_forward.5} parent=5 // pred_check
      %p100 = pneg %p99
    $region18: #{conv_block_forward.5} parent=5 // pred_check_branch
      %102 = sbr.rel (%p100) target = $region20
    $region19: #{conv_block_forward.5} parent=5 // pred_region
      // Predicated region
      $region21: #{conv_block_forward.5} parent=19 // pred_check
        %p103 = pneg %p28
      $region22: #{conv_block_forward.5} parent=19 // pred_check_branch
        %105 = sbr.rel (%p103) target = $region24
      $region23: #{conv_block_forward.5} parent=19 // pred_region
        %s106 = smul.u32 9, %s8
        %p107 = scmp.lt.s32.totalorder %s106, 80
        %s108 = scalar_select %p107, %s106, 80
        %s109 = smul.addr %s108, 8
        %s110 = scalar_lea.vmem %s0, %s109
        %s111 = smul.u32 9, %s8
      $region24: #{conv_block_forward.5} parent=19 // pred_fallthru
        _
    $region20: #{conv_block_forward.5} parent=5 // pred_fallthru
      _
    %p112 = scmp.le.s32.totalorder 1, %s8
    %p113 = scmp.lt.s32.totalorder %s8, 10
    %p114 = pnand %p112, %p113
    %p115 = pneg %p114
    // Predicated region
    $region25: #{conv_block_forward.5} parent=5 // pred_check
      _
    $region26: #{conv_block_forward.5} parent=5 // pred_check_branch
      %117 = sbr.rel (%p114) target = $region28
    $region27: #{conv_block_forward.5} parent=5 // pred_region
      %s118 = ssub.s32 %s8, 1
      %s119 = smul.u32 9, %s13
      %p120 = scmp.lt.s32.totalorder %s119, 80
      %s121 = scalar_select %p120, %s119, 80
      %s122 = smul.addr %s121, 8
      %s123 = scalar_lea.vmem %s0, %s122
      %p124 = pneg %p34
      %p125 = pneg %p31
      %p126 = pneg %p55
      %p127 = pneg %p52
      %p128 = pneg %p81
      %p129 = pneg %p78
      %s130 = smul.u32 9, %s13
      %p131 = scmp.lt.s32.totalorder %s130, 80
      %s132 = scalar_select %p131, %s130, 80
      %s133 = smul.addr %s132, 8
      %s134 = scalar_lea.vmem %s2, %s133
      %s135 = smul.u32 9, %s13
      %p136 = scmp.lt.s32.totalorder %s135, 80
      %s137 = scalar_select %p136, %s135, 80
      %s138 = smul.addr %s137, 8
      %s139 = scalar_lea.vmem %s0, %s138
      %s140 = smul.u32 9, %s13
      %s141 = smul.u32 9, %s13
      %p142 = scmp.lt.s32.totalorder %s141, 80
      %s143 = scalar_select %p142, %s141, 80
      %s144 = smul.addr %s143, 8
      %s145 = scalar_lea.vmem %s2, %s144
      %s146 = smul.u32 9, %s13
      %v147 = vld [vmem:[%s1] sm:$0x1]
      %v148 = vld [vmem:[%s1 + $0x1] sm:$0x1]
      %v149 = vld [vmem:[%s139] sm:$0xff]
      %v150 = vld [vmem:[%s139 + $0x8] sm:$0xff]
      %v151 = vld [vmem:[%s139 + $0x10] sm:$0xff]
      %v152 = vld [vmem:[%s139 + $0x18] sm:$0xff]
      %v153 = vld [vmem:[%s139 + $0x20] sm:$0xff]
      %v154 = vld [vmem:[%s139 + $0x28] sm:$0xff]
      %v155 = vld [vmem:[%s139 + $0x30] sm:$0xff]
      %v156 = vld [vmem:[%s139 + $0x38] sm:$0xff]
      %v157 = vld [vmem:[%s139 + $0x40] sm:$0xff]
      %v158 = vlaneseq
      %v159 = vshrl.u32 %v158, 7
      %v160 = vsub.s32 0, %v159
      %v161 = vrot.slane %v147, %v160
      %v162 = vmul.f32 %v149, %v161
      %v163 = vmul.f32 %v150, %v161
      %v164 = vmul.f32 %v151, %v161
      %v165 = vmul.f32 %v152, %v161
      %v166 = vmul.f32 %v153, %v161
      %v167 = vmul.f32 %v154, %v161
      %v168 = vmul.f32 %v155, %v161
      %v169 = vmul.f32 %v156, %v161
      %v170 = vmul.f32 %v157, %v161
      %v171 = vlaneseq
      %v172 = vshrl.u32 %v171, 7
      %v173 = vsub.s32 0, %v172
      %v174 = vrot.slane %v148, %v173
      %v175 = vadd.f32 %v162, %v174
      %v176 = vadd.f32 %v163, %v174
      %v177 = vadd.f32 %v164, %v174
      %v178 = vadd.f32 %v165, %v174
      %v179 = vadd.f32 %v166, %v174
      %v180 = vadd.f32 %v167, %v174
      %v181 = vadd.f32 %v168, %v174
      %v182 = vadd.f32 %v169, %v174
      %v183 = vadd.f32 %v170, %v174
      %v184 = vmax.f32 %v175, 0.0
      %v185 = vmax.f32 %v176, 0.0
      %v186 = vmax.f32 %v177, 0.0
      %v187 = vmax.f32 %v178, 0.0
      %v188 = vmax.f32 %v179, 0.0
      %v189 = vmax.f32 %v180, 0.0
      %v190 = vmax.f32 %v181, 0.0
      %v191 = vmax.f32 %v182, 0.0
      %v192 = vmax.f32 %v183, 0.0
      %193 = vst [vmem:[%s145] sm:$0xff] %v184
      %194 = vst [vmem:[%s145 + $0x8] sm:$0xff] %v185
      %195 = vst [vmem:[%s145 + $0x10] sm:$0xff] %v186
      %196 = vst [vmem:[%s145 + $0x18] sm:$0xff] %v187
      %197 = vst [vmem:[%s145 + $0x20] sm:$0xff] %v188
      %198 = vst [vmem:[%s145 + $0x28] sm:$0xff] %v189
      %199 = vst [vmem:[%s145 + $0x30] sm:$0xff] %v190
      %200 = vst [vmem:[%s145 + $0x38] sm:$0xff] %v191
      %201 = vst [vmem:[%s145 + $0x40] sm:$0xff] %v192
      %s202 = smul.u32 9, %s13
      %p203 = scmp.lt.s32.totalorder %s202, 80
      %s204 = scalar_select %p203, %s202, 80
      %s205 = smul.addr %s204, 8
      %s206 = scalar_lea.vmem %s2, %s205
      // Predicated region
      $region29: #{conv_block_forward.5} parent=27 // pred_check
        %p207 = pneg %p78
      $region30: #{conv_block_forward.5} parent=27 // pred_check_branch
        %209 = sbr.rel (%p207) target = $region32
      $region31: #{conv_block_forward.5} parent=27 // pred_region
        %s210 = smul.u32 9, %s13
      $region32: #{conv_block_forward.5} parent=27 // pred_fallthru
        _
    $region28: #{conv_block_forward.5} parent=5 // pred_fallthru
      _
    %p211 = scmp.le.s32.totalorder 2, %s8
    // Predicated region
    $region33: #{conv_block_forward.5} parent=5 // pred_check
      %p212 = pneg %p211
    $region34: #{conv_block_forward.5} parent=5 // pred_check_branch
      %214 = sbr.rel (%p212) target = $region36
    $region35: #{conv_block_forward.5} parent=5 // pred_region
      %s215 = ssub.s32 %s8, 2
      // Predicated region
      $region37: #{conv_block_forward.5} parent=35 // pred_check
        %p216 = pneg %p84
      $region38: #{conv_block_forward.5} parent=35 // pred_check_branch
        %218 = sbr.rel (%p216) target = $region40
      $region39: #{conv_block_forward.5} parent=35 // pred_region
        %s219 = smul.u32 9, %s14
        %p220 = scmp.lt.s32.totalorder %s219, 80
        %s221 = scalar_select %p220, %s219, 80
        %s222 = smul.addr %s221, 8
        %s223 = scalar_lea.vmem %s2, %s222
      $region40: #{conv_block_forward.5} parent=35 // pred_fallthru
        _
    $region36: #{conv_block_forward.5} parent=5 // pred_fallthru
      _
  $region6: #{conv_block_forward.5} parent=0 // loop_footer
    %s12 = sadd.s32 1, %s8
  $region7: #{conv_block_forward.5} parent=0 // loop_footer_branch
    %7 = sbr.rel target = $region3
  $region8: #{conv_block_forward.5} parent=0 // loop_exit
    _

// kernel: conv_block_forward.3
$region0: #{conv_block_forward.3}
  #allocation0 [shape = 'u32[]', space=smem, size = 0x4, offset = 0x4, fixed_abs, tag = 'smem constant byte address 0x4 - core index']
  #allocation1 [shape = 'u32[144,128]{1,0:T(1,128)}', space=vmem, size = 0x12000, scoped, tag = 'internal scratch']
  #allocation2 [shape = 'f32[120,128]{1,0:T(8,128)}', space=vmem, size = 0xf000, scoped, tag = 'scratch operand']
  #allocation3 [shape = 'f32[72,1152]{1,0:T(8,128)}', space=vmem, size = 0x51000, scoped, tag = 'scratch operand']
  %s0 = inlined_call_operand.vmem [shape: f32[648,128], index: 0, kind: input, shape index: {}, may-alias: {0,1,2}]
  %s1 = inlined_call_operand.vmem [shape: f32[648,128], index: 1, kind: input, shape index: {}, may-alias: {0,1,2}]
  %s2 = inlined_call_operand.vmem [shape: f32[648,128], index: 2, kind: input, shape index: {}, may-alias: {0,1,2}]
  %s3 = inlined_call_operand.vmem [shape: f32[648,1], index: 3, kind: input, shape index: {}, may-alias: {3,4,5}]
  %s4 = inlined_call_operand.vmem [shape: f32[648,1], index: 4, kind: input, shape index: {}, may-alias: {3,4,5}]
  %s5 = inlined_call_operand.vmem [shape: f32[648,1], index: 5, kind: input, shape index: {}, may-alias: {3,4,5}]
  %s6 = inlined_call_operand.vmem [shape: f32[8,128], index: 6, kind: input, shape index: {}]
  %s7 = inlined_call_operand.vmem [shape: f32[1152,128], index: 7, kind: input, shape index: {}]
  %s8 = inlined_call_operand.vmem [shape: f32[648,128], index: 8, kind: output, shape index: {0}]
  %s9 = inlined_call_operand.vmem [shape: f32[9,1,128], index: 9, kind: output, shape index: {1}]
  %s10 = inlined_call_operand.vmem [shape: f32[9,1,128], index: 10, kind: output, shape index: {2}]
  %11 = xla_tuple %s8, %s9, %s10
  %s12 = sld [smem:[#allocation0]]
  $region81: #{conv_block_forward.3} parent=0
    _
  %s14 = ssub.s32 1, %s12
  %s15 = scalar_select 0, %s14, %s12
  loop: start=0, step=1, limit=11
  $region2: #{conv_block_forward.3} parent=0 // loop_pre_header
    _
  $region3: #{conv_block_forward.3} parent=0 // loop_header
    %s17 = sphi 0, %s21
    %p18 = scmp.ge.s32.totalorder %s17, 11
    %s35 = sphi 0, %s37
    %s38 = sphi 0, %s35
    %s39 = sphi 0, %s38
    %s55 = sphi 0, %s39
    %s61 = sphi 0, %s63
    %s64 = sphi 0, %s61
    %s65 = sphi 0, %s64
    %s81 = sphi 0, %s65
    %s95 = sphi 0, %s97
    %s98 = sphi 0, %s95
    %s99 = sphi 0, %s98
    %s115 = sphi 0, %s99
    %s129 = sphi 0, %s131
    %s132 = sphi 0, %s129
    %s133 = sphi 0, %s132
    %s149 = sphi 0, %s133
    %s155 = sphi 0, %s157
    %s158 = sphi 0, %s155
    %s159 = sphi 0, %s158
    %s175 = sphi 0, %s159
    %s189 = sphi 0, %s191
    %s192 = sphi 0, %s189
    %s193 = sphi 0, %s192
    %s209 = sphi 0, %s193
    %s213 = sphi 0, %s213
    %s215 = sphi 0, %s213
    %s216 = sphi 0, %s215
    %s230 = sphi 0, %s216
    %s234 = sphi 0, %s234
    %s236 = sphi 0, %s234
    %s237 = sphi 0, %s236
    %s251 = sphi 0, %s237
    %s257 = sphi 0, %s259
    %s260 = sphi 0, %s257
    %s261 = sphi 0, %s260
    %s277 = sphi 0, %s261
    %s283 = sphi 0, %s285
    %s286 = sphi 0, %s283
    %s287 = sphi 0, %s286
    %s303 = sphi 0, %s287
    %s309 = sphi 0, %s311
    %s312 = sphi 0, %s309
    %s313 = sphi 0, %s312
    %s329 = sphi 0, %s313
  $region4: #{conv_block_forward.3} parent=0 // loop_header_branch
    %20 = sbr.rel (%p18) target = $region8
  $region5: #{conv_block_forward.3} parent=0 // loop_body
    %s22 = ssub.s32 %s17, 1
    %s23 = ssub.s32 %s17, 2
    %s24 = sadd.s32 %s17, 1
    %s25 = smul.u32 %s17, 3
    %s26 = ssub.s32 %s25, 1
    %p27 = scmp.gt.s32.totalorder %s26, 0
    %s28 = scalar_select %p27, %s26, 0
    %s29 = smul.u32 %s24, 3
    %s30 = ssub.s32 %s29, 1
    %p31 = scmp.gt.s32.totalorder %s30, 0
    %s32 = scalar_select %p31, %s30, 0
    %s33 = ssub.s32 %s28, %s32
    %p34 = scmp.eq.s32.totalorder %s33, 0
    %s36 = sadd.s32 %s35, 1
    %s37 = scalar_select %p34, %s35, %s36
    %p40 = pneg %p34
    %p41 = scmp.eq.s32.totalorder %s17, 8
    %p42 = por %p40, %p41
    %p43 = scmp.ne.s32.totalorder %s35, %s38
    %p44 = scmp.eq.s32.totalorder %s17, 0
    %p45 = por %p43, %p44
    %p46 = scmp.ne.s32.totalorder %s35, %s38
    %p47 = scmp.eq.s32.totalorder %s22, 8
    %p48 = por %p46, %p47
    %p49 = scmp.ne.s32.totalorder %s38, %s39
    %p50 = scmp.eq.s32.totalorder %s22, 0
    %p51 = por %p49, %p50
    %p52 = scmp.ne.s32.totalorder %s38, %s39
    %p53 = scmp.eq.s32.totalorder %s23, 8
    %p54 = por %p52, %p53
    %p56 = scmp.ne.s32.totalorder %s39, %s55
    %p57 = scmp.eq.s32.totalorder %s23, 0
    %p58 = por %p56, %p57
    %s59 = ssub.s32 %s17, %s24
    %p60 = scmp.eq.s32.totalorder %s59, 0
    %s62 = sadd.s32 %s61, 1
    %s63 = scalar_select %p60, %s61, %s62
    %p66 = pneg %p60
    %p67 = scmp.eq.s32.totalorder %s17, 8
    %p68 = por %p66, %p67
    %p69 = scmp.ne.s32.totalorder %s61, %s64
    %p70 = scmp.eq.s32.totalorder %s17, 0
    %p71 = por %p69, %p70
    %p72 = scmp.ne.s32.totalorder %s61, %s64
    %p73 = scmp.eq.s32.totalorder %s22, 8
    %p74 = por %p72, %p73
    %p75 = scmp.ne.s32.totalorder %s64, %s65
    %p76 = scmp.eq.s32.totalorder %s22, 0
    %p77 = por %p75, %p76
    %p78 = scmp.ne.s32.totalorder %s64, %s65
    %p79 = scmp.eq.s32.totalorder %s23, 8
    %p80 = por %p78, %p79
    %p82 = scmp.ne.s32.totalorder %s65, %s81
    %p83 = scmp.eq.s32.totalorder %s23, 0
    %p84 = por %p82, %p83
    %s85 = sadd.s32 %s17, 1
    %s86 = smul.u32 %s85, 3
    %p87 = scmp.lt.s32.totalorder %s86, 26
    %s88 = scalar_select %p87, %s86, 26
    %s89 = sadd.s32 %s24, 1
    %s90 = smul.u32 %s89, 3
    %p91 = scmp.lt.s32.totalorder %s90, 26
    %s92 = scalar_select %p91, %s90, 26
    %s93 = ssub.s32 %s88, %s92
    %p94 = scmp.eq.s32.totalorder %s93, 0
    %s96 = sadd.s32 %s95, 1
    %s97 = scalar_select %p94, %s95, %s96
    %p100 = pneg %p94
    %p101 = scmp.eq.s32.totalorder %s17, 8
    %p102 = por %p100, %p101
    %p103 = scmp.ne.s32.totalorder %s95, %s98
    %p104 = scmp.eq.s32.totalorder %s17, 0
    %p105 = por %p103, %p104
    %p106 = scmp.ne.s32.totalorder %s95, %s98
    %p107 = scmp.eq.s32.totalorder %s22, 8
    %p108 = por %p106, %p107
    %p109 = scmp.ne.s32.totalorder %s98, %s99
    %p110 = scmp.eq.s32.totalorder %s22, 0
    %p111 = por %p109, %p110
    %p112 = scmp.ne.s32.totalorder %s98, %s99
    %p113 = scmp.eq.s32.totalorder %s23, 8
    %p114 = por %p112, %p113
    %p116 = scmp.ne.s32.totalorder %s99, %s115
    %p117 = scmp.eq.s32.totalorder %s23, 0
    %p118 = por %p116, %p117
    %s119 = smul.u32 %s17, 3
    %s120 = ssub.s32 %s119, 1
    %p121 = scmp.gt.s32.totalorder %s120, 0
    %s122 = scalar_select %p121, %s120, 0
    %s123 = smul.u32 %s24, 3
    %s124 = ssub.s32 %s123, 1
    %p125 = scmp.gt.s32.totalorder %s124, 0
    %s126 = scalar_select %p125, %s124, 0
    %s127 = ssub.s32 %s122, %s126
    %p128 = scmp.eq.s32.totalorder %s127, 0
    %s130 = sadd.s32 %s129, 1
    %s131 = scalar_select %p128, %s129, %s130
    %p134 = pneg %p128
    %p135 = scmp.eq.s32.totalorder %s17, 8
    %p136 = por %p134, %p135
    %p137 = scmp.ne.s32.totalorder %s129, %s132
    %p138 = scmp.eq.s32.totalorder %s17, 0
    %p139 = por %p137, %p138
    %p140 = scmp.ne.s32.totalorder %s129, %s132
    %p141 = scmp.eq.s32.totalorder %s22, 8
    %p142 = por %p140, %p141
    %p143 = scmp.ne.s32.totalorder %s132, %s133
    %p144 = scmp.eq.s32.totalorder %s22, 0
    %p145 = por %p143, %p144
    %p146 = scmp.ne.s32.totalorder %s132, %s133
    %p147 = scmp.eq.s32.totalorder %s23, 8
    %p148 = por %p146, %p147
    %p150 = scmp.ne.s32.totalorder %s133, %s149
    %p151 = scmp.eq.s32.totalorder %s23, 0
    %p152 = por %p150, %p151
    %s153 = ssub.s32 %s17, %s24
    %p154 = scmp.eq.s32.totalorder %s153, 0
    %s156 = sadd.s32 %s155, 1
    %s157 = scalar_select %p154, %s155, %s156
    %p160 = pneg %p154
    %p161 = scmp.eq.s32.totalorder %s17, 8
    %p162 = por %p160, %p161
    %p163 = scmp.ne.s32.totalorder %s155, %s158
    %p164 = scmp.eq.s32.totalorder %s17, 0
    %p165 = por %p163, %p164
    %p166 = scmp.ne.s32.totalorder %s155, %s158
    %p167 = scmp.eq.s32.totalorder %s22, 8
    %p168 = por %p166, %p167
    %p169 = scmp.ne.s32.totalorder %s158, %s159
    %p170 = scmp.eq.s32.totalorder %s22, 0
    %p171 = por %p169, %p170
    %p172 = scmp.ne.s32.totalorder %s158, %s159
    %p173 = scmp.eq.s32.totalorder %s23, 8
    %p174 = por %p172, %p173
    %p176 = scmp.ne.s32.totalorder %s159, %s175
    %p177 = scmp.eq.s32.totalorder %s23, 0
    %p178 = por %p176, %p177
    %s179 = sadd.s32 %s17, 1
    %s180 = smul.u32 %s179, 3
    %p181 = scmp.lt.s32.totalorder %s180, 26
    %s182 = scalar_select %p181, %s180, 26
    %s183 = sadd.s32 %s24, 1
    %s184 = smul.u32 %s183, 3
    %p185 = scmp.lt.s32.totalorder %s184, 26
    %s186 = scalar_select %p185, %s184, 26
    %s187 = ssub.s32 %s182, %s186
    %p188 = scmp.eq.s32.totalorder %s187, 0
    %s190 = sadd.s32 %s189, 1
    %s191 = scalar_select %p188, %s189, %s190
    %p194 = pneg %p188
    %p195 = scmp.eq.s32.totalorder %s17, 8
    %p196 = por %p194, %p195
    %p197 = scmp.ne.s32.totalorder %s189, %s192
    %p198 = scmp.eq.s32.totalorder %s17, 0
    %p199 = por %p197, %p198
    %p200 = scmp.ne.s32.totalorder %s189, %s192
    %p201 = scmp.eq.s32.totalorder %s22, 8
    %p202 = por %p200, %p201
    %p203 = scmp.ne.s32.totalorder %s192, %s193
    %p204 = scmp.eq.s32.totalorder %s22, 0
    %p205 = por %p203, %p204
    %p206 = scmp.ne.s32.totalorder %s192, %s193
    %p207 = scmp.eq.s32.totalorder %s23, 8
    %p208 = por %p206, %p207
    %p210 = scmp.ne.s32.totalorder %s193, %s209
    %p211 = scmp.eq.s32.totalorder %s23, 0
    %p212 = por %p210, %p211
    %s214 = sadd.s32 %s213, 1
    %p217 = scmp.eq.s32.totalorder %s17, 8
    %p218 = scmp.ne.s32.totalorder %s213, %s215
    %p219 = scmp.eq.s32.totalorder %s17, 0
    %p220 = por %p218, %p219
    %p221 = scmp.ne.s32.totalorder %s213, %s215
    %p222 = scmp.eq.s32.totalorder %s22, 8
    %p223 = por %p221, %p222
    %p224 = scmp.ne.s32.totalorder %s215, %s216
    %p225 = scmp.eq.s32.totalorder %s22, 0
    %p226 = por %p224, %p225
    %p227 = scmp.ne.s32.totalorder %s215, %s216
    %p228 = scmp.eq.s32.totalorder %s23, 8
    %p229 = por %p227, %p228
    %p231 = scmp.ne.s32.totalorder %s216, %s230
    %p232 = scmp.eq.s32.totalorder %s23, 0
    %p233 = por %p231, %p232
    %s235 = sadd.s32 %s234, 1
    %p238 = scmp.eq.s32.totalorder %s17, 8
    %p239 = scmp.ne.s32.totalorder %s234, %s236
    %p240 = scmp.eq.s32.totalorder %s17, 0
    %p241 = por %p239, %p240
    %p242 = scmp.ne.s32.totalorder %s234, %s236
    %p243 = scmp.eq.s32.totalorder %s22, 8
    %p244 = por %p242, %p243
    %p245 = scmp.ne.s32.totalorder %s236, %s237
    %p246 = scmp.eq.s32.totalorder %s22, 0
    %p247 = por %p245, %p246
    %p248 = scmp.ne.s32.totalorder %s236, %s237
    %p249 = scmp.eq.s32.totalorder %s23, 8
    %p250 = por %p248, %p249
    %p252 = scmp.ne.s32.totalorder %s237, %s251
    %p253 = scmp.eq.s32.totalorder %s23, 0
    %p254 = por %p252, %p253
    %s255 = ssub.s32 %s17, %s24
    %p256 = scmp.eq.s32.totalorder %s255, 0
    %s258 = sadd.s32 %s257, 1
    %s259 = scalar_select %p256, %s257, %s258
    %p262 = pneg %p256
    %p263 = scmp.eq.s32.totalorder %s17, 8
    %p264 = por %p262, %p263
    %p265 = scmp.ne.s32.totalorder %s257, %s260
    %p266 = scmp.eq.s32.totalorder %s17, 0
    %p267 = por %p265, %p266
    %p268 = scmp.ne.s32.totalorder %s257, %s260
    %p269 = scmp.eq.s32.totalorder %s22, 8
    %p270 = por %p268, %p269
    %p271 = scmp.ne.s32.totalorder %s260, %s261
    %p272 = scmp.eq.s32.totalorder %s22, 0
    %p273 = por %p271, %p272
    %p274 = scmp.ne.s32.totalorder %s260, %s261
    %p275 = scmp.eq.s32.totalorder %s23, 8
    %p276 = por %p274, %p275
    %p278 = scmp.ne.s32.totalorder %s261, %s277
    %p279 = scmp.eq.s32.totalorder %s23, 0
    %p280 = por %p278, %p279
    %s281 = ssub.s32 %s17, %s24
    %p282 = scmp.eq.s32.totalorder %s281, 0
    %s284 = sadd.s32 %s283, 1
    %s285 = scalar_select %p282, %s283, %s284
    %p288 = pneg %p282
    %p289 = scmp.eq.s32.totalorder %s17, 8
    %p290 = por %p288, %p289
    %p291 = scmp.ne.s32.totalorder %s283, %s286
    %p292 = scmp.eq.s32.totalorder %s17, 0
    %p293 = por %p291, %p292
    %p294 = scmp.ne.s32.totalorder %s283, %s286
    %p295 = scmp.eq.s32.totalorder %s22, 8
    %p296 = por %p294, %p295
    %p297 = scmp.ne.s32.totalorder %s286, %s287
    %p298 = scmp.eq.s32.totalorder %s22, 0
    %p299 = por %p297, %p298
    %p300 = scmp.ne.s32.totalorder %s286, %s287
    %p301 = scmp.eq.s32.totalorder %s23, 8
    %p302 = por %p300, %p301
    %p304 = scmp.ne.s32.totalorder %s287, %s303
    %p305 = scmp.eq.s32.totalorder %s23, 0
    %p306 = por %p304, %p305
    %s307 = ssub.s32 %s17, %s24
    %p308 = scmp.eq.s32.totalorder %s307, 0
    %s310 = sadd.s32 %s309, 1
    %s311 = scalar_select %p308, %s309, %s310
    %p314 = pneg %p308
    %p315 = scmp.eq.s32.totalorder %s17, 8
    %p316 = por %p314, %p315
    %p317 = scmp.ne.s32.totalorder %s309, %s312
    %p318 = scmp.eq.s32.totalorder %s17, 0
    %p319 = por %p317, %p318
    %p320 = scmp.ne.s32.totalorder %s309, %s312
    %p321 = scmp.eq.s32.totalorder %s22, 8
    %p322 = por %p320, %p321
    %p323 = scmp.ne.s32.totalorder %s312, %s313
    %p324 = scmp.eq.s32.totalorder %s22, 0
    %p325 = por %p323, %p324
    %p326 = scmp.ne.s32.totalorder %s312, %s313
    %p327 = scmp.eq.s32.totalorder %s23, 8
    %p328 = por %p326, %p327
    %p330 = scmp.ne.s32.totalorder %s313, %s329
    %p331 = scmp.eq.s32.totalorder %s23, 0
    %p332 = por %p330, %p331
    %p333 = scmp.le.s32.totalorder 1, %s17
    %p334 = scmp.lt.s32.totalorder %s17, 10
    %p335 = pnand %p333, %p334
    %p336 = pneg %p335
    // Predicated region
    $region9: #{conv_block_forward.3} parent=5 // pred_check
      _
    $region10: #{conv_block_forward.3} parent=5 // pred_check_branch
      %338 = sbr.rel (%p335) target = $region12
    $region11: #{conv_block_forward.3} parent=5 // pred_region
      %s339 = ssub.s32 %s17, 1
      // Predicated region
      $region13: #{conv_block_forward.3} parent=11 // pred_check
        %p340 = pneg %p226
      $region14: #{conv_block_forward.3} parent=11 // pred_check_branch
        %342 = sbr.rel (%p340) target = $region16
      $region15: #{conv_block_forward.3} parent=11 // pred_region
        _
      $region16: #{conv_block_forward.3} parent=11 // pred_fallthru
        _
      // Predicated region
      $region17: #{conv_block_forward.3} parent=11 // pred_check
        %p343 = pneg %p247
      $region18: #{conv_block_forward.3} parent=11 // pred_check_branch
        %345 = sbr.rel (%p343) target = $region20
      $region19: #{conv_block_forward.3} parent=11 // pred_region
        _
      $region20: #{conv_block_forward.3} parent=11 // pred_fallthru
        _
    $region12: #{conv_block_forward.3} parent=5 // pred_fallthru
      _
    %p346 = scmp.lt.s32.totalorder %s17, 9
    // Predicated region
    $region21: #{conv_block_forward.3} parent=5 // pred_check
      %p347 = pneg %p346
    $region22: #{conv_block_forward.3} parent=5 // pred_check_branch
      %349 = sbr.rel (%p347) target = $region24
    $region23: #{conv_block_forward.3} parent=5 // pred_region
      // Predicated region
      $region25: #{conv_block_forward.3} parent=23 // pred_check
        %p350 = pneg %p45
      $region26: #{conv_block_forward.3} parent=23 // pred_check_branch
        %352 = sbr.rel (%p350) target = $region28
      $region27: #{conv_block_forward.3} parent=23 // pred_region
        %s353 = smul.u32 %s17, 3
        %s354 = ssub.s32 %s353, 1
        %p355 = scmp.gt.s32.totalorder %s354, 0
        %s356 = scalar_select %p355, %s354, 0
        %s357 = smul.u32 3, %s356
        %p358 = scmp.lt.s32.totalorder %s357, 80
        %s359 = scalar_select %p358, %s357, 80
        %s360 = smul.addr %s359, 8
        %s361 = scalar_lea.vmem %s0, %s360
        %s362 = smul.u32 %s17, 3
        %s363 = ssub.s32 %s362, 1
        %p364 = scmp.gt.s32.totalorder %s363, 0
        %s365 = scalar_select %p364, %s363, 0
        %s366 = smul.u32 3, %s365
      $region28: #{conv_block_forward.3} parent=23 // pred_fallthru
        _
      // Predicated region
      $region29: #{conv_block_forward.3} parent=23 // pred_check
        %p367 = pneg %p71
      $region30: #{conv_block_forward.3} parent=23 // pred_check_branch
        %369 = sbr.rel (%p367) target = $region32
      $region31: #{conv_block_forward.3} parent=23 // pred_region
        %s370 = smul.u32 9, %s17
        %p371 = scmp.lt.s32.totalorder %s370, 80
        %s372 = scalar_select %p371, %s370, 80
        %s373 = smul.addr %s372, 8
        %s374 = scalar_lea.vmem %s1, %s373
        %s375 = smul.u32 9, %s17
      $region32: #{conv_block_forward.3} parent=23 // pred_fallthru
        _
      // Predicated region
      $region33: #{conv_block_forward.3} parent=23 // pred_check
        %p376 = pneg %p105
      $region34: #{conv_block_forward.3} parent=23 // pred_check_branch
        %378 = sbr.rel (%p376) target = $region36
      $region35: #{conv_block_forward.3} parent=23 // pred_region
        %s379 = sadd.s32 %s17, 1
        %s380 = smul.u32 %s379, 3
        %p381 = scmp.lt.s32.totalorder %s380, 26
        %s382 = scalar_select %p381, %s380, 26
        %s383 = smul.u32 3, %s382
        %p384 = scmp.lt.s32.totalorder %s383, 80
        %s385 = scalar_select %p384, %s383, 80
        %s386 = smul.addr %s385, 8
        %s387 = scalar_lea.vmem %s2, %s386
        %s388 = sadd.s32 %s17, 1
        %s389 = smul.u32 %s388, 3
        %p390 = scmp.lt.s32.totalorder %s389, 26
        %s391 = scalar_select %p390, %s389, 26
        %s392 = smul.u32 3, %s391
      $region36: #{conv_block_forward.3} parent=23 // pred_fallthru
        _
      // Predicated region
      $region37: #{conv_block_forward.3} parent=23 // pred_check
        %p393 = pneg %p139
      $region38: #{conv_block_forward.3} parent=23 // pred_check_branch
        %395 = sbr.rel (%p393) target = $region40
      $region39: #{conv_block_forward.3} parent=23 // pred_region
        %s396 = smul.u32 %s17, 3
        %s397 = ssub.s32 %s396, 1
        %p398 = scmp.gt.s32.totalorder %s397, 0
        %s399 = scalar_select %p398, %s397, 0
        %s400 = smul.u32 3, %s399
        %p401 = scmp.lt.s32.totalorder %s400, 80
        %s402 = scalar_select %p401, %s400, 80
        %s403 = smul.addr %s402, 8
        %s404 = scalar_lea.vmem %s3, %s403
        %s405 = smul.u32 %s17, 3
        %s406 = ssub.s32 %s405, 1
        %p407 = scmp.gt.s32.totalorder %s406, 0
        %s408 = scalar_select %p407, %s406, 0
        %s409 = smul.u32 3, %s408
      $region40: #{conv_block_forward.3} parent=23 // pred_fallthru
        _
      // Predicated region
      $region41: #{conv_block_forward.3} parent=23 // pred_check
        %p410 = pneg %p165
      $region42: #{conv_block_forward.3} parent=23 // pred_check_branch
        %412 = sbr.rel (%p410) target = $region44
      $region43: #{conv_block_forward.3} parent=23 // pred_region
        %s413 = smul.u32 9, %s17
        %p414 = scmp.lt.s32.totalorder %s413, 80
        %s415 = scalar_select %p414, %s413, 80
        %s416 = smul.addr %s415, 8
        %s417 = scalar_lea.vmem %s4, %s416
        %s418 = smul.u32 9, %s17
      $region44: #{conv_block_forward.3} parent=23 // pred_fallthru
        _
      // Predicated region
      $region45: #{conv_block_forward.3} parent=23 // pred_check
        %p419 = pneg %p199
      $region46: #{conv_block_forward.3} parent=23 // pred_check_branch
        %421 = sbr.rel (%p419) target = $region48
      $region47: #{conv_block_forward.3} parent=23 // pred_region
        %s422 = sadd.s32 %s17, 1
        %s423 = smul.u32 %s422, 3
        %p424 = scmp.lt.s32.totalorder %s423, 26
        %s425 = scalar_select %p424, %s423, 26
        %s426 = smul.u32 3, %s425
        %p427 = scmp.lt.s32.totalorder %s426, 80
        %s428 = scalar_select %p427, %s426, 80
        %s429 = smul.addr %s428, 8
        %s430 = scalar_lea.vmem %s5, %s429
        %s431 = sadd.s32 %s17, 1
        %s432 = smul.u32 %s431, 3
        %p433 = scmp.lt.s32.totalorder %s432, 26
        %s434 = scalar_select %p433, %s432, 26
        %s435 = smul.u32 3, %s434
      $region48: #{conv_block_forward.3} parent=23 // pred_fallthru
        _
    $region24: #{conv_block_forward.3} parent=5 // pred_fallthru
      _
    %p436 = scmp.le.s32.totalorder 1, %s17
    %p437 = scmp.lt.s32.totalorder %s17, 10
    %p438 = pnand %p436, %p437
    %p439 = pneg %p438
    // Predicated region
    $region49: #{conv_block_forward.3} parent=5 // pred_check
      _
    $region50: #{conv_block_forward.3} parent=5 // pred_check_branch
      %441 = sbr.rel (%p438) target = $region52
    $region51: #{conv_block_forward.3} parent=5 // pred_region
      %s442 = ssub.s32 %s17, 1
      %s443 = smul.u32 %s22, 3
      %s444 = ssub.s32 %s443, 1
      %p445 = scmp.gt.s32.totalorder %s444, 0
      %s446 = scalar_select %p445, %s444, 0
      %s447 = smul.u32 3, %s446
      %p448 = scmp.lt.s32.totalorder %s447, 80
      %s449 = scalar_select %p448, %s447, 80
      %s450 = smul.addr %s449, 8
      %s451 = scalar_lea.vmem %s0, %s450
      %p452 = pneg %p51
      %p453 = pneg %p48
      %s454 = smul.u32 9, %s22
      %p455 = scmp.lt.s32.totalorder %s454, 80
      %s456 = scalar_select %p455, %s454, 80
      %s457 = smul.addr %s456, 8
      %s458 = scalar_lea.vmem %s1, %s457
      %p459 = pneg %p77
      %p460 = pneg %p74
      %s461 = sadd.s32 %s22, 1
      %s462 = smul.u32 %s461, 3
      %p463 = scmp.lt.s32.totalorder %s462, 26
      %s464 = scalar_select %p463, %s462, 26
      %s465 = smul.u32 3, %s464
      %p466 = scmp.lt.s32.totalorder %s465, 80
      %s467 = scalar_select %p466, %s465, 80
      %s468 = smul.addr %s467, 8
      %s469 = scalar_lea.vmem %s2, %s468
      %p470 = pneg %p111
      %p471 = pneg %p108
      %s472 = smul.u32 %s22, 3
      %s473 = ssub.s32 %s472, 1
      %p474 = scmp.gt.s32.totalorder %s473, 0
      %s475 = scalar_select %p474, %s473, 0
      %s476 = smul.u32 3, %s475
      %p477 = scmp.lt.s32.totalorder %s476, 80
      %s478 = scalar_select %p477, %s476, 80
      %s479 = smul.addr %s478, 8
      %s480 = scalar_lea.vmem %s3, %s479
      %p481 = pneg %p145
      %p482 = pneg %p142
      %s483 = smul.u32 9, %s22
      %p484 = scmp.lt.s32.totalorder %s483, 80
      %s485 = scalar_select %p484, %s483, 80
      %s486 = smul.addr %s485, 8
      %s487 = scalar_lea.vmem %s4, %s486
      %p488 = pneg %p171
      %p489 = pneg %p168
      %s490 = sadd.s32 %s22, 1
      %s491 = smul.u32 %s490, 3
      %p492 = scmp.lt.s32.totalorder %s491, 26
      %s493 = scalar_select %p492, %s491, 26
      %s494 = smul.u32 3, %s493
      %p495 = scmp.lt.s32.totalorder %s494, 80
      %s496 = scalar_select %p495, %s494, 80
      %s497 = smul.addr %s496, 8
      %s498 = scalar_lea.vmem %s5, %s497
      %p499 = pneg %p205
      %p500 = pneg %p202
      %p501 = pneg %p226
      %p502 = pneg %p223
      %p503 = pneg %p247
      %p504 = pneg %p244
      %p505 = pneg %p273
      %p506 = pneg %p270
      %s507 = smul.u32 9, %s22
      %p508 = scmp.lt.s32.totalorder %s507, 80
      %s509 = scalar_select %p508, %s507, 80
      %s510 = smul.addr %s509, 8
      %s511 = scalar_lea.vmem %s8, %s510
      %p512 = pneg %p299
      %p513 = pneg %p296
      %p514 = scmp.lt.s32.totalorder %s22, 8
      %s515 = scalar_select %p514, %s22, 8
      %s516 = scalar_lea.vmem %s9, %s515
      %p517 = pneg %p325
      %p518 = pneg %p322
      %p519 = scmp.lt.s32.totalorder %s22, 8
      %s520 = scalar_select %p519, %s22, 8
      %s521 = scalar_lea.vmem %s10, %s520
      %s522 = smul.u32 %s22, 3
      %s523 = ssub.s32 %s522, 1
      %p524 = scmp.gt.s32.totalorder %s523, 0
      %s525 = scalar_select %p524, %s523, 0
      %s526 = smul.u32 3, %s525
      %p527 = scmp.lt.s32.totalorder %s526, 80
      %s528 = scalar_select %p527, %s526, 80
      %s529 = smul.addr %s528, 8
      %s530 = scalar_lea.vmem %s0, %s529
      %s531 = smul.u32 %s22, 3
      %s532 = ssub.s32 %s531, 1
      %p533 = scmp.gt.s32.totalorder %s532, 0
      %s534 = scalar_select %p533, %s532, 0
      %s535 = smul.u32 3, %s534
      %s536 = smul.u32 9, %s22
      %p537 = scmp.lt.s32.totalorder %s536, 80
      %s538 = scalar_select %p537, %s536, 80
      %s539 = smul.addr %s538, 8
      %s540 = scalar_lea.vmem %s1, %s539
      %s541 = smul.u32 9, %s22
      %s542 = sadd.s32 %s22, 1
      %s543 = smul.u32 %s542, 3
      %p544 = scmp.lt.s32.totalorder %s543, 26
      %s545 = scalar_select %p544, %s543, 26
      %s546 = smul.u32 3, %s545
      %p547 = scmp.lt.s32.totalorder %s546, 80
      %s548 = scalar_select %p547, %s546, 80
      %s549 = smul.addr %s548, 8
      %s550 = scalar_lea.vmem %s2, %s549
      %s551 = sadd.s32 %s22, 1
      %s552 = smul.u32 %s551, 3
      %p553 = scmp.lt.s32.totalorder %s552, 26
      %s554 = scalar_select %p553, %s552, 26
      %s555 = smul.u32 3, %s554
      %s556 = smul.u32 %s22, 3
      %s557 = ssub.s32 %s556, 1
      %p558 = scmp.gt.s32.totalorder %s557, 0
      %s559 = scalar_select %p558, %s557, 0
      %s560 = smul.u32 3, %s559
      %p561 = scmp.lt.s32.totalorder %s560, 80
      %s562 = scalar_select %p561, %s560, 80
      %s563 = smul.addr %s562, 8
      %s564 = scalar_lea.vmem %s3, %s563
      %s565 = smul.u32 %s22, 3
      %s566 = ssub.s32 %s565, 1
      %p567 = scmp.gt.s32.totalorder %s566, 0
      %s568 = scalar_select %p567, %s566, 0
      %s569 = smul.u32 3, %s568
      %s570 = smul.u32 9, %s22
      %p571 = scmp.lt.s32.totalorder %s570, 80
      %s572 = scalar_select %p571, %s570, 80
      %s573 = smul.addr %s572, 8
      %s574 = scalar_lea.vmem %s4, %s573
      %s575 = smul.u32 9, %s22
      %s576 = sadd.s32 %s22, 1
      %s577 = smul.u32 %s576, 3
      %p578 = scmp.lt.s32.totalorder %s577, 26
      %s579 = scalar_select %p578, %s577, 26
      %s580 = smul.u32 3, %s579
      %p581 = scmp.lt.s32.totalorder %s580, 80
      %s582 = scalar_select %p581, %s580, 80
      %s583 = smul.addr %s582, 8
      %s584 = scalar_lea.vmem %s5, %s583
      %s585 = sadd.s32 %s22, 1
      %s586 = smul.u32 %s585, 3
      %p587 = scmp.lt.s32.totalorder %s586, 26
      %s588 = scalar_select %p587, %s586, 26
      %s589 = smul.u32 3, %s588
      %s590 = smul.u32 9, %s22
      %p591 = scmp.lt.s32.totalorder %s590, 80
      %s592 = scalar_select %p591, %s590, 80
      %s593 = smul.addr %s592, 8
      %s594 = scalar_lea.vmem %s8, %s593
      %s595 = smul.u32 9, %s22
      %p596 = scmp.lt.s32.totalorder %s22, 8
      %s597 = scalar_select %p596, %s22, 8
      %s598 = scalar_lea.vmem %s9, %s597
      %p599 = scmp.lt.s32.totalorder %s22, 8
      %s600 = scalar_select %p599, %s22, 8
      %s601 = scalar_lea.vmem %s10, %s600
      %v602 = vld [vmem:[%s530] sm:$0xff]
      %v603 = vld [vmem:[%s530 + $0x8] sm:$0xff]
      %v604 = vld [vmem:[%s530 + $0x10] sm:$0xff]
      %605 = vst [vmem:[#allocation2] sm:$0xff] %v602
      %606 = vst [vmem:[#allocation2 + $0x8] sm:$0xff] %v603
      %607 = vst [vmem:[#allocation2 + $0x10] sm:$0xff] %v604
      %v608 = vld [vmem:[%s540] sm:$0xff]
      %v609 = vld [vmem:[%s540 + $0x8] sm:$0xff]
      %v610 = vld [vmem:[%s540 + $0x10] sm:$0xff]
      %v611 = vld [vmem:[%s540 + $0x18] sm:$0xff]
      %v612 = vld [vmem:[%s540 + $0x20] sm:$0xff]
      %v613 = vld [vmem:[%s540 + $0x28] sm:$0xff]
      %v614 = vld [vmem:[%s540 + $0x30] sm:$0xff]
      %v615 = vld [vmem:[%s540 + $0x38] sm:$0xff]
      %v616 = vld [vmem:[%s540 + $0x40] sm:$0xff]
      %617 = vst [vmem:[#allocation2 + $0x18] sm:$0xff] %v608
      %618 = vst [vmem:[#allocation2 + $0x20] sm:$0xff] %v609
      %619 = vst [vmem:[#allocation2 + $0x28] sm:$0xff] %v610
      %620 = vst [vmem:[#allocation2 + $0x30] sm:$0xff] %v611
      %621 = vst [vmem:[#allocation2 + $0x38] sm:$0xff] %v612
      %622 = vst [vmem:[#allocation2 + $0x40] sm:$0xff] %v613
      %623 = vst [vmem:[#allocation2 + $0x48] sm:$0xff] %v614
      %624 = vst [vmem:[#allocation2 + $0x50] sm:$0xff] %v615
      %625 = vst [vmem:[#allocation2 + $0x58] sm:$0xff] %v616
      %v626 = vld [vmem:[%s550] sm:$0xff]
      %v627 = vld [vmem:[%s550 + $0x8] sm:$0xff]
      %v628 = vld [vmem:[%s550 + $0x10] sm:$0xff]
      %629 = vst [vmem:[#allocation2 + $0x60] sm:$0xff] %v626
      %630 = vst [vmem:[#allocation2 + $0x68] sm:$0xff] %v627
      %631 = vst [vmem:[#allocation2 + $0x70] sm:$0xff] %v628
      %v632 = vld [vmem:[#allocation2 + $0x5] sm:$0xff]
      %v633 = vld [vmem:[#allocation2 + $0xd] sm:$0xff]
      %v634 = vld [vmem:[#allocation2 + $0x15] sm:$0xff]
      %v635 = vld [vmem:[#allocation2 + $0x1d] sm:$0xff]
      %v636 = vld [vmem:[#allocation2 + $0x25] sm:$0xff]
      %v637 = vld [vmem:[#allocation2 + $0x2d] sm:$0xff]
      %v638 = vld [vmem:[#allocation2 + $0x35] sm:$0xff]
      %v639 = vld [vmem:[#allocation2 + $0x3d] sm:$0xff]
      %v640 = vld [vmem:[#allocation2 + $0x45] sm:$0xff]
      %641 = vst [vmem:[#allocation3] sm:$0xff] %v632
      %642 = vst [vmem:[#allocation3 + $0x48] sm:$0xff] %v633
      %643 = vst [vmem:[#allocation3 + $0x90] sm:$0xff] %v634
      %644 = vst [vmem:[#allocation3 + $0xd8] sm:$0xff] %v635
      %645 = vst [vmem:[#allocation3 + $0x120] sm:$0xff] %v636
      %646 = vst [vmem:[#allocation3 + $0x168] sm:$0xff] %v637
      %647 = vst [vmem:[#allocation3 + $0x1b0] sm:$0xff] %v638
      %648 = vst [vmem:[#allocation3 + $0x1f8] sm:$0xff] %v639
      %649 = vst [vmem:[#allocation3 + $0x240] sm:$0xff] %v640
      %v650 = vld [vmem:[#allocation2 + $0x6] sm:$0xff]
      %v651 = vld [vmem:[#allocation2 + $0xe] sm:$0xff]
      %v652 = vld [vmem:[#allocation2 + $0x16] sm:$0xff]
      %v653 = vld [vmem:[#allocation2 + $0x1e] sm:$0xff]
      %v654 = vld [vmem:[#allocation2 + $0x26] sm:$0xff]
      %v655 = vld [vmem:[#allocation2 + $0x2e] sm:$0xff]
      %v656 = vld [vmem:[#allocation2 + $0x36] sm:$0xff]
      %v657 = vld [vmem:[#allocation2 + $0x3e] sm:$0xff]
      %v658 = vld [vmem:[#allocation2 + $0x46] sm:$0xff]
      %659 = vst [vmem:[#allocation3 + $0x8] sm:$0xff] %v650
      %660 = vst [vmem:[#allocation3 + $0x50] sm:$0xff] %v651
      %661 = vst [vmem:[#allocation3 + $0x98] sm:$0xff] %v652
      %662 = vst [vmem:[#allocation3 + $0xe0] sm:$0xff] %v653
      %663 = vst [vmem:[#allocation3 + $0x128] sm:$0xff] %v654
      %664 = vst [vmem:[#allocation3 + $0x170] sm:$0xff] %v655
      %665 = vst [vmem:[#allocation3 + $0x1b8] sm:$0xff] %v656
      %666 = vst [vmem:[#allocation3 + $0x200] sm:$0xff] %v657
      %667 = vst [vmem:[#allocation3 + $0x248] sm:$0xff] %v658
      %v668 = vld [vmem:[#allocation2 + $0x7] sm:$0xff]
      %v669 = vld [vmem:[#allocation2 + $0xf] sm:$0xff]
      %v670 = vld [vmem:[#allocation2 + $0x17] sm:$0xff]
      %v671 = vld [vmem:[#allocation2 + $0x1f] sm:$0xff]
      %v672 = vld [vmem:[#allocation2 + $0x27] sm:$0xff]
      %v673 = vld [vmem:[#allocation2 + $0x2f] sm:$0xff]
      %v674 = vld [vmem:[#allocation2 + $0x37] sm:$0xff]
      %v675 = vld [vmem:[#allocation2 + $0x3f] sm:$0xff]
      %v676 = vld [vmem:[#allocation2 + $0x47] sm:$0xff]
      %677 = vst [vmem:[#allocation3 + $0x10] sm:$0xff] %v668
      %678 = vst [vmem:[#allocation3 + $0x58] sm:$0xff] %v669
      %679 = vst [vmem:[#allocation3 + $0xa0] sm:$0xff] %v670
      %680 = vst [vmem:[#allocation3 + $0xe8] sm:$0xff] %v671
      %681 = vst [vmem:[#allocation3 + $0x130] sm:$0xff] %v672
      %682 = vst [vmem:[#allocation3 + $0x178] sm:$0xff] %v673
      %683 = vst [vmem:[#allocation3 + $0x1c0] sm:$0xff] %v674
      %684 = vst [vmem:[#allocation3 + $0x208] sm:$0xff] %v675
      %685 = vst [vmem:[#allocation3 + $0x250] sm:$0xff] %v676
      %v686 = vld [vmem:[#allocation2 + $0x17] sm:$0xff]
      %v687 = vld [vmem:[#allocation2 + $0x1f] sm:$0xff]
      %v688 = vld [vmem:[#allocation2 + $0x27] sm:$0xff]
      %v689 = vld [vmem:[#allocation2 + $0x2f] sm:$0xff]
      %v690 = vld [vmem:[#allocation2 + $0x37] sm:$0xff]
      %v691 = vld [vmem:[#allocation2 + $0x3f] sm:$0xff]
      %v692 = vld [vmem:[#allocation2 + $0x47] sm:$0xff]
      %v693 = vld [vmem:[#allocation2 + $0x4f] sm:$0xff]
      %v694 = vld [vmem:[#allocation2 + $0x57] sm:$0xff]
      %695 = vst [vmem:[#allocation3 + $0x18] sm:$0xff] %v686
      %696 = vst [vmem:[#allocation3 + $0x60] sm:$0xff] %v687
      %697 = vst [vmem:[#allocation3 + $0xa8] sm:$0xff] %v688
      %698 = vst [vmem:[#allocation3 + $0xf0] sm:$0xff] %v689
      %699 = vst [vmem:[#allocation3 + $0x138] sm:$0xff] %v690
      %700 = vst [vmem:[#allocation3 + $0x180] sm:$0xff] %v691
      %701 = vst [vmem:[#allocation3 + $0x1c8] sm:$0xff] %v692
      %702 = vst [vmem:[#allocation3 + $0x210] sm:$0xff] %v693
      %703 = vst [vmem:[#allocation3 + $0x258] sm:$0xff] %v694
      %v704 = vld [vmem:[#allocation2 + $0x18] sm:$0xff]
      %v705 = vld [vmem:[#allocation2 + $0x20] sm:$0xff]
      %v706 = vld [vmem:[#allocation2 + $0x28] sm:$0xff]
      %v707 = vld [vmem:[#allocation2 + $0x30] sm:$0xff]
      %v708 = vld [vmem:[#allocation2 + $0x38] sm:$0xff]
      %v709 = vld [vmem:[#allocation2 + $0x40] sm:$0xff]
      %v710 = vld [vmem:[#allocation2 + $0x48] sm:$0xff]
      %v711 = vld [vmem:[#allocation2 + $0x50] sm:$0xff]
      %v712 = vld [vmem:[#allocation2 + $0x58] sm:$0xff]
      %713 = vst [vmem:[#allocation3 + $0x20] sm:$0xff] %v704
      %714 = vst [vmem:[#allocation3 + $0x68] sm:$0xff] %v705
      %715 = vst [vmem:[#allocation3 + $0xb0] sm:$0xff] %v706
      %716 = vst [vmem:[#allocation3 + $0xf8] sm:$0xff] %v707
      %717 = vst [vmem:[#allocation3 + $0x140] sm:$0xff] %v708
      %718 = vst [vmem:[#allocation3 + $0x188] sm:$0xff] %v709
      %719 = vst [vmem:[#allocation3 + $0x1d0] sm:$0xff] %v710
      %720 = vst [vmem:[#allocation3 + $0x218] sm:$0xff] %v711
      %721 = vst [vmem:[#allocation3 + $0x260] sm:$0xff] %v712
      %v722 = vld [vmem:[#allocation2 + $0x19] sm:$0xff]
      %v723 = vld [vmem:[#allocation2 + $0x21] sm:$0xff]
      %v724 = vld [vmem:[#allocation2 + $0x29] sm:$0xff]
      %v725 = vld [vmem:[#allocation2 + $0x31] sm:$0xff]
      %v726 = vld [vmem:[#allocation2 + $0x39] sm:$0xff]
      %v727 = vld [vmem:[#allocation2 + $0x41] sm:$0xff]
      %v728 = vld [vmem:[#allocation2 + $0x49] sm:$0xff]
      %v729 = vld [vmem:[#allocation2 + $0x51] sm:$0xff]
      %v730 = vld [vmem:[#allocation2 + $0x59] sm:$0xff]
      %731 = vst [vmem:[#allocation3 + $0x28] sm:$0xff] %v722
      %732 = vst [vmem:[#allocation3 + $0x70] sm:$0xff] %v723
      %733 = vst [vmem:[#allocation3 + $0xb8] sm:$0xff] %v724
      %734 = vst [vmem:[#allocation3 + $0x100] sm:$0xff] %v725
      %735 = vst [vmem:[#allocation3 + $0x148] sm:$0xff] %v726
      %736 = vst [vmem:[#allocation3 + $0x190] sm:$0xff] %v727
      %737 = vst [vmem:[#allocation3 + $0x1d8] sm:$0xff] %v728
      %738 = vst [vmem:[#allocation3 + $0x220] sm:$0xff] %v729
      %739 = vst [vmem:[#allocation3 + $0x268] sm:$0xff] %v730
      %v740 = vld [vmem:[#allocation2 + $0x29] sm:$0xff]
      %v741 = vld [vmem:[#allocation2 + $0x31] sm:$0xff]
      %v742 = vld [vmem:[#allocation2 + $0x39] sm:$0xff]
      %v743 = vld [vmem:[#allocation2 + $0x41] sm:$0xff]
      %v744 = vld [vmem:[#allocation2 + $0x49] sm:$0xff]
      %v745 = vld [vmem:[#allocation2 + $0x51] sm:$0xff]
      %v746 = vld [vmem:[#allocation2 + $0x59] sm:$0xff]
      %v747 = vld [vmem:[#allocation2 + $0x61] sm:$0xff]
      %v748 = vld [vmem:[#allocation2 + $0x69] sm:$0xff]
      %749 = vst [vmem:[#allocation3 + $0x30] sm:$0xff] %v740
      %750 = vst [vmem:[#allocation3 + $0x78] sm:$0xff] %v741
      %751 = vst [vmem:[#allocation3 + $0xc0] sm:$0xff] %v742
      %752 = vst [vmem:[#allocation3 + $0x108] sm:$0xff] %v743
      %753 = vst [vmem:[#allocation3 + $0x150] sm:$0xff] %v744
      %754 = vst [vmem:[#allocation3 + $0x198] sm:$0xff] %v745
      %755 = vst [vmem:[#allocation3 + $0x1e0] sm:$0xff] %v746
      %756 = vst [vmem:[#allocation3 + $0x228] sm:$0xff] %v747
      %757 = vst [vmem:[#allocation3 + $0x270] sm:$0xff] %v748
      %v758 = vld [vmem:[#allocation2 + $0x2a] sm:$0xff]
      %v759 = vld [vmem:[#allocation2 + $0x32] sm:$0xff]
      %v760 = vld [vmem:[#allocation2 + $0x3a] sm:$0xff]
      %v761 = vld [vmem:[#allocation2 + $0x42] sm:$0xff]
      %v762 = vld [vmem:[#allocation2 + $0x4a] sm:$0xff]
      %v763 = vld [vmem:[#allocation2 + $0x52] sm:$0xff]
      %v764 = vld [vmem:[#allocation2 + $0x5a] sm:$0xff]
      %v765 = vld [vmem:[#allocation2 + $0x62] sm:$0xff]
      %v766 = vld [vmem:[#allocation2 + $0x6a] sm:$0xff]
      %767 = vst [vmem:[#allocation3 + $0x38] sm:$0xff] %v758
      %768 = vst [vmem:[#allocation3 + $0x80] sm:$0xff] %v759
      %769 = vst [vmem:[#allocation3 + $0xc8] sm:$0xff] %v760
      %770 = vst [vmem:[#allocation3 + $0x110] sm:$0xff] %v761
      %771 = vst [vmem:[#allocation3 + $0x158] sm:$0xff] %v762
      %772 = vst [vmem:[#allocation3 + $0x1a0] sm:$0xff] %v763
      %773 = vst [vmem:[#allocation3 + $0x1e8] sm:$0xff] %v764
      %774 = vst [vmem:[#allocation3 + $0x230] sm:$0xff] %v765
      %775 = vst [vmem:[#allocation3 + $0x278] sm:$0xff] %v766
      %v776 = vld [vmem:[#allocation2 + $0x2b] sm:$0xff]
      %v777 = vld [vmem:[#allocation2 + $0x33] sm:$0xff]
      %v778 = vld [vmem:[#allocation2 + $0x3b] sm:$0xff]
      %v779 = vld [vmem:[#allocation2 + $0x43] sm:$0xff]
      %v780 = vld [vmem:[#allocation2 + $0x4b] sm:$0xff]
      %v781 = vld [vmem:[#allocation2 + $0x53] sm:$0xff]
      %v782 = vld [vmem:[#allocation2 + $0x5b] sm:$0xff]
      %v783 = vld [vmem:[#allocation2 + $0x63] sm:$0xff]
      %v784 = vld [vmem:[#allocation2 + $0x6b] sm:$0xff]
      %785 = vst [vmem:[#allocation3 + $0x40] sm:$0xff] %v776
      %786 = vst [vmem:[#allocation3 + $0x88] sm:$0xff] %v777
      %787 = vst [vmem:[#allocation3 + $0xd0] sm:$0xff] %v778
      %788 = vst [vmem:[#allocation3 + $0x118] sm:$0xff] %v779
      %789 = vst [vmem:[#allocation3 + $0x160] sm:$0xff] %v780
      %790 = vst [vmem:[#allocation3 + $0x1a8] sm:$0xff] %v781
      %791 = vst [vmem:[#allocation3 + $0x1f0] sm:$0xff] %v782
      %792 = vst [vmem:[#allocation3 + $0x238] sm:$0xff] %v783
      %793 = vst [vmem:[#allocation3 + $0x280] sm:$0xff] %v784
      %v794 = vld [vmem:[#allocation3] sm:$0xff]
      %v795 = vld [vmem:[#allocation3 + $0x8] sm:$0xff]
      %v796 = vld [vmem:[#allocation3 + $0x10] sm:$0xff]
      %v797 = vld [vmem:[#allocation3 + $0x18] sm:$0xff]
      %v798 = vld [vmem:[#allocation3 + $0x20] sm:$0xff]
      %v799 = vld [vmem:[#allocation3 + $0x28] sm:$0xff]
      %v800 = vld [vmem:[#allocation3 + $0x30] sm:$0xff]
      %v801 = vld [vmem:[#allocation3 + $0x38] sm:$0xff]
      %v802 = vld [vmem:[#allocation3 + $0x40] sm:$0xff]
      %v803 = vld [vmem:[#allocation3 + $0x48] sm:$0xff]
      %v804 = vld [vmem:[#allocation3 + $0x50] sm:$0xff]
      %v805 = vld [vmem:[#allocation3 + $0x58] sm:$0xff]
      %v806 = vld [vmem:[#allocation3 + $0x60] sm:$0xff]
      %v807 = vld [vmem:[#allocation3 + $0x68] sm:$0xff]
      %v808 = vld [vmem:[#allocation3 + $0x70] sm:$0xff]
      %v809 = vld [vmem:[#allocation3 + $0x78] sm:$0xff]
      %v810 = vld [vmem:[#allocation3 + $0x80] sm:$0xff]
      %v811 = vld [vmem:[#allocation3 + $0x88] sm:$0xff]
      %v812 = vld [vmem:[#allocation3 + $0x90] sm:$0xff]
      %v813 = vld [vmem:[#allocation3 + $0x98] sm:$0xff]
      %v814 = vld [vmem:[#allocation3 + $0xa0] sm:$0xff]
      %v815 = vld [vmem:[#allocation3 + $0xa8] sm:$0xff]
      %v816 = vld [vmem:[#allocation3 + $0xb0] sm:$0xff]
      %v817 = vld [vmem:[#allocation3 + $0xb8] sm:$0xff]
      %v818 = vld [vmem:[#allocation3 + $0xc0] sm:$0xff]
      %v819 = vld [vmem:[#allocation3 + $0xc8] sm:$0xff]
      %v820 = vld [vmem:[#allocation3 + $0xd0] sm:$0xff]
      %v821 = vld [vmem:[#allocation3 + $0xd8] sm:$0xff]
      %v822 = vld [vmem:[#allocation3 + $0xe0] sm:$0xff]
      %v823 = vld [vmem:[#allocation3 + $0xe8] sm:$0xff]
      %v824 = vld [vmem:[#allocation3 + $0xf0] sm:$0xff]
      %v825 = vld [vmem:[#allocation3 + $0xf8] sm:$0xff]
      %v826 = vld [vmem:[#allocation3 + $0x100] sm:$0xff]
      %v827 = vld [vmem:[#allocation3 + $0x108] sm:$0xff]
      %v828 = vld [vmem:[#allocation3 + $0x110] sm:$0xff]
      %v829 = vld [vmem:[#allocation3 + $0x118] sm:$0xff]
      %v830 = vld [vmem:[#allocation3 + $0x120] sm:$0xff]
      %v831 = vld [vmem:[#allocation3 + $0x128] sm:$0xff]
      %v832 = vld [vmem:[#allocation3 + $0x130] sm:$0xff]
      %v833 = vld [vmem:[#allocation3 + $0x138] sm:$0xff]
      %v834 = vld [vmem:[#allocation3 + $0x140] sm:$0xff]
      %v835 = vld [vmem:[#allocation3 + $0x148] sm:$0xff]
      %v836 = vld [vmem:[#allocation3 + $0x150] sm:$0xff]
      %v837 = vld [vmem:[#allocation3 + $0x158] sm:$0xff]
      %v838 = vld [vmem:[#allocation3 + $0x160] sm:$0xff]
      %v839 = vld [vmem:[#allocation3 + $0x168] sm:$0xff]
      %v840 = vld [vmem:[#allocation3 + $0x170] sm:$0xff]
      %v841 = vld [vmem:[#allocation3 + $0x178] sm:$0xff]
      %v842 = vld [vmem:[#allocation3 + $0x180] sm:$0xff]
      %v843 = vld [vmem:[#allocation3 + $0x188] sm:$0xff]
      %v844 = vld [vmem:[#allocation3 + $0x190] sm:$0xff]
      %v845 = vld [vmem:[#allocation3 + $0x198] sm:$0xff]
      %v846 = vld [vmem:[#allocation3 + $0x1a0] sm:$0xff]
      %v847 = vld [vmem:[#allocation3 + $0x1a8] sm:$0xff]
      %v848 = vld [vmem:[#allocation3 + $0x1b0] sm:$0xff]
      %v849 = vld [vmem:[#allocation3 + $0x1b8] sm:$0xff]
      %v850 = vld [vmem:[#allocation3 + $0x1c0] sm:$0xff]
      %v851 = vld [vmem:[#allocation3 + $0x1c8] sm:$0xff]
      %v852 = vld [vmem:[#allocation3 + $0x1d0] sm:$0xff]
      %v853 = vld [vmem:[#allocation3 + $0x1d8] sm:$0xff]
      %v854 = vld [vmem:[#allocation3 + $0x1e0] sm:$0xff]
      %v855 = vld [vmem:[#allocation3 + $0x1e8] sm:$0xff]
      %v856 = vld [vmem:[#allocation3 + $0x1f0] sm:$0xff]
      %v857 = vld [vmem:[#allocation3 + $0x1f8] sm:$0xff]
      %v858 = vld [vmem:[#allocation3 + $0x200] sm:$0xff]
      %v859 = vld [vmem:[#allocation3 + $0x208] sm:$0xff]
      %v860 = vld [vmem:[#allocation3 + $0x210] sm:$0xff]
      %v861 = vld [vmem:[#allocation3 + $0x218] sm:$0xff]
      %v862 = vld [vmem:[#allocation3 + $0x220] sm:$0xff]
      %v863 = vld [vmem:[#allocation3 + $0x228] sm:$0xff]
      %v864 = vld [vmem:[#allocation3 + $0x230] sm:$0xff]
      %v865 = vld [vmem:[#allocation3 + $0x238] sm:$0xff]
      %v866 = vld [vmem:[#allocation3 + $0x240] sm:$0xff]
      %v867 = vld [vmem:[#allocation3 + $0x248] sm:$0xff]
      %v868 = vld [vmem:[#allocation3 + $0x250] sm:$0xff]
      %v869 = vld [vmem:[#allocation3 + $0x258] sm:$0xff]
      %v870 = vld [vmem:[#allocation3 + $0x260] sm:$0xff]
      %v871 = vld [vmem:[#allocation3 + $0x268] sm:$0xff]
      %v872 = vld [vmem:[#allocation3 + $0x270] sm:$0xff]
      %v873 = vld [vmem:[#allocation3 + $0x278] sm:$0xff]
      %v874 = vld [vmem:[#allocation3 + $0x280] sm:$0xff]
      %v875 = vld [vmem:[%s7] sm:$0xff]
      %v876 = vld [vmem:[%s7 + $0x8] sm:$0xff]
      %v877 = vld [vmem:[%s7 + $0x10] sm:$0xff]
      %v878 = vld [vmem:[%s7 + $0x18] sm:$0xff]
      %v879 = vld [vmem:[%s7 + $0x20] sm:$0xff]
      %v880 = vld [vmem:[%s7 + $0x28] sm:$0xff]
      %v881 = vld [vmem:[%s7 + $0x30] sm:$0xff]
      %v882 = vld [vmem:[%s7 + $0x38] sm:$0xff]
      %v883 = vld [vmem:[%s7 + $0x40] sm:$0xff]
      %v884 = vld [vmem:[%s7 + $0x48] sm:$0xff]
      %v885 = vld [vmem:[%s7 + $0x50] sm:$0xff]
      %v886 = vld [vmem:[%s7 + $0x58] sm:$0xff]
      %v887 = vld [vmem:[%s7 + $0x60] sm:$0xff]
      %v888 = vld [vmem:[%s7 + $0x68] sm:$0xff]
      %v889 = vld [vmem:[%s7 + $0x70] sm:$0xff]
      %v890 = vld [vmem:[%s7 + $0x78] sm:$0xff]
      %v891 = vld [vmem:[%s7 + $0x80] sm:$0xff]
      %v892 = vld [vmem:[%s7 + $0x88] sm:$0xff]
      %v893 = vld [vmem:[%s7 + $0x90] sm:$0xff]
      %v894 = vld [vmem:[%s7 + $0x98] sm:$0xff]
      %v895 = vld [vmem:[%s7 + $0xa0] sm:$0xff]
      %v896 = vld [vmem:[%s7 + $0xa8] sm:$0xff]
      %v897 = vld [vmem:[%s7 + $0xb0] sm:$0xff]
      %v898 = vld [vmem:[%s7 + $0xb8] sm:$0xff]
      %v899 = vld [vmem:[%s7 + $0xc0] sm:$0xff]
      %v900 = vld [vmem:[%s7 + $0xc8] sm:$0xff]
      %v901 = vld [vmem:[%s7 + $0xd0] sm:$0xff]
      %v902 = vld [vmem:[%s7 + $0xd8] sm:$0xff]
      %v903 = vld [vmem:[%s7 + $0xe0] sm:$0xff]
      %v904 = vld [vmem:[%s7 + $0xe8] sm:$0xff]
      %v905 = vld [vmem:[%s7 + $0xf0] sm:$0xff]
      %v906 = vld [vmem:[%s7 + $0xf8] sm:$0xff]
      %v907 = vld [vmem:[%s7 + $0x100] sm:$0xff]
      %v908 = vld [vmem:[%s7 + $0x108] sm:$0xff]
      %v909 = vld [vmem:[%s7 + $0x110] sm:$0xff]
      %v910 = vld [vmem:[%s7 + $0x118] sm:$0xff]
      %v911 = vld [vmem:[%s7 + $0x120] sm:$0xff]
      %v912 = vld [vmem:[%s7 + $0x128] sm:$0xff]
      %v913 = vld [vmem:[%s7 + $0x130] sm:$0xff]
      %v914 = vld [vmem:[%s7 + $0x138] sm:$0xff]
      %v915 = vld [vmem:[%s7 + $0x140] sm:$0xff]
      %v916 = vld [vmem:[%s7 + $0x148] sm:$0xff]
      %v917 = vld [vmem:[%s7 + $0x150] sm:$0xff]
      %v918 = vld [vmem:[%s7 + $0x158] sm:$0xff]
      %v919 = vld [vmem:[%s7 + $0x160] sm:$0xff]
      %v920 = vld [vmem:[%s7 + $0x168] sm:$0xff]
      %v921 = vld [vmem:[%s7 + $0x170] sm:$0xff]
      %v922 = vld [vmem:[%s7 + $0x178] sm:$0xff]
      %v923 = vld [vmem:[%s7 + $0x180] sm:$0xff]
      %v924 = vld [vmem:[%s7 + $0x188] sm:$0xff]
      %v925 = vld [vmem:[%s7 + $0x190] sm:$0xff]
      %v926 = vld [vmem:[%s7 + $0x198] sm:$0xff]
      %v927 = vld [vmem:[%s7 + $0x1a0] sm:$0xff]
      %v928 = vld [vmem:[%s7 + $0x1a8] sm:$0xff]
      %v929 = vld [vmem:[%s7 + $0x1b0] sm:$0xff]
      %v930 = vld [vmem:[%s7 + $0x1b8] sm:$0xff]
      %v931 = vld [vmem:[%s7 + $0x1c0] sm:$0xff]
      %v932 = vld [vmem:[%s7 + $0x1c8] sm:$0xff]
      %v933 = vld [vmem:[%s7 + $0x1d0] sm:$0xff]
      %v934 = vld [vmem:[%s7 + $0x1d8] sm:$0xff]
      %v935 = vld [vmem:[%s7 + $0x1e0] sm:$0xff]
      %v936 = vld [vmem:[%s7 + $0x1e8] sm:$0xff]
      %v937 = vld [vmem:[%s7 + $0x1f0] sm:$0xff]
      %v938 = vld [vmem:[%s7 + $0x1f8] sm:$0xff]
      %v939 = vld [vmem:[%s7 + $0x200] sm:$0xff]
      %v940 = vld [vmem:[%s7 + $0x208] sm:$0xff]
      %v941 = vld [vmem:[%s7 + $0x210] sm:$0xff]
      %v942 = vld [vmem:[%s7 + $0x218] sm:$0xff]
      %v943 = vld [vmem:[%s7 + $0x220] sm:$0xff]
      %v944 = vld [vmem:[%s7 + $0x228] sm:$0xff]
      %v945 = vld [vmem:[%s7 + $0x230] sm:$0xff]
      %v946 = vld [vmem:[%s7 + $0x238] sm:$0xff]
      %v947 = vld [vmem:[%s7 + $0x240] sm:$0xff]
      %v948 = vld [vmem:[%s7 + $0x248] sm:$0xff]
      %v949 = vld [vmem:[%s7 + $0x250] sm:$0xff]
      %v950 = vld [vmem:[%s7 + $0x258] sm:$0xff]
      %v951 = vld [vmem:[%s7 + $0x260] sm:$0xff]
      %v952 = vld [vmem:[%s7 + $0x268] sm:$0xff]
      %v953 = vld [vmem:[%s7 + $0x270] sm:$0xff]
      %v954 = vld [vmem:[%s7 + $0x278] sm:$0xff]
      %v955 = vld [vmem:[%s7 + $0x280] sm:$0xff]
      %v956 = vld [vmem:[%s7 + $0x288] sm:$0xff]
      %v957 = vld [vmem:[%s7 + $0x290] sm:$0xff]
      %v958 = vld [vmem:[%s7 + $0x298] sm:$0xff]
      %v959 = vld [vmem:[%s7 + $0x2a0] sm:$0xff]
      %v960 = vld [vmem:[%s7 + $0x2a8] sm:$0xff]
      %v961 = vld [vmem:[%s7 + $0x2b0] sm:$0xff]
      %v962 = vld [vmem:[%s7 + $0x2b8] sm:$0xff]
      %v963 = vld [vmem:[%s7 + $0x2c0] sm:$0xff]
      %v964 = vld [vmem:[%s7 + $0x2c8] sm:$0xff]
      %v965 = vld [vmem:[%s7 + $0x2d0] sm:$0xff]
      %v966 = vld [vmem:[%s7 + $0x2d8] sm:$0xff]
      %v967 = vld [vmem:[%s7 + $0x2e0] sm:$0xff]
      %v968 = vld [vmem:[%s7 + $0x2e8] sm:$0xff]
      %v969 = vld [vmem:[%s7 + $0x2f0] sm:$0xff]
      %v970 = vld [vmem:[%s7 + $0x2f8] sm:$0xff]
      %v971 = vld [vmem:[%s7 + $0x300] sm:$0xff]
      %v972 = vld [vmem:[%s7 + $0x308] sm:$0xff]
      %v973 = vld [vmem:[%s7 + $0x310] sm:$0xff]
      %v974 = vld [vmem:[%s7 + $0x318] sm:$0xff]
      %v975 = vld [vmem:[%s7 + $0x320] sm:$0xff]
      %v976 = vld [vmem:[%s7 + $0x328] sm:$0xff]
      %v977 = vld [vmem:[%s7 + $0x330] sm:$0xff]
      %v978 = vld [vmem:[%s7 + $0x338] sm:$0xff]
      %v979 = vld [vmem:[%s7 + $0x340] sm:$0xff]
      %v980 = vld [vmem:[%s7 + $0x348] sm:$0xff]
      %v981 = vld [vmem:[%s7 + $0x350] sm:$0xff]
      %v982 = vld [vmem:[%s7 + $0x358] sm:$0xff]
      %v983 = vld [vmem:[%s7 + $0x360] sm:$0xff]
      %v984 = vld [vmem:[%s7 + $0x368] sm:$0xff]
      %v985 = vld [vmem:[%s7 + $0x370] sm:$0xff]
      %v986 = vld [vmem:[%s7 + $0x378] sm:$0xff]
      %v987 = vld [vmem:[%s7 + $0x380] sm:$0xff]
      %v988 = vld [vmem:[%s7 + $0x388] sm:$0xff]
      %v989 = vld [vmem:[%s7 + $0x390] sm:$0xff]
      %v990 = vld [vmem:[%s7 + $0x398] sm:$0xff]
      %v991 = vld [vmem:[%s7 + $0x3a0] sm:$0xff]
      %v992 = vld [vmem:[%s7 + $0x3a8] sm:$0xff]
      %v993 = vld [vmem:[%s7 + $0x3b0] sm:$0xff]
      %v994 = vld [vmem:[%s7 + $0x3b8] sm:$0xff]
      %v995 = vld [vmem:[%s7 + $0x3c0] sm:$0xff]
      %v996 = vld [vmem:[%s7 + $0x3c8] sm:$0xff]
      %v997 = vld [vmem:[%s7 + $0x3d0] sm:$0xff]
      %v998 = vld [vmem:[%s7 + $0x3d8] sm:$0xff]
      %v999 = vld [vmem:[%s7 + $0x3e0] sm:$0xff]
      %v1000 = vld [vmem:[%s7 + $0x3e8] sm:$0xff]
      %v1001 = vld [vmem:[%s7 + $0x3f0] sm:$0xff]
      %v1002 = vld [vmem:[%s7 + $0x3f8] sm:$0xff]
      %v1003 = vld [vmem:[%s7 + $0x400] sm:$0xff]
      %v1004 = vld [vmem:[%s7 + $0x408] sm:$0xff]
      %v1005 = vld [vmem:[%s7 + $0x410] sm:$0xff]
      %v1006 = vld [vmem:[%s7 + $0x418] sm:$0xff]
      %v1007 = vld [vmem:[%s7 + $0x420] sm:$0xff]
      %v1008 = vld [vmem:[%s7 + $0x428] sm:$0xff]
      %v1009 = vld [vmem:[%s7 + $0x430] sm:$0xff]
      %v1010 = vld [vmem:[%s7 + $0x438] sm:$0xff]
      %v1011 = vld [vmem:[%s7 + $0x440] sm:$0xff]
      %v1012 = vld [vmem:[%s7 + $0x448] sm:$0xff]
      %v1013 = vld [vmem:[%s7 + $0x450] sm:$0xff]
      %v1014 = vld [vmem:[%s7 + $0x458] sm:$0xff]
      %v1015 = vld [vmem:[%s7 + $0x460] sm:$0xff]
      %v1016 = vld [vmem:[%s7 + $0x468] sm:$0xff]
      %v1017 = vld [vmem:[%s7 + $0x470] sm:$0xff]
      %v1018 = vld [vmem:[%s7 + $0x478] sm:$0xff]
      %1019 = vmatprep.subr.mxu0 0.0
      %1020 = vmatpush1.msra.mxu0 %v890
      %1021 = vmatprep.subr.mxu0 0.0
      %1022 = vmatpush1.msra.mxu0 %v889
      %1023 = vmatprep.subr.mxu0 0.0
      %1024 = vmatpush1.msra.mxu0 %v888
      %1025 = vmatprep.subr.mxu0 0.0
      %1026 = vmatpush1.msra.mxu0 %v887
      %1027 = vmatprep.subr.mxu0 0.0
      %1028 = vmatpush1.msra.mxu0 %v886
      %1029 = vmatprep.subr.mxu0 0.0
      %1030 = vmatpush1.msra.mxu0 %v885
      %1031 = vmatprep.subr.mxu0 0.0
      %1032 = vmatpush1.msra.mxu0 %v884
      %1033 = vmatprep.subr.mxu0 0.0
      %1034 = vmatpush1.msra.mxu0 %v883
      %1035 = vmatprep.subr.mxu0 0.0
      %1036 = vmatpush1.msra.mxu0 %v882
      %1037 = vmatprep.subr.mxu0 0.0
      %1038 = vmatpush1.msra.mxu0 %v881
      %1039 = vmatprep.subr.mxu0 0.0
      %1040 = vmatpush1.msra.mxu0 %v880
      %1041 = vmatprep.subr.mxu0 0.0
      %1042 = vmatpush1.msra.mxu0 %v879
      %1043 = vmatprep.subr.mxu0 0.0
      %1044 = vmatpush1.msra.mxu0 %v878
      %1045 = vmatprep.subr.mxu0 0.0
      %1046 = vmatpush1.msra.mxu0 %v877
      %1047 = vmatprep.subr.mxu0 0.0
      %1048 = vmatpush1.msra.mxu0 %v876
      %1049 = vmatprep.subr.mxu0 0.0
      %1050 = vmatpush1.msra.mxu0 %v875
      %1051 = vmatprep.subr.mxu0 0.0
      %1052 = vmatpush2.msra.mxu0 %v906
      %1053 = vmatprep.subr.mxu0 0.0
      %1054 = vmatpush2.msra.mxu0 %v905
      %1055 = vmatprep.subr.mxu0 0.0
      %1056 = vmatpush2.msra.mxu0 %v904
      %1057 = vmatprep.subr.mxu0 0.0
      %1058 = vmatpush2.msra.mxu0 %v903
      %1059 = vmatprep.subr.mxu0 0.0
      %1060 = vmatpush2.msra.mxu0 %v902
      %1061 = vmatprep.subr.mxu0 0.0
      %1062 = vmatpush2.msra.mxu0 %v901
      %1063 = vmatprep.subr.mxu0 0.0
      %1064 = vmatpush2.msra.mxu0 %v900
      %1065 = vmatprep.subr.mxu0 0.0
      %1066 = vmatpush2.msra.mxu0 %v899
      %1067 = vmatprep.subr.mxu0 0.0
      %1068 = vmatpush2.msra.mxu0 %v898
      %1069 = vmatprep.subr.mxu0 0.0
      %1070 = vmatpush2.msra.mxu0 %v897
      %1071 = vmatprep.subr.mxu0 0.0
      %1072 = vmatpush2.msra.mxu0 %v896
      %1073 = vmatprep.subr.mxu0 0.0
      %1074 = vmatpush2.msra.mxu0 %v895
      %1075 = vmatprep.subr.mxu0 0.0
      %1076 = vmatpush2.msra.mxu0 %v894
      %1077 = vmatprep.subr.mxu0 0.0
      %1078 = vmatpush2.msra.mxu0 %v893
      %1079 = vmatprep.subr.mxu0 0.0
      %1080 = vmatpush2.msra.mxu0 %v892
      %1081 = vmatprep.subr.mxu0 0.0
      %1082 = vmatpush2.msra.mxu0 %v891
      %1083 = vmatprep.mubr.f32.mxu0 %v795
      %1084 = vmatmul.mubr.f32.gmra.mxu0 %v794
      %v1085 = vpop.f32.mrf.mxu0
      %v1086 = vadd.f32 0.0, %v1085
      %v1087 = vpop.f32.mrf.mxu0
      %1088 = vmatprep.mubr.f32.mxu0 %v804
      %1089 = vmatmul.mubr.f32.gmra.mxu0 %v803
      %v1090 = vpop.f32.mrf.mxu0
      %v1091 = vadd.f32 0.0, %v1090
      %v1092 = vpop.f32.mrf.mxu0
      %1093 = vmatprep.mubr.f32.mxu0 %v813
      %1094 = vmatmul.mubr.f32.gmra.mxu0 %v812
      %v1095 = vpop.f32.mrf.mxu0
      %v1096 = vadd.f32 0.0, %v1095
      %v1097 = vpop.f32.mrf.mxu0
      %1098 = vmatprep.mubr.f32.mxu0 %v822
      %1099 = vmatmul.mubr.f32.gmra.mxu0 %v821
      %v1100 = vpop.f32.mrf.mxu0
      %v1101 = vadd.f32 0.0, %v1100
      %v1102 = vpop.f32.mrf.mxu0
      %1103 = vmatprep.mubr.f32.mxu0 %v831
      %1104 = vmatmul.mubr.f32.gmra.mxu0 %v830
      %v1105 = vpop.f32.mrf.mxu0
      %v1106 = vadd.f32 0.0, %v1105
      %v1107 = vpop.f32.mrf.mxu0
      %1108 = vmatprep.mubr.f32.mxu0 %v840
      %1109 = vmatmul.mubr.f32.gmra.mxu0 %v839
      %v1110 = vpop.f32.mrf.mxu0
      %v1111 = vadd.f32 0.0, %v1110
      %v1112 = vpop.f32.mrf.mxu0
      %1113 = vmatprep.mubr.f32.mxu0 %v849
      %1114 = vmatmul.mubr.f32.gmra.mxu0 %v848
      %v1115 = vpop.f32.mrf.mxu0
      %v1116 = vadd.f32 0.0, %v1115
      %v1117 = vpop.f32.mrf.mxu0
      %1118 = vmatprep.mubr.f32.mxu0 %v858
      %1119 = vmatmul.mubr.f32.gmra.mxu0 %v857
      %v1120 = vpop.f32.mrf.mxu0
      %v1121 = vadd.f32 0.0, %v1120
      %v1122 = vpop.f32.mrf.mxu0
      %1123 = vmatprep.mubr.f32.mxu0 %v867
      %1124 = vmatmul.mubr.f32.gmra.mxu0 %v866
      %v1125 = vpop.f32.mrf.mxu0
      %v1126 = vadd.f32 0.0, %v1125
      %v1127 = vpop.f32.mrf.mxu0
      %1128 = vdwg.mxu0
      %1129 = vmatprep.subr.mxu0 0.0
      %1130 = vmatpush1.msra.mxu0 %v922
      %1131 = vmatprep.subr.mxu0 0.0
      %1132 = vmatpush1.msra.mxu0 %v921
      %1133 = vmatprep.subr.mxu0 0.0
      %1134 = vmatpush1.msra.mxu0 %v920
      %1135 = vmatprep.subr.mxu0 0.0
      %1136 = vmatpush1.msra.mxu0 %v919
      %1137 = vmatprep.subr.mxu0 0.0
      %1138 = vmatpush1.msra.mxu0 %v918
      %1139 = vmatprep.subr.mxu0 0.0
      %1140 = vmatpush1.msra.mxu0 %v917
      %1141 = vmatprep.subr.mxu0 0.0
      %1142 = vmatpush1.msra.mxu0 %v916
      %1143 = vmatprep.subr.mxu0 0.0
      %1144 = vmatpush1.msra.mxu0 %v915
      %1145 = vmatprep.subr.mxu0 0.0
      %1146 = vmatpush1.msra.mxu0 %v914
      %1147 = vmatprep.subr.mxu0 0.0
      %1148 = vmatpush1.msra.mxu0 %v913
      %1149 = vmatprep.subr.mxu0 0.0
      %1150 = vmatpush1.msra.mxu0 %v912
      %1151 = vmatprep.subr.mxu0 0.0
      %1152 = vmatpush1.msra.mxu0 %v911
      %1153 = vmatprep.subr.mxu0 0.0
      %1154 = vmatpush1.msra.mxu0 %v910
      %1155 = vmatprep.subr.mxu0 0.0
      %1156 = vmatpush1.msra.mxu0 %v909
      %1157 = vmatprep.subr.mxu0 0.0
      %1158 = vmatpush1.msra.mxu0 %v908
      %1159 = vmatprep.subr.mxu0 0.0
      %1160 = vmatpush1.msra.mxu0 %v907
      %1161 = vmatprep.subr.mxu0 0.0
      %1162 = vmatpush2.msra.mxu0 %v938
      %1163 = vmatprep.subr.mxu0 0.0
      %1164 = vmatpush2.msra.mxu0 %v937
      %1165 = vmatprep.subr.mxu0 0.0
      %1166 = vmatpush2.msra.mxu0 %v936
      %1167 = vmatprep.subr.mxu0 0.0
      %1168 = vmatpush2.msra.mxu0 %v935
      %1169 = vmatprep.subr.mxu0 0.0
      %1170 = vmatpush2.msra.mxu0 %v934
      %1171 = vmatprep.subr.mxu0 0.0
      %1172 = vmatpush2.msra.mxu0 %v933
      %1173 = vmatprep.subr.mxu0 0.0
      %1174 = vmatpush2.msra.mxu0 %v932
      %1175 = vmatprep.subr.mxu0 0.0
      %1176 = vmatpush2.msra.mxu0 %v931
      %1177 = vmatprep.subr.mxu0 0.0
      %1178 = vmatpush2.msra.mxu0 %v930
      %1179 = vmatprep.subr.mxu0 0.0
      %1180 = vmatpush2.msra.mxu0 %v929
      %1181 = vmatprep.subr.mxu0 0.0
      %1182 = vmatpush2.msra.mxu0 %v928
      %1183 = vmatprep.subr.mxu0 0.0
      %1184 = vmatpush2.msra.mxu0 %v927
      %1185 = vmatprep.subr.mxu0 0.0
      %1186 = vmatpush2.msra.mxu0 %v926
      %1187 = vmatprep.subr.mxu0 0.0
      %1188 = vmatpush2.msra.mxu0 %v925
      %1189 = vmatprep.subr.mxu0 0.0
      %1190 = vmatpush2.msra.mxu0 %v924
      %1191 = vmatprep.subr.mxu0 0.0
      %1192 = vmatpush2.msra.mxu0 %v923
      %1193 = vmatprep.mubr.f32.mxu0 %v797
      %1194 = vmatmul.mubr.f32.gmra.mxu0 %v796
      %v1195 = vpop.f32.mrf.mxu0
      %v1196 = vadd.f32 %v1086, %v1195
      %v1197 = vpop.f32.mrf.mxu0
      %1198 = vmatprep.mubr.f32.mxu0 %v806
      %1199 = vmatmul.mubr.f32.gmra.mxu0 %v805
      %v1200 = vpop.f32.mrf.mxu0
      %v1201 = vadd.f32 %v1091, %v1200
      %v1202 = vpop.f32.mrf.mxu0
      %1203 = vmatprep.mubr.f32.mxu0 %v815
      %1204 = vmatmul.mubr.f32.gmra.mxu0 %v814
      %v1205 = vpop.f32.mrf.mxu0
      %v1206 = vadd.f32 %v1096, %v1205
      %v1207 = vpop.f32.mrf.mxu0
      %1208 = vmatprep.mubr.f32.mxu0 %v824
      %1209 = vmatmul.mubr.f32.gmra.mxu0 %v823
      %v1210 = vpop.f32.mrf.mxu0
      %v1211 = vadd.f32 %v1101, %v1210
      %v1212 = vpop.f32.mrf.mxu0
      %1213 = vmatprep.mubr.f32.mxu0 %v833
      %1214 = vmatmul.mubr.f32.gmra.mxu0 %v832
      %v1215 = vpop.f32.mrf.mxu0
      %v1216 = vadd.f32 %v1106, %v1215
      %v1217 = vpop.f32.mrf.mxu0
      %1218 = vmatprep.mubr.f32.mxu0 %v842
      %1219 = vmatmul.mubr.f32.gmra.mxu0 %v841
      %v1220 = vpop.f32.mrf.mxu0
      %v1221 = vadd.f32 %v1111, %v1220
      %v1222 = vpop.f32.mrf.mxu0
      %1223 = vmatprep.mubr.f32.mxu0 %v851
      %1224 = vmatmul.mubr.f32.gmra.mxu0 %v850
      %v1225 = vpop.f32.mrf.mxu0
      %v1226 = vadd.f32 %v1116, %v1225
      %v1227 = vpop.f32.mrf.mxu0
      %1228 = vmatprep.mubr.f32.mxu0 %v860
      %1229 = vmatmul.mubr.f32.gmra.mxu0 %v859
      %v1230 = vpop.f32.mrf.mxu0
      %v1231 = vadd.f32 %v1121, %v1230
      %v1232 = vpop.f32.mrf.mxu0
      %1233 = vmatprep.mubr.f32.mxu0 %v869
      %1234 = vmatmul.mubr.f32.gmra.mxu0 %v868
      %v1235 = vpop.f32.mrf.mxu0
      %v1236 = vadd.f32 %v1126, %v1235
      %v1237 = vpop.f32.mrf.mxu0
      %1238 = vdwg.mxu0
      %1239 = vmatprep.subr.mxu0 0.0
      %1240 = vmatpush1.msra.mxu0 %v954
      %1241 = vmatprep.subr.mxu0 0.0
      %1242 = vmatpush1.msra.mxu0 %v953
      %1243 = vmatprep.subr.mxu0 0.0
      %1244 = vmatpush1.msra.mxu0 %v952
      %1245 = vmatprep.subr.mxu0 0.0
      %1246 = vmatpush1.msra.mxu0 %v951
      %1247 = vmatprep.subr.mxu0 0.0
      %1248 = vmatpush1.msra.mxu0 %v950
      %1249 = vmatprep.subr.mxu0 0.0
      %1250 = vmatpush1.msra.mxu0 %v949
      %1251 = vmatprep.subr.mxu0 0.0
      %1252 = vmatpush1.msra.mxu0 %v948
      %1253 = vmatprep.subr.mxu0 0.0
      %1254 = vmatpush1.msra.mxu0 %v947
      %1255 = vmatprep.subr.mxu0 0.0
      %1256 = vmatpush1.msra.mxu0 %v946
      %1257 = vmatprep.subr.mxu0 0.0
      %1258 = vmatpush1.msra.mxu0 %v945
      %1259 = vmatprep.subr.mxu0 0.0
      %1260 = vmatpush1.msra.mxu0 %v944
      %1261 = vmatprep.subr.mxu0 0.0
      %1262 = vmatpush1.msra.mxu0 %v943
      %1263 = vmatprep.subr.mxu0 0.0
      %1264 = vmatpush1.msra.mxu0 %v942
      %1265 = vmatprep.subr.mxu0 0.0
      %1266 = vmatpush1.msra.mxu0 %v941
      %1267 = vmatprep.subr.mxu0 0.0
      %1268 = vmatpush1.msra.mxu0 %v940
      %1269 = vmatprep.subr.mxu0 0.0
      %1270 = vmatpush1.msra.mxu0 %v939
      %1271 = vmatprep.subr.mxu0 0.0
      %1272 = vmatpush2.msra.mxu0 %v970
      %1273 = vmatprep.subr.mxu0 0.0
      %1274 = vmatpush2.msra.mxu0 %v969
      %1275 = vmatprep.subr.mxu0 0.0
      %1276 = vmatpush2.msra.mxu0 %v968
      %1277 = vmatprep.subr.mxu0 0.0
      %1278 = vmatpush2.msra.mxu0 %v967
      %1279 = vmatprep.subr.mxu0 0.0
      %1280 = vmatpush2.msra.mxu0 %v966
      %1281 = vmatprep.subr.mxu0 0.0
      %1282 = vmatpush2.msra.mxu0 %v965
      %1283 = vmatprep.subr.mxu0 0.0
      %1284 = vmatpush2.msra.mxu0 %v964
      %1285 = vmatprep.subr.mxu0 0.0
      %1286 = vmatpush2.msra.mxu0 %v963
      %1287 = vmatprep.subr.mxu0 0.0
      %1288 = vmatpush2.msra.mxu0 %v962
      %1289 = vmatprep.subr.mxu0 0.0
      %1290 = vmatpush2.msra.mxu0 %v961
      %1291 = vmatprep.subr.mxu0 0.0
      %1292 = vmatpush2.msra.mxu0 %v960
      %1293 = vmatprep.subr.mxu0 0.0
      %1294 = vmatpush2.msra.mxu0 %v959
      %1295 = vmatprep.subr.mxu0 0.0
      %1296 = vmatpush2.msra.mxu0 %v958
      %1297 = vmatprep.subr.mxu0 0.0
      %1298 = vmatpush2.msra.mxu0 %v957
      %1299 = vmatprep.subr.mxu0 0.0
      %1300 = vmatpush2.msra.mxu0 %v956
      %1301 = vmatprep.subr.mxu0 0.0
      %1302 = vmatpush2.msra.mxu0 %v955
      %1303 = vmatprep.mubr.f32.mxu0 %v799
      %1304 = vmatmul.mubr.f32.gmra.mxu0 %v798
      %v1305 = vpop.f32.mrf.mxu0
      %v1306 = vadd.f32 %v1196, %v1305
      %v1307 = vpop.f32.mrf.mxu0
      %1308 = vmatprep.mubr.f32.mxu0 %v808
      %1309 = vmatmul.mubr.f32.gmra.mxu0 %v807
      %v1310 = vpop.f32.mrf.mxu0
      %v1311 = vadd.f32 %v1201, %v1310
      %v1312 = vpop.f32.mrf.mxu0
      %1313 = vmatprep.mubr.f32.mxu0 %v817
      %1314 = vmatmul.mubr.f32.gmra.mxu0 %v816
      %v1315 = vpop.f32.mrf.mxu0
      %v1316 = vadd.f32 %v1206, %v1315
      %v1317 = vpop.f32.mrf.mxu0
      %1318 = vmatprep.mubr.f32.mxu0 %v826
      %1319 = vmatmul.mubr.f32.gmra.mxu0 %v825
      %v1320 = vpop.f32.mrf.mxu0
      %v1321 = vadd.f32 %v1211, %v1320
      %v1322 = vpop.f32.mrf.mxu0
      %1323 = vmatprep.mubr.f32.mxu0 %v835
      %1324 = vmatmul.mubr.f32.gmra.mxu0 %v834
      %v1325 = vpop.f32.mrf.mxu0
      %v1326 = vadd.f32 %v1216, %v1325
      %v1327 = vpop.f32.mrf.mxu0
      %1328 = vmatprep.mubr.f32.mxu0 %v844
      %1329 = vmatmul.mubr.f32.gmra.mxu0 %v843
      %v1330 = vpop.f32.mrf.mxu0
      %v1331 = vadd.f32 %v1221, %v1330
      %v1332 = vpop.f32.mrf.mxu0
      %1333 = vmatprep.mubr.f32.mxu0 %v853
      %1334 = vmatmul.mubr.f32.gmra.mxu0 %v852
      %v1335 = vpop.f32.mrf.mxu0
      %v1336 = vadd.f32 %v1226, %v1335
      %v1337 = vpop.f32.mrf.mxu0
      %1338 = vmatprep.mubr.f32.mxu0 %v862
      %1339 = vmatmul.mubr.f32.gmra.mxu0 %v861
      %v1340 = vpop.f32.mrf.mxu0
      %v1341 = vadd.f32 %v1231, %v1340
      %v1342 = vpop.f32.mrf.mxu0
      %1343 = vmatprep.mubr.f32.mxu0 %v871
      %1344 = vmatmul.mubr.f32.gmra.mxu0 %v870
      %v1345 = vpop.f32.mrf.mxu0
      %v1346 = vadd.f32 %v1236, %v1345
      %v1347 = vpop.f32.mrf.mxu0
      %1348 = vdwg.mxu0
      %1349 = vmatprep.subr.mxu0 0.0
      %1350 = vmatpush1.msra.mxu0 %v986
      %1351 = vmatprep.subr.mxu0 0.0
      %1352 = vmatpush1.msra.mxu0 %v985
      %1353 = vmatprep.subr.mxu0 0.0
      %1354 = vmatpush1.msra.mxu0 %v984
      %1355 = vmatprep.subr.mxu0 0.0
      %1356 = vmatpush1.msra.mxu0 %v983
      %1357 = vmatprep.subr.mxu0 0.0
      %1358 = vmatpush1.msra.mxu0 %v982
      %1359 = vmatprep.subr.mxu0 0.0
      %1360 = vmatpush1.msra.mxu0 %v981
      %1361 = vmatprep.subr.mxu0 0.0
      %1362 = vmatpush1.msra.mxu0 %v980
      %1363 = vmatprep.subr.mxu0 0.0
      %1364 = vmatpush1.msra.mxu0 %v979
      %1365 = vmatprep.subr.mxu0 0.0
      %1366 = vmatpush1.msra.mxu0 %v978
      %1367 = vmatprep.subr.mxu0 0.0
      %1368 = vmatpush1.msra.mxu0 %v977
      %1369 = vmatprep.subr.mxu0 0.0
      %1370 = vmatpush1.msra.mxu0 %v976
      %1371 = vmatprep.subr.mxu0 0.0
      %1372 = vmatpush1.msra.mxu0 %v975
      %1373 = vmatprep.subr.mxu0 0.0
      %1374 = vmatpush1.msra.mxu0 %v974
      %1375 = vmatprep.subr.mxu0 0.0
      %1376 = vmatpush1.msra.mxu0 %v973
      %1377 = vmatprep.subr.mxu0 0.0
      %1378 = vmatpush1.msra.mxu0 %v972
      %1379 = vmatprep.subr.mxu0 0.0
      %1380 = vmatpush1.msra.mxu0 %v971
      %1381 = vmatprep.subr.mxu0 0.0
      %1382 = vmatpush2.msra.mxu0 %v1002
      %1383 = vmatprep.subr.mxu0 0.0
      %1384 = vmatpush2.msra.mxu0 %v1001
      %1385 = vmatprep.subr.mxu0 0.0
      %1386 = vmatpush2.msra.mxu0 %v1000
      %1387 = vmatprep.subr.mxu0 0.0
      %1388 = vmatpush2.msra.mxu0 %v999
      %1389 = vmatprep.subr.mxu0 0.0
      %1390 = vmatpush2.msra.mxu0 %v998
      %1391 = vmatprep.subr.mxu0 0.0
      %1392 = vmatpush2.msra.mxu0 %v997
      %1393 = vmatprep.subr.mxu0 0.0
      %1394 = vmatpush2.msra.mxu0 %v996
      %1395 = vmatprep.subr.mxu0 0.0
      %1396 = vmatpush2.msra.mxu0 %v995
      %1397 = vmatprep.subr.mxu0 0.0
      %1398 = vmatpush2.msra.mxu0 %v994
      %1399 = vmatprep.subr.mxu0 0.0
      %1400 = vmatpush2.msra.mxu0 %v993
      %1401 = vmatprep.subr.mxu0 0.0
      %1402 = vmatpush2.msra.mxu0 %v992
      %1403 = vmatprep.subr.mxu0 0.0
      %1404 = vmatpush2.msra.mxu0 %v991
      %1405 = vmatprep.subr.mxu0 0.0
      %1406 = vmatpush2.msra.mxu0 %v990
      %1407 = vmatprep.subr.mxu0 0.0
      %1408 = vmatpush2.msra.mxu0 %v989
      %1409 = vmatprep.subr.mxu0 0.0
      %1410 = vmatpush2.msra.mxu0 %v988
      %1411 = vmatprep.subr.mxu0 0.0
      %1412 = vmatpush2.msra.mxu0 %v987
      %1413 = vmatprep.mubr.f32.mxu0 %v801
      %1414 = vmatmul.mubr.f32.gmra.mxu0 %v800
      %v1415 = vpop.f32.mrf.mxu0
      %v1416 = vadd.f32 %v1306, %v1415
      %v1417 = vpop.f32.mrf.mxu0
      %1418 = vmatprep.mubr.f32.mxu0 %v810
      %1419 = vmatmul.mubr.f32.gmra.mxu0 %v809
      %v1420 = vpop.f32.mrf.mxu0
      %v1421 = vadd.f32 %v1311, %v1420
      %v1422 = vpop.f32.mrf.mxu0
      %1423 = vmatprep.mubr.f32.mxu0 %v819
      %1424 = vmatmul.mubr.f32.gmra.mxu0 %v818
      %v1425 = vpop.f32.mrf.mxu0
      %v1426 = vadd.f32 %v1316, %v1425
      %v1427 = vpop.f32.mrf.mxu0
      %1428 = vmatprep.mubr.f32.mxu0 %v828
      %1429 = vmatmul.mubr.f32.gmra.mxu0 %v827
      %v1430 = vpop.f32.mrf.mxu0
      %v1431 = vadd.f32 %v1321, %v1430
      %v1432 = vpop.f32.mrf.mxu0
      %1433 = vmatprep.mubr.f32.mxu0 %v837
      %1434 = vmatmul.mubr.f32.gmra.mxu0 %v836
      %v1435 = vpop.f32.mrf.mxu0
      %v1436 = vadd.f32 %v1326, %v1435
      %v1437 = vpop.f32.mrf.mxu0
      %1438 = vmatprep.mubr.f32.mxu0 %v846
      %1439 = vmatmul.mubr.f32.gmra.mxu0 %v845
      %v1440 = vpop.f32.mrf.mxu0
      %v1441 = vadd.f32 %v1331, %v1440
      %v1442 = vpop.f32.mrf.mxu0
      %1443 = vmatprep.mubr.f32.mxu0 %v855
      %1444 = vmatmul.mubr.f32.gmra.mxu0 %v854
      %v1445 = vpop.f32.mrf.mxu0
      %v1446 = vadd.f32 %v1336, %v1445
      %v1447 = vpop.f32.mrf.mxu0
      %1448 = vmatprep.mubr.f32.mxu0 %v864
      %1449 = vmatmul.mubr.f32.gmra.mxu0 %v863
      %v1450 = vpop.f32.mrf.mxu0
      %v1451 = vadd.f32 %v1341, %v1450
      %v1452 = vpop.f32.mrf.mxu0
      %1453 = vmatprep.mubr.f32.mxu0 %v873
      %1454 = vmatmul.mubr.f32.gmra.mxu0 %v872
      %v1455 = vpop.f32.mrf.mxu0
      %v1456 = vadd.f32 %v1346, %v1455
      %v1457 = vpop.f32.mrf.mxu0
      %1458 = vdwg.mxu0
      %1459 = vmatprep.subr.mxu0 0.0
      %1460 = vmatpush1.msra.mxu0 %v1018
      %1461 = vmatprep.subr.mxu0 0.0
      %1462 = vmatpush1.msra.mxu0 %v1017
      %1463 = vmatprep.subr.mxu0 0.0
      %1464 = vmatpush1.msra.mxu0 %v1016
      %1465 = vmatprep.subr.mxu0 0.0
      %1466 = vmatpush1.msra.mxu0 %v1015
      %1467 = vmatprep.subr.mxu0 0.0
      %1468 = vmatpush1.msra.mxu0 %v1014
      %1469 = vmatprep.subr.mxu0 0.0
      %1470 = vmatpush1.msra.mxu0 %v1013
      %1471 = vmatprep.subr.mxu0 0.0
      %1472 = vmatpush1.msra.mxu0 %v1012
      %1473 = vmatprep.subr.mxu0 0.0
      %1474 = vmatpush1.msra.mxu0 %v1011
      %1475 = vmatprep.subr.mxu0 0.0
      %1476 = vmatpush1.msra.mxu0 %v1010
      %1477 = vmatprep.subr.mxu0 0.0
      %1478 = vmatpush1.msra.mxu0 %v1009
      %1479 = vmatprep.subr.mxu0 0.0
      %1480 = vmatpush1.msra.mxu0 %v1008
      %1481 = vmatprep.subr.mxu0 0.0
      %1482 = vmatpush1.msra.mxu0 %v1007
      %1483 = vmatprep.subr.mxu0 0.0
      %1484 = vmatpush1.msra.mxu0 %v1006
      %1485 = vmatprep.subr.mxu0 0.0
      %1486 = vmatpush1.msra.mxu0 %v1005
      %1487 = vmatprep.subr.mxu0 0.0
      %1488 = vmatpush1.msra.mxu0 %v1004
      %1489 = vmatprep.subr.mxu0 0.0
      %1490 = vmatpush1.msra.mxu0 %v1003
      %1491 = vmatprep.subr.mxu0 0.0
      %1492 = vmatpush2.msra.mxu0 0.0
      %1493 = vmatprep.subr.mxu0 0.0
      %1494 = vmatpush2.msra.mxu0 0.0
      %1495 = vmatprep.subr.mxu0 0.0
      %1496 = vmatpush2.msra.mxu0 0.0
      %1497 = vmatprep.subr.mxu0 0.0
      %1498 = vmatpush2.msra.mxu0 0.0
      %1499 = vmatprep.subr.mxu0 0.0
      %1500 = vmatpush2.msra.mxu0 0.0
      %1501 = vmatprep.subr.mxu0 0.0
      %1502 = vmatpush2.msra.mxu0 0.0
      %1503 = vmatprep.subr.mxu0 0.0
      %1504 = vmatpush2.msra.mxu0 0.0
      %1505 = vmatprep.subr.mxu0 0.0
      %1506 = vmatpush2.msra.mxu0 0.0
      %1507 = vmatprep.subr.mxu0 0.0
      %1508 = vmatpush2.msra.mxu0 0.0
      %1509 = vmatprep.subr.mxu0 0.0
      %1510 = vmatpush2.msra.mxu0 0.0
      %1511 = vmatprep.subr.mxu0 0.0
      %1512 = vmatpush2.msra.mxu0 0.0
      %1513 = vmatprep.subr.mxu0 0.0
      %1514 = vmatpush2.msra.mxu0 0.0
      %1515 = vmatprep.subr.mxu0 0.0
      %1516 = vmatpush2.msra.mxu0 0.0
      %1517 = vmatprep.subr.mxu0 0.0
      %1518 = vmatpush2.msra.mxu0 0.0
      %1519 = vmatprep.subr.mxu0 0.0
      %1520 = vmatpush2.msra.mxu0 0.0
      %1521 = vmatprep.subr.mxu0 0.0
      %1522 = vmatpush2.msra.mxu0 0.0
      %1523 = vmatprep.mubr.f32.mxu0 0.0
      %1524 = vmatmul.mubr.f32.gmra.mxu0 %v802
      %v1525 = vpop.f32.mrf.mxu0
      %v1526 = vadd.f32 %v1416, %v1525
      %v1527 = vpop.f32.mrf.mxu0
      %1528 = vmatprep.mubr.f32.mxu0 0.0
      %1529 = vmatmul.mubr.f32.gmra.mxu0 %v811
      %v1530 = vpop.f32.mrf.mxu0
      %v1531 = vadd.f32 %v1421, %v1530
      %v1532 = vpop.f32.mrf.mxu0
      %1533 = vmatprep.mubr.f32.mxu0 0.0
      %1534 = vmatmul.mubr.f32.gmra.mxu0 %v820
      %v1535 = vpop.f32.mrf.mxu0
      %v1536 = vadd.f32 %v1426, %v1535
      %v1537 = vpop.f32.mrf.mxu0
      %1538 = vmatprep.mubr.f32.mxu0 0.0
      %1539 = vmatmul.mubr.f32.gmra.mxu0 %v829
      %v1540 = vpop.f32.mrf.mxu0
      %v1541 = vadd.f32 %v1431, %v1540
      %v1542 = vpop.f32.mrf.mxu0
      %1543 = vmatprep.mubr.f32.mxu0 0.0
      %1544 = vmatmul.mubr.f32.gmra.mxu0 %v838
      %v1545 = vpop.f32.mrf.mxu0
      %v1546 = vadd.f32 %v1436, %v1545
      %v1547 = vpop.f32.mrf.mxu0
      %1548 = vmatprep.mubr.f32.mxu0 0.0
      %1549 = vmatmul.mubr.f32.gmra.mxu0 %v847
      %v1550 = vpop.f32.mrf.mxu0
      %v1551 = vadd.f32 %v1441, %v1550
      %v1552 = vpop.f32.mrf.mxu0
      %1553 = vmatprep.mubr.f32.mxu0 0.0
      %1554 = vmatmul.mubr.f32.gmra.mxu0 %v856
      %v1555 = vpop.f32.mrf.mxu0
      %v1556 = vadd.f32 %v1446, %v1555
      %v1557 = vpop.f32.mrf.mxu0
      %1558 = vmatprep.mubr.f32.mxu0 0.0
      %1559 = vmatmul.mubr.f32.gmra.mxu0 %v865
      %v1560 = vpop.f32.mrf.mxu0
      %v1561 = vadd.f32 %v1451, %v1560
      %v1562 = vpop.f32.mrf.mxu0
      %1563 = vmatprep.mubr.f32.mxu0 0.0
      %1564 = vmatmul.mubr.f32.gmra.mxu0 %v874
      %v1565 = vpop.f32.mrf.mxu0
      %v1566 = vadd.f32 %v1456, %v1565
      %v1567 = vpop.f32.mrf.mxu0
      %1568 = vdwg.mxu0
      %1569 = vst [vmem:[%s594] sm:$0xff] %v1526
      %1570 = vst [vmem:[%s594 + $0x8] sm:$0xff] %v1531
      %1571 = vst [vmem:[%s594 + $0x10] sm:$0xff] %v1536
      %1572 = vst [vmem:[%s594 + $0x18] sm:$0xff] %v1541
      %1573 = vst [vmem:[%s594 + $0x20] sm:$0xff] %v1546
      %1574 = vst [vmem:[%s594 + $0x28] sm:$0xff] %v1551
      %1575 = vst [vmem:[%s594 + $0x30] sm:$0xff] %v1556
      %1576 = vst [vmem:[%s594 + $0x38] sm:$0xff] %v1561
      %1577 = vst [vmem:[%s594 + $0x40] sm:$0xff] %v1566
      %v1578 = vld [vmem:[%s574] sm:$0xff]
      %v1579 = vld [vmem:[%s574 + $0x8] sm:$0xff]
      %v1580 = vld [vmem:[%s574 + $0x10] sm:$0xff]
      %v1581 = vld [vmem:[%s574 + $0x18] sm:$0xff]
      %v1582 = vld [vmem:[%s574 + $0x20] sm:$0xff]
      %v1583 = vld [vmem:[%s574 + $0x28] sm:$0xff]
      %v1584 = vld [vmem:[%s574 + $0x30] sm:$0xff]
      %v1585 = vld [vmem:[%s574 + $0x38] sm:$0xff]
      %v1586 = vld [vmem:[%s574 + $0x40] sm:$0xff]
      %1588 = vset.pattern.permute.xlu0 0
      %1589 = vperm.xlu0 %1588, %v1578
      %v1590 = vpop.permute.xlu0 %1589
      %1593 = vset.pattern.permute.xlu0 0
      %1594 = vperm.xlu0 %1593, %v1579
      %v1595 = vpop.permute.xlu0 %1594
      %1598 = vset.pattern.permute.xlu0 0
      %1599 = vperm.xlu0 %1598, %v1580
      %v1600 = vpop.permute.xlu0 %1599
      %1603 = vset.pattern.permute.xlu0 0
      %1604 = vperm.xlu0 %1603, %v1581
      %v1605 = vpop.permute.xlu0 %1604
      %1608 = vset.pattern.permute.xlu0 0
      %1609 = vperm.xlu0 %1608, %v1582
      %v1610 = vpop.permute.xlu0 %1609
      %1613 = vset.pattern.permute.xlu0 0
      %1614 = vperm.xlu0 %1613, %v1583
      %v1615 = vpop.permute.xlu0 %1614
      %1618 = vset.pattern.permute.xlu0 0
      %1619 = vperm.xlu0 %1618, %v1584
      %v1620 = vpop.permute.xlu0 %1619
      %1623 = vset.pattern.permute.xlu0 0
      %1624 = vperm.xlu0 %1623, %v1585
      %v1625 = vpop.permute.xlu0 %1624
      %1628 = vset.pattern.permute.xlu0 0
      %1629 = vperm.xlu0 %1628, %v1586
      %v1630 = vpop.permute.xlu0 %1629
      %v1632 = vmul.f32 %v1526, %v1590
      %v1633 = vmul.f32 %v1531, %v1595
      %v1634 = vmul.f32 %v1536, %v1600
      %v1635 = vmul.f32 %v1541, %v1605
      %v1636 = vmul.f32 %v1546, %v1610
      %v1637 = vmul.f32 %v1551, %v1615
      %v1638 = vmul.f32 %v1556, %v1620
      %v1639 = vmul.f32 %v1561, %v1625
      %v1640 = vmul.f32 %v1566, %v1630
      %v1641 = vadd.f32 %v1632, %v1633
      %v1642 = vadd.f32 %v1641, %v1634
      %v1643 = vadd.f32 %v1642, %v1635
      %v1644 = vadd.f32 %v1643, %v1636
      %v1645 = vadd.f32 %v1644, %v1637
      %v1646 = vadd.f32 %v1645, %v1638
      %v1647 = vadd.f32 %v1646, %v1639
      %v1648 = vadd.f32 %v1647, %v1640
      %v1649 = vrot.slane %v1648, 4
      %v1650 = vadd.f32 %v1648, %v1649
      %v1651 = vrot.slane %v1650, 2
      %v1652 = vadd.f32 %v1650, %v1651
      %v1653 = vrot.slane %v1652, 1
      %v1654 = vadd.f32 %v1652, %v1653
      %1655 = vst [vmem:[%s598] sm:$0x1] %v1654
      %v1656 = vmul.f32 %v1632, %v1526
      %v1657 = vmul.f32 %v1633, %v1531
      %v1658 = vmul.f32 %v1634, %v1536
      %v1659 = vmul.f32 %v1635, %v1541
      %v1660 = vmul.f32 %v1636, %v1546
      %v1661 = vmul.f32 %v1637, %v1551
      %v1662 = vmul.f32 %v1638, %v1556
      %v1663 = vmul.f32 %v1639, %v1561
      %v1664 = vmul.f32 %v1640, %v1566
      %v1665 = vadd.f32 %v1656, %v1657
      %v1666 = vadd.f32 %v1665, %v1658
      %v1667 = vadd.f32 %v1666, %v1659
      %v1668 = vadd.f32 %v1667, %v1660
      %v1669 = vadd.f32 %v1668, %v1661
      %v1670 = vadd.f32 %v1669, %v1662
      %v1671 = vadd.f32 %v1670, %v1663
      %v1672 = vadd.f32 %v1671, %v1664
      %v1673 = vrot.slane %v1672, 4
      %v1674 = vadd.f32 %v1672, %v1673
      %v1675 = vrot.slane %v1674, 2
      %v1676 = vadd.f32 %v1674, %v1675
      %v1677 = vrot.slane %v1676, 1
      %v1678 = vadd.f32 %v1676, %v1677
      %1679 = vst [vmem:[%s601] sm:$0x1] %v1678
      %s1680 = smul.u32 9, %s22
      %p1681 = scmp.lt.s32.totalorder %s1680, 80
      %s1682 = scalar_select %p1681, %s1680, 80
      %s1683 = smul.addr %s1682, 8
      %s1684 = scalar_lea.vmem %s8, %s1683
      %p1685 = scmp.lt.s32.totalorder %s22, 8
      %s1686 = scalar_select %p1685, %s22, 8
      %s1687 = scalar_lea.vmem %s9, %s1686
      %p1688 = scmp.lt.s32.totalorder %s22, 8
      %s1689 = scalar_select %p1688, %s22, 8
      %s1690 = scalar_lea.vmem %s10, %s1689
      // Predicated region
      $region53: #{conv_block_forward.3} parent=51 // pred_check
        %p1691 = pneg %p270
      $region54: #{conv_block_forward.3} parent=51 // pred_check_branch
        %1693 = sbr.rel (%p1691) target = $region56
      $region55: #{conv_block_forward.3} parent=51 // pred_region
        %s1694 = smul.u32 9, %s22
      $region56: #{conv_block_forward.3} parent=51 // pred_fallthru
        _
      // Predicated region
      $region57: #{conv_block_forward.3} parent=51 // pred_check
        %p1695 = pneg %p296
      $region58: #{conv_block_forward.3} parent=51 // pred_check_branch
        %1697 = sbr.rel (%p1695) target = $region60
      $region59: #{conv_block_forward.3} parent=51 // pred_region
        _
      $region60: #{conv_block_forward.3} parent=51 // pred_fallthru
        _
      // Predicated region
      $region61: #{conv_block_forward.3} parent=51 // pred_check
        %p1698 = pneg %p322
      $region62: #{conv_block_forward.3} parent=51 // pred_check_branch
        %1700 = sbr.rel (%p1698) target = $region64
      $region63: #{conv_block_forward.3} parent=51 // pred_region
        _
      $region64: #{conv_block_forward.3} parent=51 // pred_fallthru
        _
    $region52: #{conv_block_forward.3} parent=5 // pred_fallthru
      _
    %p1701 = scmp.le.s32.totalorder 2, %s17
    // Predicated region
    $region65: #{conv_block_forward.3} parent=5 // pred_check
      %p1702 = pneg %p1701
    $region66: #{conv_block_forward.3} parent=5 // pred_check_branch
      %1704 = sbr.rel (%p1702) target = $region68
    $region67: #{conv_block_forward.3} parent=5 // pred_region
      %s1705 = ssub.s32 %s17, 2
      // Predicated region
      $region69: #{conv_block_forward.3} parent=67 // pred_check
        %p1706 = pneg %p276
      $region70: #{conv_block_forward.3} parent=67 // pred_check_branch
        %1708 = sbr.rel (%p1706) target = $region72
      $region71: #{conv_block_forward.3} parent=67 // pred_region
        %s1709 = smul.u32 9, %s23
        %p1710 = scmp.lt.s32.totalorder %s1709, 80
        %s1711 = scalar_select %p1710, %s1709, 80
        %s1712 = smul.addr %s1711, 8
        %s1713 = scalar_lea.vmem %s8, %s1712
      $region72: #{conv_block_forward.3} parent=67 // pred_fallthru
        _
      // Predicated region
      $region73: #{conv_block_forward.3} parent=67 // pred_check
        %p1714 = pneg %p302
      $region74: #{conv_block_forward.3} parent=67 // pred_check_branch
        %1716 = sbr.rel (%p1714) target = $region76
      $region75: #{conv_block_forward.3} parent=67 // pred_region
        %p1717 = scmp.lt.s32.totalorder %s23, 8
        %s1718 = scalar_select %p1717, %s23, 8
        %s1719 = scalar_lea.vmem %s9, %s1718
      $region76: #{conv_block_forward.3} parent=67 // pred_fallthru
        _
      // Predicated region
      $region77: #{conv_block_forward.3} parent=67 // pred_check
        %p1720 = pneg %p328
      $region78: #{conv_block_forward.3} parent=67 // pred_check_branch
        %1722 = sbr.rel (%p1720) target = $region80
      $region79: #{conv_block_forward.3} parent=67 // pred_region
        %p1723 = scmp.lt.s32.totalorder %s23, 8
        %s1724 = scalar_select %p1723, %s23, 8
        %s1725 = scalar_lea.vmem %s10, %s1724
      $region80: #{conv_block_forward.3} parent=67 // pred_fallthru
        _
    $region68: #{conv_block_forward.3} parent=5 // pred_fallthru
      _
  $region6: #{conv_block_forward.3} parent=0 // loop_footer
    %s21 = sadd.s32 1, %s17
  $region7: #{conv_block_forward.3} parent=0 // loop_footer_branch
    %16 = sbr.rel target = $region3
  $region8: #{conv_block_forward.3} parent=0 // loop_exit
    _

// kernel: conv_block_forward.4
$region0: #{conv_block_forward.4}
  #allocation0 [shape = 'u32[]', space=smem, size = 0x4, offset = 0x4, fixed_abs, tag = 'smem constant byte address 0x4 - core index']
  #allocation1 [shape = 'u32[144,128]{1,0:T(1,128)}', space=vmem, size = 0x12000, scoped, tag = 'internal scratch']
  #allocation2 [shape = 'f32[120,128]{1,0:T(8,128)}', space=vmem, size = 0xf000, scoped, tag = 'scratch operand']
  #allocation3 [shape = 'f32[72,1152]{1,0:T(8,128)}', space=vmem, size = 0x51000, scoped, tag = 'scratch operand']
  %s0 = inlined_call_operand.vmem [shape: f32[648,128], index: 0, kind: input, shape index: {}, may-alias: {0,1,2}]
  %s1 = inlined_call_operand.vmem [shape: f32[648,128], index: 1, kind: input, shape index: {}, may-alias: {0,1,2}]
  %s2 = inlined_call_operand.vmem [shape: f32[648,128], index: 2, kind: input, shape index: {}, may-alias: {0,1,2}]
  %s3 = inlined_call_operand.vmem [shape: f32[648,1], index: 3, kind: input, shape index: {}, may-alias: {3,4,5}]
  %s4 = inlined_call_operand.vmem [shape: f32[648,1], index: 4, kind: input, shape index: {}, may-alias: {3,4,5}]
  %s5 = inlined_call_operand.vmem [shape: f32[648,1], index: 5, kind: input, shape index: {}, may-alias: {3,4,5}]
  %s6 = inlined_call_operand.vmem [shape: f32[8,128], index: 6, kind: input, shape index: {}]
  %s7 = inlined_call_operand.vmem [shape: f32[1152,128], index: 7, kind: input, shape index: {}]
  %s8 = inlined_call_operand.vmem [shape: f32[648,128], index: 8, kind: output, shape index: {0}]
  %s9 = inlined_call_operand.vmem [shape: f32[9,1,128], index: 9, kind: output, shape index: {1}]
  %s10 = inlined_call_operand.vmem [shape: f32[9,1,128], index: 10, kind: output, shape index: {2}]
  %11 = xla_tuple %s8, %s9, %s10
  %s12 = sld [smem:[#allocation0]]
  $region81: #{conv_block_forward.4} parent=0
    _
  %s14 = ssub.s32 1, %s12
  %s15 = scalar_select 0, %s14, %s12
  loop: start=0, step=1, limit=11
  $region2: #{conv_block_forward.4} parent=0 // loop_pre_header
    _
  $region3: #{conv_block_forward.4} parent=0 // loop_header
    %s17 = sphi 0, %s21
    %p18 = scmp.ge.s32.totalorder %s17, 11
    %s35 = sphi 0, %s37
    %s38 = sphi 0, %s35
    %s39 = sphi 0, %s38
    %s55 = sphi 0, %s39
    %s61 = sphi 0, %s63
    %s64 = sphi 0, %s61
    %s65 = sphi 0, %s64
    %s81 = sphi 0, %s65
    %s95 = sphi 0, %s97
    %s98 = sphi 0, %s95
    %s99 = sphi 0, %s98
    %s115 = sphi 0, %s99
    %s129 = sphi 0, %s131
    %s132 = sphi 0, %s129
    %s133 = sphi 0, %s132
    %s149 = sphi 0, %s133
    %s155 = sphi 0, %s157
    %s158 = sphi 0, %s155
    %s159 = sphi 0, %s158
    %s175 = sphi 0, %s159
    %s189 = sphi 0, %s191
    %s192 = sphi 0, %s189
    %s193 = sphi 0, %s192
    %s209 = sphi 0, %s193
    %s213 = sphi 0, %s213
    %s215 = sphi 0, %s213
    %s216 = sphi 0, %s215
    %s230 = sphi 0, %s216
    %s234 = sphi 0, %s234
    %s236 = sphi 0, %s234
    %s237 = sphi 0, %s236
    %s251 = sphi 0, %s237
    %s257 = sphi 0, %s259
    %s260 = sphi 0, %s257
    %s261 = sphi 0, %s260
    %s277 = sphi 0, %s261
    %s283 = sphi 0, %s285
    %s286 = sphi 0, %s283
    %s287 = sphi 0, %s286
    %s303 = sphi 0, %s287
    %s309 = sphi 0, %s311
    %s312 = sphi 0, %s309
    %s313 = sphi 0, %s312
    %s329 = sphi 0, %s313
  $region4: #{conv_block_forward.4} parent=0 // loop_header_branch
    %20 = sbr.rel (%p18) target = $region8
  $region5: #{conv_block_forward.4} parent=0 // loop_body
    %s22 = ssub.s32 %s17, 1
    %s23 = ssub.s32 %s17, 2
    %s24 = sadd.s32 %s17, 1
    %s25 = smul.u32 %s17, 3
    %s26 = ssub.s32 %s25, 1
    %p27 = scmp.gt.s32.totalorder %s26, 0
    %s28 = scalar_select %p27, %s26, 0
    %s29 = smul.u32 %s24, 3
    %s30 = ssub.s32 %s29, 1
    %p31 = scmp.gt.s32.totalorder %s30, 0
    %s32 = scalar_select %p31, %s30, 0
    %s33 = ssub.s32 %s28, %s32
    %p34 = scmp.eq.s32.totalorder %s33, 0
    %s36 = sadd.s32 %s35, 1
    %s37 = scalar_select %p34, %s35, %s36
    %p40 = pneg %p34
    %p41 = scmp.eq.s32.totalorder %s17, 8
    %p42 = por %p40, %p41
    %p43 = scmp.ne.s32.totalorder %s35, %s38
    %p44 = scmp.eq.s32.totalorder %s17, 0
    %p45 = por %p43, %p44
    %p46 = scmp.ne.s32.totalorder %s35, %s38
    %p47 = scmp.eq.s32.totalorder %s22, 8
    %p48 = por %p46, %p47
    %p49 = scmp.ne.s32.totalorder %s38, %s39
    %p50 = scmp.eq.s32.totalorder %s22, 0
    %p51 = por %p49, %p50
    %p52 = scmp.ne.s32.totalorder %s38, %s39
    %p53 = scmp.eq.s32.totalorder %s23, 8
    %p54 = por %p52, %p53
    %p56 = scmp.ne.s32.totalorder %s39, %s55
    %p57 = scmp.eq.s32.totalorder %s23, 0
    %p58 = por %p56, %p57
    %s59 = ssub.s32 %s17, %s24
    %p60 = scmp.eq.s32.totalorder %s59, 0
    %s62 = sadd.s32 %s61, 1
    %s63 = scalar_select %p60, %s61, %s62
    %p66 = pneg %p60
    %p67 = scmp.eq.s32.totalorder %s17, 8
    %p68 = por %p66, %p67
    %p69 = scmp.ne.s32.totalorder %s61, %s64
    %p70 = scmp.eq.s32.totalorder %s17, 0
    %p71 = por %p69, %p70
    %p72 = scmp.ne.s32.totalorder %s61, %s64
    %p73 = scmp.eq.s32.totalorder %s22, 8
    %p74 = por %p72, %p73
    %p75 = scmp.ne.s32.totalorder %s64, %s65
    %p76 = scmp.eq.s32.totalorder %s22, 0
    %p77 = por %p75, %p76
    %p78 = scmp.ne.s32.totalorder %s64, %s65
    %p79 = scmp.eq.s32.totalorder %s23, 8
    %p80 = por %p78, %p79
    %p82 = scmp.ne.s32.totalorder %s65, %s81
    %p83 = scmp.eq.s32.totalorder %s23, 0
    %p84 = por %p82, %p83
    %s85 = sadd.s32 %s17, 1
    %s86 = smul.u32 %s85, 3
    %p87 = scmp.lt.s32.totalorder %s86, 26
    %s88 = scalar_select %p87, %s86, 26
    %s89 = sadd.s32 %s24, 1
    %s90 = smul.u32 %s89, 3
    %p91 = scmp.lt.s32.totalorder %s90, 26
    %s92 = scalar_select %p91, %s90, 26
    %s93 = ssub.s32 %s88, %s92
    %p94 = scmp.eq.s32.totalorder %s93, 0
    %s96 = sadd.s32 %s95, 1
    %s97 = scalar_select %p94, %s95, %s96
    %p100 = pneg %p94
    %p101 = scmp.eq.s32.totalorder %s17, 8
    %p102 = por %p100, %p101
    %p103 = scmp.ne.s32.totalorder %s95, %s98
    %p104 = scmp.eq.s32.totalorder %s17, 0
    %p105 = por %p103, %p104
    %p106 = scmp.ne.s32.totalorder %s95, %s98
    %p107 = scmp.eq.s32.totalorder %s22, 8
    %p108 = por %p106, %p107
    %p109 = scmp.ne.s32.totalorder %s98, %s99
    %p110 = scmp.eq.s32.totalorder %s22, 0
    %p111 = por %p109, %p110
    %p112 = scmp.ne.s32.totalorder %s98, %s99
    %p113 = scmp.eq.s32.totalorder %s23, 8
    %p114 = por %p112, %p113
    %p116 = scmp.ne.s32.totalorder %s99, %s115
    %p117 = scmp.eq.s32.totalorder %s23, 0
    %p118 = por %p116, %p117
    %s119 = smul.u32 %s17, 3
    %s120 = ssub.s32 %s119, 1
    %p121 = scmp.gt.s32.totalorder %s120, 0
    %s122 = scalar_select %p121, %s120, 0
    %s123 = smul.u32 %s24, 3
    %s124 = ssub.s32 %s123, 1
    %p125 = scmp.gt.s32.totalorder %s124, 0
    %s126 = scalar_select %p125, %s124, 0
    %s127 = ssub.s32 %s122, %s126
    %p128 = scmp.eq.s32.totalorder %s127, 0
    %s130 = sadd.s32 %s129, 1
    %s131 = scalar_select %p128, %s129, %s130
    %p134 = pneg %p128
    %p135 = scmp.eq.s32.totalorder %s17, 8
    %p136 = por %p134, %p135
    %p137 = scmp.ne.s32.totalorder %s129, %s132
    %p138 = scmp.eq.s32.totalorder %s17, 0
    %p139 = por %p137, %p138
    %p140 = scmp.ne.s32.totalorder %s129, %s132
    %p141 = scmp.eq.s32.totalorder %s22, 8
    %p142 = por %p140, %p141
    %p143 = scmp.ne.s32.totalorder %s132, %s133
    %p144 = scmp.eq.s32.totalorder %s22, 0
    %p145 = por %p143, %p144
    %p146 = scmp.ne.s32.totalorder %s132, %s133
    %p147 = scmp.eq.s32.totalorder %s23, 8
    %p148 = por %p146, %p147
    %p150 = scmp.ne.s32.totalorder %s133, %s149
    %p151 = scmp.eq.s32.totalorder %s23, 0
    %p152 = por %p150, %p151
    %s153 = ssub.s32 %s17, %s24
    %p154 = scmp.eq.s32.totalorder %s153, 0
    %s156 = sadd.s32 %s155, 1
    %s157 = scalar_select %p154, %s155, %s156
    %p160 = pneg %p154
    %p161 = scmp.eq.s32.totalorder %s17, 8
    %p162 = por %p160, %p161
    %p163 = scmp.ne.s32.totalorder %s155, %s158
    %p164 = scmp.eq.s32.totalorder %s17, 0
    %p165 = por %p163, %p164
    %p166 = scmp.ne.s32.totalorder %s155, %s158
    %p167 = scmp.eq.s32.totalorder %s22, 8
    %p168 = por %p166, %p167
    %p169 = scmp.ne.s32.totalorder %s158, %s159
    %p170 = scmp.eq.s32.totalorder %s22, 0
    %p171 = por %p169, %p170
    %p172 = scmp.ne.s32.totalorder %s158, %s159
    %p173 = scmp.eq.s32.totalorder %s23, 8
    %p174 = por %p172, %p173
    %p176 = scmp.ne.s32.totalorder %s159, %s175
    %p177 = scmp.eq.s32.totalorder %s23, 0
    %p178 = por %p176, %p177
    %s179 = sadd.s32 %s17, 1
    %s180 = smul.u32 %s179, 3
    %p181 = scmp.lt.s32.totalorder %s180, 26
    %s182 = scalar_select %p181, %s180, 26
    %s183 = sadd.s32 %s24, 1
    %s184 = smul.u32 %s183, 3
    %p185 = scmp.lt.s32.totalorder %s184, 26
    %s186 = scalar_select %p185, %s184, 26
    %s187 = ssub.s32 %s182, %s186
    %p188 = scmp.eq.s32.totalorder %s187, 0
    %s190 = sadd.s32 %s189, 1
    %s191 = scalar_select %p188, %s189, %s190
    %p194 = pneg %p188
    %p195 = scmp.eq.s32.totalorder %s17, 8
    %p196 = por %p194, %p195
    %p197 = scmp.ne.s32.totalorder %s189, %s192
    %p198 = scmp.eq.s32.totalorder %s17, 0
    %p199 = por %p197, %p198
    %p200 = scmp.ne.s32.totalorder %s189, %s192
    %p201 = scmp.eq.s32.totalorder %s22, 8
    %p202 = por %p200, %p201
    %p203 = scmp.ne.s32.totalorder %s192, %s193
    %p204 = scmp.eq.s32.totalorder %s22, 0
    %p205 = por %p203, %p204
    %p206 = scmp.ne.s32.totalorder %s192, %s193
    %p207 = scmp.eq.s32.totalorder %s23, 8
    %p208 = por %p206, %p207
    %p210 = scmp.ne.s32.totalorder %s193, %s209
    %p211 = scmp.eq.s32.totalorder %s23, 0
    %p212 = por %p210, %p211
    %s214 = sadd.s32 %s213, 1
    %p217 = scmp.eq.s32.totalorder %s17, 8
    %p218 = scmp.ne.s32.totalorder %s213, %s215
    %p219 = scmp.eq.s32.totalorder %s17, 0
    %p220 = por %p218, %p219
    %p221 = scmp.ne.s32.totalorder %s213, %s215
    %p222 = scmp.eq.s32.totalorder %s22, 8
    %p223 = por %p221, %p222
    %p224 = scmp.ne.s32.totalorder %s215, %s216
    %p225 = scmp.eq.s32.totalorder %s22, 0
    %p226 = por %p224, %p225
    %p227 = scmp.ne.s32.totalorder %s215, %s216
    %p228 = scmp.eq.s32.totalorder %s23, 8
    %p229 = por %p227, %p228
    %p231 = scmp.ne.s32.totalorder %s216, %s230
    %p232 = scmp.eq.s32.totalorder %s23, 0
    %p233 = por %p231, %p232
    %s235 = sadd.s32 %s234, 1
    %p238 = scmp.eq.s32.totalorder %s17, 8
    %p239 = scmp.ne.s32.totalorder %s234, %s236
    %p240 = scmp.eq.s32.totalorder %s17, 0
    %p241 = por %p239, %p240
    %p242 = scmp.ne.s32.totalorder %s234, %s236
    %p243 = scmp.eq.s32.totalorder %s22, 8
    %p244 = por %p242, %p243
    %p245 = scmp.ne.s32.totalorder %s236, %s237
    %p246 = scmp.eq.s32.totalorder %s22, 0
    %p247 = por %p245, %p246
    %p248 = scmp.ne.s32.totalorder %s236, %s237
    %p249 = scmp.eq.s32.totalorder %s23, 8
    %p250 = por %p248, %p249
    %p252 = scmp.ne.s32.totalorder %s237, %s251
    %p253 = scmp.eq.s32.totalorder %s23, 0
    %p254 = por %p252, %p253
    %s255 = ssub.s32 %s17, %s24
    %p256 = scmp.eq.s32.totalorder %s255, 0
    %s258 = sadd.s32 %s257, 1
    %s259 = scalar_select %p256, %s257, %s258
    %p262 = pneg %p256
    %p263 = scmp.eq.s32.totalorder %s17, 8
    %p264 = por %p262, %p263
    %p265 = scmp.ne.s32.totalorder %s257, %s260
    %p266 = scmp.eq.s32.totalorder %s17, 0
    %p267 = por %p265, %p266
    %p268 = scmp.ne.s32.totalorder %s257, %s260
    %p269 = scmp.eq.s32.totalorder %s22, 8
    %p270 = por %p268, %p269
    %p271 = scmp.ne.s32.totalorder %s260, %s261
    %p272 = scmp.eq.s32.totalorder %s22, 0
    %p273 = por %p271, %p272
    %p274 = scmp.ne.s32.totalorder %s260, %s261
    %p275 = scmp.eq.s32.totalorder %s23, 8
    %p276 = por %p274, %p275
    %p278 = scmp.ne.s32.totalorder %s261, %s277
    %p279 = scmp.eq.s32.totalorder %s23, 0
    %p280 = por %p278, %p279
    %s281 = ssub.s32 %s17, %s24
    %p282 = scmp.eq.s32.totalorder %s281, 0
    %s284 = sadd.s32 %s283, 1
    %s285 = scalar_select %p282, %s283, %s284
    %p288 = pneg %p282
    %p289 = scmp.eq.s32.totalorder %s17, 8
    %p290 = por %p288, %p289
    %p291 = scmp.ne.s32.totalorder %s283, %s286
    %p292 = scmp.eq.s32.totalorder %s17, 0
    %p293 = por %p291, %p292
    %p294 = scmp.ne.s32.totalorder %s283, %s286
    %p295 = scmp.eq.s32.totalorder %s22, 8
    %p296 = por %p294, %p295
    %p297 = scmp.ne.s32.totalorder %s286, %s287
    %p298 = scmp.eq.s32.totalorder %s22, 0
    %p299 = por %p297, %p298
    %p300 = scmp.ne.s32.totalorder %s286, %s287
    %p301 = scmp.eq.s32.totalorder %s23, 8
    %p302 = por %p300, %p301
    %p304 = scmp.ne.s32.totalorder %s287, %s303
    %p305 = scmp.eq.s32.totalorder %s23, 0
    %p306 = por %p304, %p305
    %s307 = ssub.s32 %s17, %s24
    %p308 = scmp.eq.s32.totalorder %s307, 0
    %s310 = sadd.s32 %s309, 1
    %s311 = scalar_select %p308, %s309, %s310
    %p314 = pneg %p308
    %p315 = scmp.eq.s32.totalorder %s17, 8
    %p316 = por %p314, %p315
    %p317 = scmp.ne.s32.totalorder %s309, %s312
    %p318 = scmp.eq.s32.totalorder %s17, 0
    %p319 = por %p317, %p318
    %p320 = scmp.ne.s32.totalorder %s309, %s312
    %p321 = scmp.eq.s32.totalorder %s22, 8
    %p322 = por %p320, %p321
    %p323 = scmp.ne.s32.totalorder %s312, %s313
    %p324 = scmp.eq.s32.totalorder %s22, 0
    %p325 = por %p323, %p324
    %p326 = scmp.ne.s32.totalorder %s312, %s313
    %p327 = scmp.eq.s32.totalorder %s23, 8
    %p328 = por %p326, %p327
    %p330 = scmp.ne.s32.totalorder %s313, %s329
    %p331 = scmp.eq.s32.totalorder %s23, 0
    %p332 = por %p330, %p331
    %p333 = scmp.le.s32.totalorder 1, %s17
    %p334 = scmp.lt.s32.totalorder %s17, 10
    %p335 = pnand %p333, %p334
    %p336 = pneg %p335
    // Predicated region
    $region9: #{conv_block_forward.4} parent=5 // pred_check
      _
    $region10: #{conv_block_forward.4} parent=5 // pred_check_branch
      %338 = sbr.rel (%p335) target = $region12
    $region11: #{conv_block_forward.4} parent=5 // pred_region
      %s339 = ssub.s32 %s17, 1
      // Predicated region
      $region13: #{conv_block_forward.4} parent=11 // pred_check
        %p340 = pneg %p226
      $region14: #{conv_block_forward.4} parent=11 // pred_check_branch
        %342 = sbr.rel (%p340) target = $region16
      $region15: #{conv_block_forward.4} parent=11 // pred_region
        _
      $region16: #{conv_block_forward.4} parent=11 // pred_fallthru
        _
      // Predicated region
      $region17: #{conv_block_forward.4} parent=11 // pred_check
        %p343 = pneg %p247
      $region18: #{conv_block_forward.4} parent=11 // pred_check_branch
        %345 = sbr.rel (%p343) target = $region20
      $region19: #{conv_block_forward.4} parent=11 // pred_region
        _
      $region20: #{conv_block_forward.4} parent=11 // pred_fallthru
        _
    $region12: #{conv_block_forward.4} parent=5 // pred_fallthru
      _
    %p346 = scmp.lt.s32.totalorder %s17, 9
    // Predicated region
    $region21: #{conv_block_forward.4} parent=5 // pred_check
      %p347 = pneg %p346
    $region22: #{conv_block_forward.4} parent=5 // pred_check_branch
      %349 = sbr.rel (%p347) target = $region24
    $region23: #{conv_block_forward.4} parent=5 // pred_region
      // Predicated region
      $region25: #{conv_block_forward.4} parent=23 // pred_check
        %p350 = pneg %p45
      $region26: #{conv_block_forward.4} parent=23 // pred_check_branch
        %352 = sbr.rel (%p350) target = $region28
      $region27: #{conv_block_forward.4} parent=23 // pred_region
        %s353 = smul.u32 %s17, 3
        %s354 = ssub.s32 %s353, 1
        %p355 = scmp.gt.s32.totalorder %s354, 0
        %s356 = scalar_select %p355, %s354, 0
        %s357 = smul.u32 3, %s356
        %p358 = scmp.lt.s32.totalorder %s357, 80
        %s359 = scalar_select %p358, %s357, 80
        %s360 = smul.addr %s359, 8
        %s361 = scalar_lea.vmem %s0, %s360
        %s362 = smul.u32 %s17, 3
        %s363 = ssub.s32 %s362, 1
        %p364 = scmp.gt.s32.totalorder %s363, 0
        %s365 = scalar_select %p364, %s363, 0
        %s366 = smul.u32 3, %s365
      $region28: #{conv_block_forward.4} parent=23 // pred_fallthru
        _
      // Predicated region
      $region29: #{conv_block_forward.4} parent=23 // pred_check
        %p367 = pneg %p71
      $region30: #{conv_block_forward.4} parent=23 // pred_check_branch
        %369 = sbr.rel (%p367) target = $region32
      $region31: #{conv_block_forward.4} parent=23 // pred_region
        %s370 = smul.u32 9, %s17
        %p371 = scmp.lt.s32.totalorder %s370, 80
        %s372 = scalar_select %p371, %s370, 80
        %s373 = smul.addr %s372, 8
        %s374 = scalar_lea.vmem %s1, %s373
        %s375 = smul.u32 9, %s17
      $region32: #{conv_block_forward.4} parent=23 // pred_fallthru
        _
      // Predicated region
      $region33: #{conv_block_forward.4} parent=23 // pred_check
        %p376 = pneg %p105
      $region34: #{conv_block_forward.4} parent=23 // pred_check_branch
        %378 = sbr.rel (%p376) target = $region36
      $region35: #{conv_block_forward.4} parent=23 // pred_region
        %s379 = sadd.s32 %s17, 1
        %s380 = smul.u32 %s379, 3
        %p381 = scmp.lt.s32.totalorder %s380, 26
        %s382 = scalar_select %p381, %s380, 26
        %s383 = smul.u32 3, %s382
        %p384 = scmp.lt.s32.totalorder %s383, 80
        %s385 = scalar_select %p384, %s383, 80
        %s386 = smul.addr %s385, 8
        %s387 = scalar_lea.vmem %s2, %s386
        %s388 = sadd.s32 %s17, 1
        %s389 = smul.u32 %s388, 3
        %p390 = scmp.lt.s32.totalorder %s389, 26
        %s391 = scalar_select %p390, %s389, 26
        %s392 = smul.u32 3, %s391
      $region36: #{conv_block_forward.4} parent=23 // pred_fallthru
        _
      // Predicated region
      $region37: #{conv_block_forward.4} parent=23 // pred_check
        %p393 = pneg %p139
      $region38: #{conv_block_forward.4} parent=23 // pred_check_branch
        %395 = sbr.rel (%p393) target = $region40
      $region39: #{conv_block_forward.4} parent=23 // pred_region
        %s396 = smul.u32 %s17, 3
        %s397 = ssub.s32 %s396, 1
        %p398 = scmp.gt.s32.totalorder %s397, 0
        %s399 = scalar_select %p398, %s397, 0
        %s400 = smul.u32 3, %s399
        %p401 = scmp.lt.s32.totalorder %s400, 80
        %s402 = scalar_select %p401, %s400, 80
        %s403 = smul.addr %s402, 8
        %s404 = scalar_lea.vmem %s3, %s403
        %s405 = smul.u32 %s17, 3
        %s406 = ssub.s32 %s405, 1
        %p407 = scmp.gt.s32.totalorder %s406, 0
        %s408 = scalar_select %p407, %s406, 0
        %s409 = smul.u32 3, %s408
      $region40: #{conv_block_forward.4} parent=23 // pred_fallthru
        _
      // Predicated region
      $region41: #{conv_block_forward.4} parent=23 // pred_check
        %p410 = pneg %p165
      $region42: #{conv_block_forward.4} parent=23 // pred_check_branch
        %412 = sbr.rel (%p410) target = $region44
      $region43: #{conv_block_forward.4} parent=23 // pred_region
        %s413 = smul.u32 9, %s17
        %p414 = scmp.lt.s32.totalorder %s413, 80
        %s415 = scalar_select %p414, %s413, 80
        %s416 = smul.addr %s415, 8
        %s417 = scalar_lea.vmem %s4, %s416
        %s418 = smul.u32 9, %s17
      $region44: #{conv_block_forward.4} parent=23 // pred_fallthru
        _
      // Predicated region
      $region45: #{conv_block_forward.4} parent=23 // pred_check
        %p419 = pneg %p199
      $region46: #{conv_block_forward.4} parent=23 // pred_check_branch
        %421 = sbr.rel (%p419) target = $region48
      $region47: #{conv_block_forward.4} parent=23 // pred_region
        %s422 = sadd.s32 %s17, 1
        %s423 = smul.u32 %s422, 3
        %p424 = scmp.lt.s32.totalorder %s423, 26
        %s425 = scalar_select %p424, %s423, 26
        %s426 = smul.u32 3, %s425
        %p427 = scmp.lt.s32.totalorder %s426, 80
        %s428 = scalar_select %p427, %s426, 80
        %s429 = smul.addr %s428, 8
        %s430 = scalar_lea.vmem %s5, %s429
        %s431 = sadd.s32 %s17, 1
        %s432 = smul.u32 %s431, 3
        %p433 = scmp.lt.s32.totalorder %s432, 26
        %s434 = scalar_select %p433, %s432, 26
        %s435 = smul.u32 3, %s434
      $region48: #{conv_block_forward.4} parent=23 // pred_fallthru
        _
    $region24: #{conv_block_forward.4} parent=5 // pred_fallthru
      _
    %p436 = scmp.le.s32.totalorder 1, %s17
    %p437 = scmp.lt.s32.totalorder %s17, 10
    %p438 = pnand %p436, %p437
    %p439 = pneg %p438
    // Predicated region
    $region49: #{conv_block_forward.4} parent=5 // pred_check
      _
    $region50: #{conv_block_forward.4} parent=5 // pred_check_branch
      %441 = sbr.rel (%p438) target = $region52
    $region51: #{conv_block_forward.4} parent=5 // pred_region
      %s442 = ssub.s32 %s17, 1
      %s443 = smul.u32 %s22, 3
      %s444 = ssub.s32 %s443, 1
      %p445 = scmp.gt.s32.totalorder %s444, 0
      %s446 = scalar_select %p445, %s444, 0
      %s447 = smul.u32 3, %s446
      %p448 = scmp.lt.s32.totalorder %s447, 80
      %s449 = scalar_select %p448, %s447, 80
      %s450 = smul.addr %s449, 8
      %s451 = scalar_lea.vmem %s0, %s450
      %p452 = pneg %p51
      %p453 = pneg %p48
      %s454 = smul.u32 9, %s22
      %p455 = scmp.lt.s32.totalorder %s454, 80
      %s456 = scalar_select %p455, %s454, 80
      %s457 = smul.addr %s456, 8
      %s458 = scalar_lea.vmem %s1, %s457
      %p459 = pneg %p77
      %p460 = pneg %p74
      %s461 = sadd.s32 %s22, 1
      %s462 = smul.u32 %s461, 3
      %p463 = scmp.lt.s32.totalorder %s462, 26
      %s464 = scalar_select %p463, %s462, 26
      %s465 = smul.u32 3, %s464
      %p466 = scmp.lt.s32.totalorder %s465, 80
      %s467 = scalar_select %p466, %s465, 80
      %s468 = smul.addr %s467, 8
      %s469 = scalar_lea.vmem %s2, %s468
      %p470 = pneg %p111
      %p471 = pneg %p108
      %s472 = smul.u32 %s22, 3
      %s473 = ssub.s32 %s472, 1
      %p474 = scmp.gt.s32.totalorder %s473, 0
      %s475 = scalar_select %p474, %s473, 0
      %s476 = smul.u32 3, %s475
      %p477 = scmp.lt.s32.totalorder %s476, 80
      %s478 = scalar_select %p477, %s476, 80
      %s479 = smul.addr %s478, 8
      %s480 = scalar_lea.vmem %s3, %s479
      %p481 = pneg %p145
      %p482 = pneg %p142
      %s483 = smul.u32 9, %s22
      %p484 = scmp.lt.s32.totalorder %s483, 80
      %s485 = scalar_select %p484, %s483, 80
      %s486 = smul.addr %s485, 8
      %s487 = scalar_lea.vmem %s4, %s486
      %p488 = pneg %p171
      %p489 = pneg %p168
      %s490 = sadd.s32 %s22, 1
      %s491 = smul.u32 %s490, 3
      %p492 = scmp.lt.s32.totalorder %s491, 26
      %s493 = scalar_select %p492, %s491, 26
      %s494 = smul.u32 3, %s493
      %p495 = scmp.lt.s32.totalorder %s494, 80
      %s496 = scalar_select %p495, %s494, 80
      %s497 = smul.addr %s496, 8
      %s498 = scalar_lea.vmem %s5, %s497
      %p499 = pneg %p205
      %p500 = pneg %p202
      %p501 = pneg %p226
      %p502 = pneg %p223
      %p503 = pneg %p247
      %p504 = pneg %p244
      %p505 = pneg %p273
      %p506 = pneg %p270
      %s507 = smul.u32 9, %s22
      %p508 = scmp.lt.s32.totalorder %s507, 80
      %s509 = scalar_select %p508, %s507, 80
      %s510 = smul.addr %s509, 8
      %s511 = scalar_lea.vmem %s8, %s510
      %p512 = pneg %p299
      %p513 = pneg %p296
      %p514 = scmp.lt.s32.totalorder %s22, 8
      %s515 = scalar_select %p514, %s22, 8
      %s516 = scalar_lea.vmem %s9, %s515
      %p517 = pneg %p325
      %p518 = pneg %p322
      %p519 = scmp.lt.s32.totalorder %s22, 8
      %s520 = scalar_select %p519, %s22, 8
      %s521 = scalar_lea.vmem %s10, %s520
      %s522 = smul.u32 %s22, 3
      %s523 = ssub.s32 %s522, 1
      %p524 = scmp.gt.s32.totalorder %s523, 0
      %s525 = scalar_select %p524, %s523, 0
      %s526 = smul.u32 3, %s525
      %p527 = scmp.lt.s32.totalorder %s526, 80
      %s528 = scalar_select %p527, %s526, 80
      %s529 = smul.addr %s528, 8
      %s530 = scalar_lea.vmem %s0, %s529
      %s531 = smul.u32 %s22, 3
      %s532 = ssub.s32 %s531, 1
      %p533 = scmp.gt.s32.totalorder %s532, 0
      %s534 = scalar_select %p533, %s532, 0
      %s535 = smul.u32 3, %s534
      %s536 = smul.u32 9, %s22
      %p537 = scmp.lt.s32.totalorder %s536, 80
      %s538 = scalar_select %p537, %s536, 80
      %s539 = smul.addr %s538, 8
      %s540 = scalar_lea.vmem %s1, %s539
      %s541 = smul.u32 9, %s22
      %s542 = sadd.s32 %s22, 1
      %s543 = smul.u32 %s542, 3
      %p544 = scmp.lt.s32.totalorder %s543, 26
      %s545 = scalar_select %p544, %s543, 26
      %s546 = smul.u32 3, %s545
      %p547 = scmp.lt.s32.totalorder %s546, 80
      %s548 = scalar_select %p547, %s546, 80
      %s549 = smul.addr %s548, 8
      %s550 = scalar_lea.vmem %s2, %s549
      %s551 = sadd.s32 %s22, 1
      %s552 = smul.u32 %s551, 3
      %p553 = scmp.lt.s32.totalorder %s552, 26
      %s554 = scalar_select %p553, %s552, 26
      %s555 = smul.u32 3, %s554
      %s556 = smul.u32 %s22, 3
      %s557 = ssub.s32 %s556, 1
      %p558 = scmp.gt.s32.totalorder %s557, 0
      %s559 = scalar_select %p558, %s557, 0
      %s560 = smul.u32 3, %s559
      %p561 = scmp.lt.s32.totalorder %s560, 80
      %s562 = scalar_select %p561, %s560, 80
      %s563 = smul.addr %s562, 8
      %s564 = scalar_lea.vmem %s3, %s563
      %s565 = smul.u32 %s22, 3
      %s566 = ssub.s32 %s565, 1
      %p567 = scmp.gt.s32.totalorder %s566, 0
      %s568 = scalar_select %p567, %s566, 0
      %s569 = smul.u32 3, %s568
      %s570 = smul.u32 9, %s22
      %p571 = scmp.lt.s32.totalorder %s570, 80
      %s572 = scalar_select %p571, %s570, 80
      %s573 = smul.addr %s572, 8
      %s574 = scalar_lea.vmem %s4, %s573
      %s575 = smul.u32 9, %s22
      %s576 = sadd.s32 %s22, 1
      %s577 = smul.u32 %s576, 3
      %p578 = scmp.lt.s32.totalorder %s577, 26
      %s579 = scalar_select %p578, %s577, 26
      %s580 = smul.u32 3, %s579
      %p581 = scmp.lt.s32.totalorder %s580, 80
      %s582 = scalar_select %p581, %s580, 80
      %s583 = smul.addr %s582, 8
      %s584 = scalar_lea.vmem %s5, %s583
      %s585 = sadd.s32 %s22, 1
      %s586 = smul.u32 %s585, 3
      %p587 = scmp.lt.s32.totalorder %s586, 26
      %s588 = scalar_select %p587, %s586, 26
      %s589 = smul.u32 3, %s588
      %s590 = smul.u32 9, %s22
      %p591 = scmp.lt.s32.totalorder %s590, 80
      %s592 = scalar_select %p591, %s590, 80
      %s593 = smul.addr %s592, 8
      %s594 = scalar_lea.vmem %s8, %s593
      %s595 = smul.u32 9, %s22
      %p596 = scmp.lt.s32.totalorder %s22, 8
      %s597 = scalar_select %p596, %s22, 8
      %s598 = scalar_lea.vmem %s9, %s597
      %p599 = scmp.lt.s32.totalorder %s22, 8
      %s600 = scalar_select %p599, %s22, 8
      %s601 = scalar_lea.vmem %s10, %s600
      %v602 = vld [vmem:[%s6] sm:$0x1]
      %v603 = vld [vmem:[%s6 + $0x1] sm:$0x1]
      %v604 = vld [vmem:[%s530] sm:$0xff]
      %v605 = vld [vmem:[%s530 + $0x8] sm:$0xff]
      %v606 = vld [vmem:[%s530 + $0x10] sm:$0xff]
      %v607 = vlaneseq
      %v608 = vshrl.u32 %v607, 7
      %v609 = vsub.s32 0, %v608
      %v610 = vrot.slane %v602, %v609
      %v611 = vmul.f32 %v604, %v610
      %v612 = vmul.f32 %v605, %v610
      %v613 = vmul.f32 %v606, %v610
      %v614 = vlaneseq
      %v615 = vshrl.u32 %v614, 7
      %v616 = vsub.s32 0, %v615
      %v617 = vrot.slane %v603, %v616
      %v618 = vadd.f32 %v611, %v617
      %v619 = vadd.f32 %v612, %v617
      %v620 = vadd.f32 %v613, %v617
      %v621 = vmax.f32 %v618, 0.0
      %v622 = vmax.f32 %v619, 0.0
      %v623 = vmax.f32 %v620, 0.0
      %v624 = vld [vmem:[%s564] sm:$0xff]
      %v625 = vld [vmem:[%s564 + $0x8] sm:$0xff]
      %v626 = vld [vmem:[%s564 + $0x10] sm:$0xff]
      %628 = vset.pattern.permute.xlu0 0
      %629 = vperm.xlu0 %628, %v624
      %v630 = vpop.permute.xlu0 %629
      %633 = vset.pattern.permute.xlu0 0
      %634 = vperm.xlu0 %633, %v625
      %v635 = vpop.permute.xlu0 %634
      %638 = vset.pattern.permute.xlu0 0
      %639 = vperm.xlu0 %638, %v626
      %v640 = vpop.permute.xlu0 %639
      %v642 = vmul.f32 %v621, %v630
      %v643 = vmul.f32 %v622, %v635
      %v644 = vmul.f32 %v623, %v640
      %645 = vst [vmem:[#allocation2] sm:$0xff] %v642
      %646 = vst [vmem:[#allocation2 + $0x8] sm:$0xff] %v643
      %647 = vst [vmem:[#allocation2 + $0x10] sm:$0xff] %v644
      %v648 = vld [vmem:[%s540] sm:$0xff]
      %v649 = vld [vmem:[%s540 + $0x8] sm:$0xff]
      %v650 = vld [vmem:[%s540 + $0x10] sm:$0xff]
      %v651 = vld [vmem:[%s540 + $0x18] sm:$0xff]
      %v652 = vld [vmem:[%s540 + $0x20] sm:$0xff]
      %v653 = vld [vmem:[%s540 + $0x28] sm:$0xff]
      %v654 = vld [vmem:[%s540 + $0x30] sm:$0xff]
      %v655 = vld [vmem:[%s540 + $0x38] sm:$0xff]
      %v656 = vld [vmem:[%s540 + $0x40] sm:$0xff]
      %v657 = vmul.f32 %v648, %v610
      %v658 = vmul.f32 %v649, %v610
      %v659 = vmul.f32 %v650, %v610
      %v660 = vmul.f32 %v651, %v610
      %v661 = vmul.f32 %v652, %v610
      %v662 = vmul.f32 %v653, %v610
      %v663 = vmul.f32 %v654, %v610
      %v664 = vmul.f32 %v655, %v610
      %v665 = vmul.f32 %v656, %v610
      %v666 = vadd.f32 %v657, %v617
      %v667 = vadd.f32 %v658, %v617
      %v668 = vadd.f32 %v659, %v617
      %v669 = vadd.f32 %v660, %v617
      %v670 = vadd.f32 %v661, %v617
      %v671 = vadd.f32 %v662, %v617
      %v672 = vadd.f32 %v663, %v617
      %v673 = vadd.f32 %v664, %v617
      %v674 = vadd.f32 %v665, %v617
      %v675 = vmax.f32 %v666, 0.0
      %v676 = vmax.f32 %v667, 0.0
      %v677 = vmax.f32 %v668, 0.0
      %v678 = vmax.f32 %v669, 0.0
      %v679 = vmax.f32 %v670, 0.0
      %v680 = vmax.f32 %v671, 0.0
      %v681 = vmax.f32 %v672, 0.0
      %v682 = vmax.f32 %v673, 0.0
      %v683 = vmax.f32 %v674, 0.0
      %v684 = vld [vmem:[%s574] sm:$0xff]
      %v685 = vld [vmem:[%s574 + $0x8] sm:$0xff]
      %v686 = vld [vmem:[%s574 + $0x10] sm:$0xff]
      %v687 = vld [vmem:[%s574 + $0x18] sm:$0xff]
      %v688 = vld [vmem:[%s574 + $0x20] sm:$0xff]
      %v689 = vld [vmem:[%s574 + $0x28] sm:$0xff]
      %v690 = vld [vmem:[%s574 + $0x30] sm:$0xff]
      %v691 = vld [vmem:[%s574 + $0x38] sm:$0xff]
      %v692 = vld [vmem:[%s574 + $0x40] sm:$0xff]
      %694 = vset.pattern.permute.xlu0 0
      %695 = vperm.xlu0 %694, %v684
      %v696 = vpop.permute.xlu0 %695
      %699 = vset.pattern.permute.xlu0 0
      %700 = vperm.xlu0 %699, %v685
      %v701 = vpop.permute.xlu0 %700
      %704 = vset.pattern.permute.xlu0 0
      %705 = vperm.xlu0 %704, %v686
      %v706 = vpop.permute.xlu0 %705
      %709 = vset.pattern.permute.xlu0 0
      %710 = vperm.xlu0 %709, %v687
      %v711 = vpop.permute.xlu0 %710
      %714 = vset.pattern.permute.xlu0 0
      %715 = vperm.xlu0 %714, %v688
      %v716 = vpop.permute.xlu0 %715
      %719 = vset.pattern.permute.xlu0 0
      %720 = vperm.xlu0 %719, %v689
      %v721 = vpop.permute.xlu0 %720
      %724 = vset.pattern.permute.xlu0 0
      %725 = vperm.xlu0 %724, %v690
      %v726 = vpop.permute.xlu0 %725
      %729 = vset.pattern.permute.xlu0 0
      %730 = vperm.xlu0 %729, %v691
      %v731 = vpop.permute.xlu0 %730
      %734 = vset.pattern.permute.xlu0 0
      %735 = vperm.xlu0 %734, %v692
      %v736 = vpop.permute.xlu0 %735
      %v738 = vmul.f32 %v675, %v696
      %v739 = vmul.f32 %v676, %v701
      %v740 = vmul.f32 %v677, %v706
      %v741 = vmul.f32 %v678, %v711
      %v742 = vmul.f32 %v679, %v716
      %v743 = vmul.f32 %v680, %v721
      %v744 = vmul.f32 %v681, %v726
      %v745 = vmul.f32 %v682, %v731
      %v746 = vmul.f32 %v683, %v736
      %747 = vst [vmem:[#allocation2 + $0x18] sm:$0xff] %v738
      %748 = vst [vmem:[#allocation2 + $0x20] sm:$0xff] %v739
      %749 = vst [vmem:[#allocation2 + $0x28] sm:$0xff] %v740
      %750 = vst [vmem:[#allocation2 + $0x30] sm:$0xff] %v741
      %751 = vst [vmem:[#allocation2 + $0x38] sm:$0xff] %v742
      %752 = vst [vmem:[#allocation2 + $0x40] sm:$0xff] %v743
      %753 = vst [vmem:[#allocation2 + $0x48] sm:$0xff] %v744
      %754 = vst [vmem:[#allocation2 + $0x50] sm:$0xff] %v745
      %755 = vst [vmem:[#allocation2 + $0x58] sm:$0xff] %v746
      %v756 = vld [vmem:[%s550] sm:$0xff]
      %v757 = vld [vmem:[%s550 + $0x8] sm:$0xff]
      %v758 = vld [vmem:[%s550 + $0x10] sm:$0xff]
      %v759 = vmul.f32 %v756, %v610
      %v760 = vmul.f32 %v757, %v610
      %v761 = vmul.f32 %v758, %v610
      %v762 = vadd.f32 %v759, %v617
      %v763 = vadd.f32 %v760, %v617
      %v764 = vadd.f32 %v761, %v617
      %v765 = vmax.f32 %v762, 0.0
      %v766 = vmax.f32 %v763, 0.0
      %v767 = vmax.f32 %v764, 0.0
      %v768 = vld [vmem:[%s584] sm:$0xff]
      %v769 = vld [vmem:[%s584 + $0x8] sm:$0xff]
      %v770 = vld [vmem:[%s584 + $0x10] sm:$0xff]
      %772 = vset.pattern.permute.xlu0 0
      %773 = vperm.xlu0 %772, %v768
      %v774 = vpop.permute.xlu0 %773
      %777 = vset.pattern.permute.xlu0 0
      %778 = vperm.xlu0 %777, %v769
      %v779 = vpop.permute.xlu0 %778
      %782 = vset.pattern.permute.xlu0 0
      %783 = vperm.xlu0 %782, %v770
      %v784 = vpop.permute.xlu0 %783
      %v786 = vmul.f32 %v765, %v774
      %v787 = vmul.f32 %v766, %v779
      %v788 = vmul.f32 %v767, %v784
      %789 = vst [vmem:[#allocation2 + $0x60] sm:$0xff] %v786
      %790 = vst [vmem:[#allocation2 + $0x68] sm:$0xff] %v787
      %791 = vst [vmem:[#allocation2 + $0x70] sm:$0xff] %v788
      %v792 = vld [vmem:[#allocation2 + $0x5] sm:$0xff]
      %v793 = vld [vmem:[#allocation2 + $0xd] sm:$0xff]
      %v794 = vld [vmem:[#allocation2 + $0x15] sm:$0xff]
      %v795 = vld [vmem:[#allocation2 + $0x1d] sm:$0xff]
      %v796 = vld [vmem:[#allocation2 + $0x25] sm:$0xff]
      %v797 = vld [vmem:[#allocation2 + $0x2d] sm:$0xff]
      %v798 = vld [vmem:[#allocation2 + $0x35] sm:$0xff]
      %v799 = vld [vmem:[#allocation2 + $0x3d] sm:$0xff]
      %v800 = vld [vmem:[#allocation2 + $0x45] sm:$0xff]
      %801 = vst [vmem:[#allocation3] sm:$0xff] %v792
      %802 = vst [vmem:[#allocation3 + $0x48] sm:$0xff] %v793
      %803 = vst [vmem:[#allocation3 + $0x90] sm:$0xff] %v794
      %804 = vst [vmem:[#allocation3 + $0xd8] sm:$0xff] %v795
      %805 = vst [vmem:[#allocation3 + $0x120] sm:$0xff] %v796
      %806 = vst [vmem:[#allocation3 + $0x168] sm:$0xff] %v797
      %807 = vst [vmem:[#allocation3 + $0x1b0] sm:$0xff] %v798
      %808 = vst [vmem:[#allocation3 + $0x1f8] sm:$0xff] %v799
      %809 = vst [vmem:[#allocation3 + $0x240] sm:$0xff] %v800
      %v810 = vld [vmem:[#allocation2 + $0x6] sm:$0xff]
      %v811 = vld [vmem:[#allocation2 + $0xe] sm:$0xff]
      %v812 = vld [vmem:[#allocation2 + $0x16] sm:$0xff]
      %v813 = vld [vmem:[#allocation2 + $0x1e] sm:$0xff]
      %v814 = vld [vmem:[#allocation2 + $0x26] sm:$0xff]
      %v815 = vld [vmem:[#allocation2 + $0x2e] sm:$0xff]
      %v816 = vld [vmem:[#allocation2 + $0x36] sm:$0xff]
      %v817 = vld [vmem:[#allocation2 + $0x3e] sm:$0xff]
      %v818 = vld [vmem:[#allocation2 + $0x46] sm:$0xff]
      %819 = vst [vmem:[#allocation3 + $0x8] sm:$0xff] %v810
      %820 = vst [vmem:[#allocation3 + $0x50] sm:$0xff] %v811
      %821 = vst [vmem:[#allocation3 + $0x98] sm:$0xff] %v812
      %822 = vst [vmem:[#allocation3 + $0xe0] sm:$0xff] %v813
      %823 = vst [vmem:[#allocation3 + $0x128] sm:$0xff] %v814
      %824 = vst [vmem:[#allocation3 + $0x170] sm:$0xff] %v815
      %825 = vst [vmem:[#allocation3 + $0x1b8] sm:$0xff] %v816
      %826 = vst [vmem:[#allocation3 + $0x200] sm:$0xff] %v817
      %827 = vst [vmem:[#allocation3 + $0x248] sm:$0xff] %v818
      %v828 = vld [vmem:[#allocation2 + $0x7] sm:$0xff]
      %v829 = vld [vmem:[#allocation2 + $0xf] sm:$0xff]
      %v830 = vld [vmem:[#allocation2 + $0x17] sm:$0xff]
      %v831 = vld [vmem:[#allocation2 + $0x1f] sm:$0xff]
      %v832 = vld [vmem:[#allocation2 + $0x27] sm:$0xff]
      %v833 = vld [vmem:[#allocation2 + $0x2f] sm:$0xff]
      %v834 = vld [vmem:[#allocation2 + $0x37] sm:$0xff]
      %v835 = vld [vmem:[#allocation2 + $0x3f] sm:$0xff]
      %v836 = vld [vmem:[#allocation2 + $0x47] sm:$0xff]
      %837 = vst [vmem:[#allocation3 + $0x10] sm:$0xff] %v828
      %838 = vst [vmem:[#allocation3 + $0x58] sm:$0xff] %v829
      %839 = vst [vmem:[#allocation3 + $0xa0] sm:$0xff] %v830
      %840 = vst [vmem:[#allocation3 + $0xe8] sm:$0xff] %v831
      %841 = vst [vmem:[#allocation3 + $0x130] sm:$0xff] %v832
      %842 = vst [vmem:[#allocation3 + $0x178] sm:$0xff] %v833
      %843 = vst [vmem:[#allocation3 + $0x1c0] sm:$0xff] %v834
      %844 = vst [vmem:[#allocation3 + $0x208] sm:$0xff] %v835
      %845 = vst [vmem:[#allocation3 + $0x250] sm:$0xff] %v836
      %v846 = vld [vmem:[#allocation2 + $0x17] sm:$0xff]
      %v847 = vld [vmem:[#allocation2 + $0x1f] sm:$0xff]
      %v848 = vld [vmem:[#allocation2 + $0x27] sm:$0xff]
      %v849 = vld [vmem:[#allocation2 + $0x2f] sm:$0xff]
      %v850 = vld [vmem:[#allocation2 + $0x37] sm:$0xff]
      %v851 = vld [vmem:[#allocation2 + $0x3f] sm:$0xff]
      %v852 = vld [vmem:[#allocation2 + $0x47] sm:$0xff]
      %v853 = vld [vmem:[#allocation2 + $0x4f] sm:$0xff]
      %v854 = vld [vmem:[#allocation2 + $0x57] sm:$0xff]
      %855 = vst [vmem:[#allocation3 + $0x18] sm:$0xff] %v846
      %856 = vst [vmem:[#allocation3 + $0x60] sm:$0xff] %v847
      %857 = vst [vmem:[#allocation3 + $0xa8] sm:$0xff] %v848
      %858 = vst [vmem:[#allocation3 + $0xf0] sm:$0xff] %v849
      %859 = vst [vmem:[#allocation3 + $0x138] sm:$0xff] %v850
      %860 = vst [vmem:[#allocation3 + $0x180] sm:$0xff] %v851
      %861 = vst [vmem:[#allocation3 + $0x1c8] sm:$0xff] %v852
      %862 = vst [vmem:[#allocation3 + $0x210] sm:$0xff] %v853
      %863 = vst [vmem:[#allocation3 + $0x258] sm:$0xff] %v854
      %v864 = vld [vmem:[#allocation2 + $0x18] sm:$0xff]
      %v865 = vld [vmem:[#allocation2 + $0x20] sm:$0xff]
      %v866 = vld [vmem:[#allocation2 + $0x28] sm:$0xff]
      %v867 = vld [vmem:[#allocation2 + $0x30] sm:$0xff]
      %v868 = vld [vmem:[#allocation2 + $0x38] sm:$0xff]
      %v869 = vld [vmem:[#allocation2 + $0x40] sm:$0xff]
      %v870 = vld [vmem:[#allocation2 + $0x48] sm:$0xff]
      %v871 = vld [vmem:[#allocation2 + $0x50] sm:$0xff]
      %v872 = vld [vmem:[#allocation2 + $0x58] sm:$0xff]
      %873 = vst [vmem:[#allocation3 + $0x20] sm:$0xff] %v864
      %874 = vst [vmem:[#allocation3 + $0x68] sm:$0xff] %v865
      %875 = vst [vmem:[#allocation3 + $0xb0] sm:$0xff] %v866
      %876 = vst [vmem:[#allocation3 + $0xf8] sm:$0xff] %v867
      %877 = vst [vmem:[#allocation3 + $0x140] sm:$0xff] %v868
      %878 = vst [vmem:[#allocation3 + $0x188] sm:$0xff] %v869
      %879 = vst [vmem:[#allocation3 + $0x1d0] sm:$0xff] %v870
      %880 = vst [vmem:[#allocation3 + $0x218] sm:$0xff] %v871
      %881 = vst [vmem:[#allocation3 + $0x260] sm:$0xff] %v872
      %v882 = vld [vmem:[#allocation2 + $0x19] sm:$0xff]
      %v883 = vld [vmem:[#allocation2 + $0x21] sm:$0xff]
      %v884 = vld [vmem:[#allocation2 + $0x29] sm:$0xff]
      %v885 = vld [vmem:[#allocation2 + $0x31] sm:$0xff]
      %v886 = vld [vmem:[#allocation2 + $0x39] sm:$0xff]
      %v887 = vld [vmem:[#allocation2 + $0x41] sm:$0xff]
      %v888 = vld [vmem:[#allocation2 + $0x49] sm:$0xff]
      %v889 = vld [vmem:[#allocation2 + $0x51] sm:$0xff]
      %v890 = vld [vmem:[#allocation2 + $0x59] sm:$0xff]
      %891 = vst [vmem:[#allocation3 + $0x28] sm:$0xff] %v882
      %892 = vst [vmem:[#allocation3 + $0x70] sm:$0xff] %v883
      %893 = vst [vmem:[#allocation3 + $0xb8] sm:$0xff] %v884
      %894 = vst [vmem:[#allocation3 + $0x100] sm:$0xff] %v885
      %895 = vst [vmem:[#allocation3 + $0x148] sm:$0xff] %v886
      %896 = vst [vmem:[#allocation3 + $0x190] sm:$0xff] %v887
      %897 = vst [vmem:[#allocation3 + $0x1d8] sm:$0xff] %v888
      %898 = vst [vmem:[#allocation3 + $0x220] sm:$0xff] %v889
      %899 = vst [vmem:[#allocation3 + $0x268] sm:$0xff] %v890
      %v900 = vld [vmem:[#allocation2 + $0x29] sm:$0xff]
      %v901 = vld [vmem:[#allocation2 + $0x31] sm:$0xff]
      %v902 = vld [vmem:[#allocation2 + $0x39] sm:$0xff]
      %v903 = vld [vmem:[#allocation2 + $0x41] sm:$0xff]
      %v904 = vld [vmem:[#allocation2 + $0x49] sm:$0xff]
      %v905 = vld [vmem:[#allocation2 + $0x51] sm:$0xff]
      %v906 = vld [vmem:[#allocation2 + $0x59] sm:$0xff]
      %v907 = vld [vmem:[#allocation2 + $0x61] sm:$0xff]
      %v908 = vld [vmem:[#allocation2 + $0x69] sm:$0xff]
      %909 = vst [vmem:[#allocation3 + $0x30] sm:$0xff] %v900
      %910 = vst [vmem:[#allocation3 + $0x78] sm:$0xff] %v901
      %911 = vst [vmem:[#allocation3 + $0xc0] sm:$0xff] %v902
      %912 = vst [vmem:[#allocation3 + $0x108] sm:$0xff] %v903
      %913 = vst [vmem:[#allocation3 + $0x150] sm:$0xff] %v904
      %914 = vst [vmem:[#allocation3 + $0x198] sm:$0xff] %v905
      %915 = vst [vmem:[#allocation3 + $0x1e0] sm:$0xff] %v906
      %916 = vst [vmem:[#allocation3 + $0x228] sm:$0xff] %v907
      %917 = vst [vmem:[#allocation3 + $0x270] sm:$0xff] %v908
      %v918 = vld [vmem:[#allocation2 + $0x2a] sm:$0xff]
      %v919 = vld [vmem:[#allocation2 + $0x32] sm:$0xff]
      %v920 = vld [vmem:[#allocation2 + $0x3a] sm:$0xff]
      %v921 = vld [vmem:[#allocation2 + $0x42] sm:$0xff]
      %v922 = vld [vmem:[#allocation2 + $0x4a] sm:$0xff]
      %v923 = vld [vmem:[#allocation2 + $0x52] sm:$0xff]
      %v924 = vld [vmem:[#allocation2 + $0x5a] sm:$0xff]
      %v925 = vld [vmem:[#allocation2 + $0x62] sm:$0xff]
      %v926 = vld [vmem:[#allocation2 + $0x6a] sm:$0xff]
      %927 = vst [vmem:[#allocation3 + $0x38] sm:$0xff] %v918
      %928 = vst [vmem:[#allocation3 + $0x80] sm:$0xff] %v919
      %929 = vst [vmem:[#allocation3 + $0xc8] sm:$0xff] %v920
      %930 = vst [vmem:[#allocation3 + $0x110] sm:$0xff] %v921
      %931 = vst [vmem:[#allocation3 + $0x158] sm:$0xff] %v922
      %932 = vst [vmem:[#allocation3 + $0x1a0] sm:$0xff] %v923
      %933 = vst [vmem:[#allocation3 + $0x1e8] sm:$0xff] %v924
      %934 = vst [vmem:[#allocation3 + $0x230] sm:$0xff] %v925
      %935 = vst [vmem:[#allocation3 + $0x278] sm:$0xff] %v926
      %v936 = vld [vmem:[#allocation2 + $0x2b] sm:$0xff]
      %v937 = vld [vmem:[#allocation2 + $0x33] sm:$0xff]
      %v938 = vld [vmem:[#allocation2 + $0x3b] sm:$0xff]
      %v939 = vld [vmem:[#allocation2 + $0x43] sm:$0xff]
      %v940 = vld [vmem:[#allocation2 + $0x4b] sm:$0xff]
      %v941 = vld [vmem:[#allocation2 + $0x53] sm:$0xff]
      %v942 = vld [vmem:[#allocation2 + $0x5b] sm:$0xff]
      %v943 = vld [vmem:[#allocation2 + $0x63] sm:$0xff]
      %v944 = vld [vmem:[#allocation2 + $0x6b] sm:$0xff]
      %945 = vst [vmem:[#allocation3 + $0x40] sm:$0xff] %v936
      %946 = vst [vmem:[#allocation3 + $0x88] sm:$0xff] %v937
      %947 = vst [vmem:[#allocation3 + $0xd0] sm:$0xff] %v938
      %948 = vst [vmem:[#allocation3 + $0x118] sm:$0xff] %v939
      %949 = vst [vmem:[#allocation3 + $0x160] sm:$0xff] %v940
      %950 = vst [vmem:[#allocation3 + $0x1a8] sm:$0xff] %v941
      %951 = vst [vmem:[#allocation3 + $0x1f0] sm:$0xff] %v942
      %952 = vst [vmem:[#allocation3 + $0x238] sm:$0xff] %v943
      %953 = vst [vmem:[#allocation3 + $0x280] sm:$0xff] %v944
      %v954 = vld [vmem:[#allocation3] sm:$0xff]
      %v955 = vld [vmem:[#allocation3 + $0x8] sm:$0xff]
      %v956 = vld [vmem:[#allocation3 + $0x10] sm:$0xff]
      %v957 = vld [vmem:[#allocation3 + $0x18] sm:$0xff]
      %v958 = vld [vmem:[#allocation3 + $0x20] sm:$0xff]
      %v959 = vld [vmem:[#allocation3 + $0x28] sm:$0xff]
      %v960 = vld [vmem:[#allocation3 + $0x30] sm:$0xff]
      %v961 = vld [vmem:[#allocation3 + $0x38] sm:$0xff]
      %v962 = vld [vmem:[#allocation3 + $0x40] sm:$0xff]
      %v963 = vld [vmem:[#allocation3 + $0x48] sm:$0xff]
      %v964 = vld [vmem:[#allocation3 + $0x50] sm:$0xff]
      %v965 = vld [vmem:[#allocation3 + $0x58] sm:$0xff]
      %v966 = vld [vmem:[#allocation3 + $0x60] sm:$0xff]
      %v967 = vld [vmem:[#allocation3 + $0x68] sm:$0xff]
      %v968 = vld [vmem:[#allocation3 + $0x70] sm:$0xff]
      %v969 = vld [vmem:[#allocation3 + $0x78] sm:$0xff]
      %v970 = vld [vmem:[#allocation3 + $0x80] sm:$0xff]
      %v971 = vld [vmem:[#allocation3 + $0x88] sm:$0xff]
      %v972 = vld [vmem:[#allocation3 + $0x90] sm:$0xff]
      %v973 = vld [vmem:[#allocation3 + $0x98] sm:$0xff]
      %v974 = vld [vmem:[#allocation3 + $0xa0] sm:$0xff]
      %v975 = vld [vmem:[#allocation3 + $0xa8] sm:$0xff]
      %v976 = vld [vmem:[#allocation3 + $0xb0] sm:$0xff]
      %v977 = vld [vmem:[#allocation3 + $0xb8] sm:$0xff]
      %v978 = vld [vmem:[#allocation3 + $0xc0] sm:$0xff]
      %v979 = vld [vmem:[#allocation3 + $0xc8] sm:$0xff]
      %v980 = vld [vmem:[#allocation3 + $0xd0] sm:$0xff]
      %v981 = vld [vmem:[#allocation3 + $0xd8] sm:$0xff]
      %v982 = vld [vmem:[#allocation3 + $0xe0] sm:$0xff]
      %v983 = vld [vmem:[#allocation3 + $0xe8] sm:$0xff]
      %v984 = vld [vmem:[#allocation3 + $0xf0] sm:$0xff]
      %v985 = vld [vmem:[#allocation3 + $0xf8] sm:$0xff]
      %v986 = vld [vmem:[#allocation3 + $0x100] sm:$0xff]
      %v987 = vld [vmem:[#allocation3 + $0x108] sm:$0xff]
      %v988 = vld [vmem:[#allocation3 + $0x110] sm:$0xff]
      %v989 = vld [vmem:[#allocation3 + $0x118] sm:$0xff]
      %v990 = vld [vmem:[#allocation3 + $0x120] sm:$0xff]
      %v991 = vld [vmem:[#allocation3 + $0x128] sm:$0xff]
      %v992 = vld [vmem:[#allocation3 + $0x130] sm:$0xff]
      %v993 = vld [vmem:[#allocation3 + $0x138] sm:$0xff]
      %v994 = vld [vmem:[#allocation3 + $0x140] sm:$0xff]
      %v995 = vld [vmem:[#allocation3 + $0x148] sm:$0xff]
      %v996 = vld [vmem:[#allocation3 + $0x150] sm:$0xff]
      %v997 = vld [vmem:[#allocation3 + $0x158] sm:$0xff]
      %v998 = vld [vmem:[#allocation3 + $0x160] sm:$0xff]
      %v999 = vld [vmem:[#allocation3 + $0x168] sm:$0xff]
      %v1000 = vld [vmem:[#allocation3 + $0x170] sm:$0xff]
      %v1001 = vld [vmem:[#allocation3 + $0x178] sm:$0xff]
      %v1002 = vld [vmem:[#allocation3 + $0x180] sm:$0xff]
      %v1003 = vld [vmem:[#allocation3 + $0x188] sm:$0xff]
      %v1004 = vld [vmem:[#allocation3 + $0x190] sm:$0xff]
      %v1005 = vld [vmem:[#allocation3 + $0x198] sm:$0xff]
      %v1006 = vld [vmem:[#allocation3 + $0x1a0] sm:$0xff]
      %v1007 = vld [vmem:[#allocation3 + $0x1a8] sm:$0xff]
      %v1008 = vld [vmem:[#allocation3 + $0x1b0] sm:$0xff]
      %v1009 = vld [vmem:[#allocation3 + $0x1b8] sm:$0xff]
      %v1010 = vld [vmem:[#allocation3 + $0x1c0] sm:$0xff]
      %v1011 = vld [vmem:[#allocation3 + $0x1c8] sm:$0xff]
      %v1012 = vld [vmem:[#allocation3 + $0x1d0] sm:$0xff]
      %v1013 = vld [vmem:[#allocation3 + $0x1d8] sm:$0xff]
      %v1014 = vld [vmem:[#allocation3 + $0x1e0] sm:$0xff]
      %v1015 = vld [vmem:[#allocation3 + $0x1e8] sm:$0xff]
      %v1016 = vld [vmem:[#allocation3 + $0x1f0] sm:$0xff]
      %v1017 = vld [vmem:[#allocation3 + $0x1f8] sm:$0xff]
      %v1018 = vld [vmem:[#allocation3 + $0x200] sm:$0xff]
      %v1019 = vld [vmem:[#allocation3 + $0x208] sm:$0xff]
      %v1020 = vld [vmem:[#allocation3 + $0x210] sm:$0xff]
      %v1021 = vld [vmem:[#allocation3 + $0x218] sm:$0xff]
      %v1022 = vld [vmem:[#allocation3 + $0x220] sm:$0xff]
      %v1023 = vld [vmem:[#allocation3 + $0x228] sm:$0xff]
      %v1024 = vld [vmem:[#allocation3 + $0x230] sm:$0xff]
      %v1025 = vld [vmem:[#allocation3 + $0x238] sm:$0xff]
      %v1026 = vld [vmem:[#allocation3 + $0x240] sm:$0xff]
      %v1027 = vld [vmem:[#allocation3 + $0x248] sm:$0xff]
      %v1028 = vld [vmem:[#allocation3 + $0x250] sm:$0xff]
      %v1029 = vld [vmem:[#allocation3 + $0x258] sm:$0xff]
      %v1030 = vld [vmem:[#allocation3 + $0x260] sm:$0xff]
      %v1031 = vld [vmem:[#allocation3 + $0x268] sm:$0xff]
      %v1032 = vld [vmem:[#allocation3 + $0x270] sm:$0xff]
      %v1033 = vld [vmem:[#allocation3 + $0x278] sm:$0xff]
      %v1034 = vld [vmem:[#allocation3 + $0x280] sm:$0xff]
      %v1035 = vld [vmem:[%s7] sm:$0xff]
      %v1036 = vld [vmem:[%s7 + $0x8] sm:$0xff]
      %v1037 = vld [vmem:[%s7 + $0x10] sm:$0xff]
      %v1038 = vld [vmem:[%s7 + $0x18] sm:$0xff]
      %v1039 = vld [vmem:[%s7 + $0x20] sm:$0xff]
      %v1040 = vld [vmem:[%s7 + $0x28] sm:$0xff]
      %v1041 = vld [vmem:[%s7 + $0x30] sm:$0xff]
      %v1042 = vld [vmem:[%s7 + $0x38] sm:$0xff]
      %v1043 = vld [vmem:[%s7 + $0x40] sm:$0xff]
      %v1044 = vld [vmem:[%s7 + $0x48] sm:$0xff]
      %v1045 = vld [vmem:[%s7 + $0x50] sm:$0xff]
      %v1046 = vld [vmem:[%s7 + $0x58] sm:$0xff]
      %v1047 = vld [vmem:[%s7 + $0x60] sm:$0xff]
      %v1048 = vld [vmem:[%s7 + $0x68] sm:$0xff]
      %v1049 = vld [vmem:[%s7 + $0x70] sm:$0xff]
      %v1050 = vld [vmem:[%s7 + $0x78] sm:$0xff]
      %v1051 = vld [vmem:[%s7 + $0x80] sm:$0xff]
      %v1052 = vld [vmem:[%s7 + $0x88] sm:$0xff]
      %v1053 = vld [vmem:[%s7 + $0x90] sm:$0xff]
      %v1054 = vld [vmem:[%s7 + $0x98] sm:$0xff]
      %v1055 = vld [vmem:[%s7 + $0xa0] sm:$0xff]
      %v1056 = vld [vmem:[%s7 + $0xa8] sm:$0xff]
      %v1057 = vld [vmem:[%s7 + $0xb0] sm:$0xff]
      %v1058 = vld [vmem:[%s7 + $0xb8] sm:$0xff]
      %v1059 = vld [vmem:[%s7 + $0xc0] sm:$0xff]
      %v1060 = vld [vmem:[%s7 + $0xc8] sm:$0xff]
      %v1061 = vld [vmem:[%s7 + $0xd0] sm:$0xff]
      %v1062 = vld [vmem:[%s7 + $0xd8] sm:$0xff]
      %v1063 = vld [vmem:[%s7 + $0xe0] sm:$0xff]
      %v1064 = vld [vmem:[%s7 + $0xe8] sm:$0xff]
      %v1065 = vld [vmem:[%s7 + $0xf0] sm:$0xff]
      %v1066 = vld [vmem:[%s7 + $0xf8] sm:$0xff]
      %v1067 = vld [vmem:[%s7 + $0x100] sm:$0xff]
      %v1068 = vld [vmem:[%s7 + $0x108] sm:$0xff]
      %v1069 = vld [vmem:[%s7 + $0x110] sm:$0xff]
      %v1070 = vld [vmem:[%s7 + $0x118] sm:$0xff]
      %v1071 = vld [vmem:[%s7 + $0x120] sm:$0xff]
      %v1072 = vld [vmem:[%s7 + $0x128] sm:$0xff]
      %v1073 = vld [vmem:[%s7 + $0x130] sm:$0xff]
      %v1074 = vld [vmem:[%s7 + $0x138] sm:$0xff]
      %v1075 = vld [vmem:[%s7 + $0x140] sm:$0xff]
      %v1076 = vld [vmem:[%s7 + $0x148] sm:$0xff]
      %v1077 = vld [vmem:[%s7 + $0x150] sm:$0xff]
      %v1078 = vld [vmem:[%s7 + $0x158] sm:$0xff]
      %v1079 = vld [vmem:[%s7 + $0x160] sm:$0xff]
      %v1080 = vld [vmem:[%s7 + $0x168] sm:$0xff]
      %v1081 = vld [vmem:[%s7 + $0x170] sm:$0xff]
      %v1082 = vld [vmem:[%s7 + $0x178] sm:$0xff]
      %v1083 = vld [vmem:[%s7 + $0x180] sm:$0xff]
      %v1084 = vld [vmem:[%s7 + $0x188] sm:$0xff]
      %v1085 = vld [vmem:[%s7 + $0x190] sm:$0xff]
      %v1086 = vld [vmem:[%s7 + $0x198] sm:$0xff]
      %v1087 = vld [vmem:[%s7 + $0x1a0] sm:$0xff]
      %v1088 = vld [vmem:[%s7 + $0x1a8] sm:$0xff]
      %v1089 = vld [vmem:[%s7 + $0x1b0] sm:$0xff]
      %v1090 = vld [vmem:[%s7 + $0x1b8] sm:$0xff]
      %v1091 = vld [vmem:[%s7 + $0x1c0] sm:$0xff]
      %v1092 = vld [vmem:[%s7 + $0x1c8] sm:$0xff]
      %v1093 = vld [vmem:[%s7 + $0x1d0] sm:$0xff]
      %v1094 = vld [vmem:[%s7 + $0x1d8] sm:$0xff]
      %v1095 = vld [vmem:[%s7 + $0x1e0] sm:$0xff]
      %v1096 = vld [vmem:[%s7 + $0x1e8] sm:$0xff]
      %v1097 = vld [vmem:[%s7 + $0x1f0] sm:$0xff]
      %v1098 = vld [vmem:[%s7 + $0x1f8] sm:$0xff]
      %v1099 = vld [vmem:[%s7 + $0x200] sm:$0xff]
      %v1100 = vld [vmem:[%s7 + $0x208] sm:$0xff]
      %v1101 = vld [vmem:[%s7 + $0x210] sm:$0xff]
      %v1102 = vld [vmem:[%s7 + $0x218] sm:$0xff]
      %v1103 = vld [vmem:[%s7 + $0x220] sm:$0xff]
      %v1104 = vld [vmem:[%s7 + $0x228] sm:$0xff]
      %v1105 = vld [vmem:[%s7 + $0x230] sm:$0xff]
      %v1106 = vld [vmem:[%s7 + $0x238] sm:$0xff]
      %v1107 = vld [vmem:[%s7 + $0x240] sm:$0xff]
      %v1108 = vld [vmem:[%s7 + $0x248] sm:$0xff]
      %v1109 = vld [vmem:[%s7 + $0x250] sm:$0xff]
      %v1110 = vld [vmem:[%s7 + $0x258] sm:$0xff]
      %v1111 = vld [vmem:[%s7 + $0x260] sm:$0xff]
      %v1112 = vld [vmem:[%s7 + $0x268] sm:$0xff]
      %v1113 = vld [vmem:[%s7 + $0x270] sm:$0xff]
      %v1114 = vld [vmem:[%s7 + $0x278] sm:$0xff]
      %v1115 = vld [vmem:[%s7 + $0x280] sm:$0xff]
      %v1116 = vld [vmem:[%s7 + $0x288] sm:$0xff]
      %v1117 = vld [vmem:[%s7 + $0x290] sm:$0xff]
      %v1118 = vld [vmem:[%s7 + $0x298] sm:$0xff]
      %v1119 = vld [vmem:[%s7 + $0x2a0] sm:$0xff]
      %v1120 = vld [vmem:[%s7 + $0x2a8] sm:$0xff]
      %v1121 = vld [vmem:[%s7 + $0x2b0] sm:$0xff]
      %v1122 = vld [vmem:[%s7 + $0x2b8] sm:$0xff]
      %v1123 = vld [vmem:[%s7 + $0x2c0] sm:$0xff]
      %v1124 = vld [vmem:[%s7 + $0x2c8] sm:$0xff]
      %v1125 = vld [vmem:[%s7 + $0x2d0] sm:$0xff]
      %v1126 = vld [vmem:[%s7 + $0x2d8] sm:$0xff]
      %v1127 = vld [vmem:[%s7 + $0x2e0] sm:$0xff]
      %v1128 = vld [vmem:[%s7 + $0x2e8] sm:$0xff]
      %v1129 = vld [vmem:[%s7 + $0x2f0] sm:$0xff]
      %v1130 = vld [vmem:[%s7 + $0x2f8] sm:$0xff]
      %v1131 = vld [vmem:[%s7 + $0x300] sm:$0xff]
      %v1132 = vld [vmem:[%s7 + $0x308] sm:$0xff]
      %v1133 = vld [vmem:[%s7 + $0x310] sm:$0xff]
      %v1134 = vld [vmem:[%s7 + $0x318] sm:$0xff]
      %v1135 = vld [vmem:[%s7 + $0x320] sm:$0xff]
      %v1136 = vld [vmem:[%s7 + $0x328] sm:$0xff]
      %v1137 = vld [vmem:[%s7 + $0x330] sm:$0xff]
      %v1138 = vld [vmem:[%s7 + $0x338] sm:$0xff]
      %v1139 = vld [vmem:[%s7 + $0x340] sm:$0xff]
      %v1140 = vld [vmem:[%s7 + $0x348] sm:$0xff]
      %v1141 = vld [vmem:[%s7 + $0x350] sm:$0xff]
      %v1142 = vld [vmem:[%s7 + $0x358] sm:$0xff]
      %v1143 = vld [vmem:[%s7 + $0x360] sm:$0xff]
      %v1144 = vld [vmem:[%s7 + $0x368] sm:$0xff]
      %v1145 = vld [vmem:[%s7 + $0x370] sm:$0xff]
      %v1146 = vld [vmem:[%s7 + $0x378] sm:$0xff]
      %v1147 = vld [vmem:[%s7 + $0x380] sm:$0xff]
      %v1148 = vld [vmem:[%s7 + $0x388] sm:$0xff]
      %v1149 = vld [vmem:[%s7 + $0x390] sm:$0xff]
      %v1150 = vld [vmem:[%s7 + $0x398] sm:$0xff]
      %v1151 = vld [vmem:[%s7 + $0x3a0] sm:$0xff]
      %v1152 = vld [vmem:[%s7 + $0x3a8] sm:$0xff]
      %v1153 = vld [vmem:[%s7 + $0x3b0] sm:$0xff]
      %v1154 = vld [vmem:[%s7 + $0x3b8] sm:$0xff]
      %v1155 = vld [vmem:[%s7 + $0x3c0] sm:$0xff]
      %v1156 = vld [vmem:[%s7 + $0x3c8] sm:$0xff]
      %v1157 = vld [vmem:[%s7 + $0x3d0] sm:$0xff]
      %v1158 = vld [vmem:[%s7 + $0x3d8] sm:$0xff]
      %v1159 = vld [vmem:[%s7 + $0x3e0] sm:$0xff]
      %v1160 = vld [vmem:[%s7 + $0x3e8] sm:$0xff]
      %v1161 = vld [vmem:[%s7 + $0x3f0] sm:$0xff]
      %v1162 = vld [vmem:[%s7 + $0x3f8] sm:$0xff]
      %v1163 = vld [vmem:[%s7 + $0x400] sm:$0xff]
      %v1164 = vld [vmem:[%s7 + $0x408] sm:$0xff]
      %v1165 = vld [vmem:[%s7 + $0x410] sm:$0xff]
      %v1166 = vld [vmem:[%s7 + $0x418] sm:$0xff]
      %v1167 = vld [vmem:[%s7 + $0x420] sm:$0xff]
      %v1168 = vld [vmem:[%s7 + $0x428] sm:$0xff]
      %v1169 = vld [vmem:[%s7 + $0x430] sm:$0xff]
      %v1170 = vld [vmem:[%s7 + $0x438] sm:$0xff]
      %v1171 = vld [vmem:[%s7 + $0x440] sm:$0xff]
      %v1172 = vld [vmem:[%s7 + $0x448] sm:$0xff]
      %v1173 = vld [vmem:[%s7 + $0x450] sm:$0xff]
      %v1174 = vld [vmem:[%s7 + $0x458] sm:$0xff]
      %v1175 = vld [vmem:[%s7 + $0x460] sm:$0xff]
      %v1176 = vld [vmem:[%s7 + $0x468] sm:$0xff]
      %v1177 = vld [vmem:[%s7 + $0x470] sm:$0xff]
      %v1178 = vld [vmem:[%s7 + $0x478] sm:$0xff]
      %1179 = vmatprep.subr.mxu0 0.0
      %1180 = vmatpush1.msra.mxu0 %v1050
      %1181 = vmatprep.subr.mxu0 0.0
      %1182 = vmatpush1.msra.mxu0 %v1049
      %1183 = vmatprep.subr.mxu0 0.0
      %1184 = vmatpush1.msra.mxu0 %v1048
      %1185 = vmatprep.subr.mxu0 0.0
      %1186 = vmatpush1.msra.mxu0 %v1047
      %1187 = vmatprep.subr.mxu0 0.0
      %1188 = vmatpush1.msra.mxu0 %v1046
      %1189 = vmatprep.subr.mxu0 0.0
      %1190 = vmatpush1.msra.mxu0 %v1045
      %1191 = vmatprep.subr.mxu0 0.0
      %1192 = vmatpush1.msra.mxu0 %v1044
      %1193 = vmatprep.subr.mxu0 0.0
      %1194 = vmatpush1.msra.mxu0 %v1043
      %1195 = vmatprep.subr.mxu0 0.0
      %1196 = vmatpush1.msra.mxu0 %v1042
      %1197 = vmatprep.subr.mxu0 0.0
      %1198 = vmatpush1.msra.mxu0 %v1041
      %1199 = vmatprep.subr.mxu0 0.0
      %1200 = vmatpush1.msra.mxu0 %v1040
      %1201 = vmatprep.subr.mxu0 0.0
      %1202 = vmatpush1.msra.mxu0 %v1039
      %1203 = vmatprep.subr.mxu0 0.0
      %1204 = vmatpush1.msra.mxu0 %v1038
      %1205 = vmatprep.subr.mxu0 0.0
      %1206 = vmatpush1.msra.mxu0 %v1037
      %1207 = vmatprep.subr.mxu0 0.0
      %1208 = vmatpush1.msra.mxu0 %v1036
      %1209 = vmatprep.subr.mxu0 0.0
      %1210 = vmatpush1.msra.mxu0 %v1035
      %1211 = vmatprep.subr.mxu0 0.0
      %1212 = vmatpush2.msra.mxu0 %v1066
      %1213 = vmatprep.subr.mxu0 0.0
      %1214 = vmatpush2.msra.mxu0 %v1065
      %1215 = vmatprep.subr.mxu0 0.0
      %1216 = vmatpush2.msra.mxu0 %v1064
      %1217 = vmatprep.subr.mxu0 0.0
      %1218 = vmatpush2.msra.mxu0 %v1063
      %1219 = vmatprep.subr.mxu0 0.0
      %1220 = vmatpush2.msra.mxu0 %v1062
      %1221 = vmatprep.subr.mxu0 0.0
      %1222 = vmatpush2.msra.mxu0 %v1061
      %1223 = vmatprep.subr.mxu0 0.0
      %1224 = vmatpush2.msra.mxu0 %v1060
      %1225 = vmatprep.subr.mxu0 0.0
      %1226 = vmatpush2.msra.mxu0 %v1059
      %1227 = vmatprep.subr.mxu0 0.0
      %1228 = vmatpush2.msra.mxu0 %v1058
      %1229 = vmatprep.subr.mxu0 0.0
      %1230 = vmatpush2.msra.mxu0 %v1057
      %1231 = vmatprep.subr.mxu0 0.0
      %1232 = vmatpush2.msra.mxu0 %v1056
      %1233 = vmatprep.subr.mxu0 0.0
      %1234 = vmatpush2.msra.mxu0 %v1055
      %1235 = vmatprep.subr.mxu0 0.0
      %1236 = vmatpush2.msra.mxu0 %v1054
      %1237 = vmatprep.subr.mxu0 0.0
      %1238 = vmatpush2.msra.mxu0 %v1053
      %1239 = vmatprep.subr.mxu0 0.0
      %1240 = vmatpush2.msra.mxu0 %v1052
      %1241 = vmatprep.subr.mxu0 0.0
      %1242 = vmatpush2.msra.mxu0 %v1051
      %1243 = vmatprep.mubr.f32.mxu0 %v955
      %1244 = vmatmul.mubr.f32.gmra.mxu0 %v954
      %v1245 = vpop.f32.mrf.mxu0
      %v1246 = vadd.f32 0.0, %v1245
      %v1247 = vpop.f32.mrf.mxu0
      %1248 = vmatprep.mubr.f32.mxu0 %v964
      %1249 = vmatmul.mubr.f32.gmra.mxu0 %v963
      %v1250 = vpop.f32.mrf.mxu0
      %v1251 = vadd.f32 0.0, %v1250
      %v1252 = vpop.f32.mrf.mxu0
      %1253 = vmatprep.mubr.f32.mxu0 %v973
      %1254 = vmatmul.mubr.f32.gmra.mxu0 %v972
      %v1255 = vpop.f32.mrf.mxu0
      %v1256 = vadd.f32 0.0, %v1255
      %v1257 = vpop.f32.mrf.mxu0
      %1258 = vmatprep.mubr.f32.mxu0 %v982
      %1259 = vmatmul.mubr.f32.gmra.mxu0 %v981
      %v1260 = vpop.f32.mrf.mxu0
      %v1261 = vadd.f32 0.0, %v1260
      %v1262 = vpop.f32.mrf.mxu0
      %1263 = vmatprep.mubr.f32.mxu0 %v991
      %1264 = vmatmul.mubr.f32.gmra.mxu0 %v990
      %v1265 = vpop.f32.mrf.mxu0
      %v1266 = vadd.f32 0.0, %v1265
      %v1267 = vpop.f32.mrf.mxu0
      %1268 = vmatprep.mubr.f32.mxu0 %v1000
      %1269 = vmatmul.mubr.f32.gmra.mxu0 %v999
      %v1270 = vpop.f32.mrf.mxu0
      %v1271 = vadd.f32 0.0, %v1270
      %v1272 = vpop.f32.mrf.mxu0
      %1273 = vmatprep.mubr.f32.mxu0 %v1009
      %1274 = vmatmul.mubr.f32.gmra.mxu0 %v1008
      %v1275 = vpop.f32.mrf.mxu0
      %v1276 = vadd.f32 0.0, %v1275
      %v1277 = vpop.f32.mrf.mxu0
      %1278 = vmatprep.mubr.f32.mxu0 %v1018
      %1279 = vmatmul.mubr.f32.gmra.mxu0 %v1017
      %v1280 = vpop.f32.mrf.mxu0
      %v1281 = vadd.f32 0.0, %v1280
      %v1282 = vpop.f32.mrf.mxu0
      %1283 = vmatprep.mubr.f32.mxu0 %v1027
      %1284 = vmatmul.mubr.f32.gmra.mxu0 %v1026
      %v1285 = vpop.f32.mrf.mxu0
      %v1286 = vadd.f32 0.0, %v1285
      %v1287 = vpop.f32.mrf.mxu0
      %1288 = vdwg.mxu0
      %1289 = vmatprep.subr.mxu0 0.0
      %1290 = vmatpush1.msra.mxu0 %v1082
      %1291 = vmatprep.subr.mxu0 0.0
      %1292 = vmatpush1.msra.mxu0 %v1081
      %1293 = vmatprep.subr.mxu0 0.0
      %1294 = vmatpush1.msra.mxu0 %v1080
      %1295 = vmatprep.subr.mxu0 0.0
      %1296 = vmatpush1.msra.mxu0 %v1079
      %1297 = vmatprep.subr.mxu0 0.0
      %1298 = vmatpush1.msra.mxu0 %v1078
      %1299 = vmatprep.subr.mxu0 0.0
      %1300 = vmatpush1.msra.mxu0 %v1077
      %1301 = vmatprep.subr.mxu0 0.0
      %1302 = vmatpush1.msra.mxu0 %v1076
      %1303 = vmatprep.subr.mxu0 0.0
      %1304 = vmatpush1.msra.mxu0 %v1075
      %1305 = vmatprep.subr.mxu0 0.0
      %1306 = vmatpush1.msra.mxu0 %v1074
      %1307 = vmatprep.subr.mxu0 0.0
      %1308 = vmatpush1.msra.mxu0 %v1073
      %1309 = vmatprep.subr.mxu0 0.0
      %1310 = vmatpush1.msra.mxu0 %v1072
      %1311 = vmatprep.subr.mxu0 0.0
      %1312 = vmatpush1.msra.mxu0 %v1071
      %1313 = vmatprep.subr.mxu0 0.0
      %1314 = vmatpush1.msra.mxu0 %v1070
      %1315 = vmatprep.subr.mxu0 0.0
      %1316 = vmatpush1.msra.mxu0 %v1069
      %1317 = vmatprep.subr.mxu0 0.0
      %1318 = vmatpush1.msra.mxu0 %v1068
      %1319 = vmatprep.subr.mxu0 0.0
      %1320 = vmatpush1.msra.mxu0 %v1067
      %1321 = vmatprep.subr.mxu0 0.0
      %1322 = vmatpush2.msra.mxu0 %v1098
      %1323 = vmatprep.subr.mxu0 0.0
      %1324 = vmatpush2.msra.mxu0 %v1097
      %1325 = vmatprep.subr.mxu0 0.0
      %1326 = vmatpush2.msra.mxu0 %v1096
      %1327 = vmatprep.subr.mxu0 0.0
      %1328 = vmatpush2.msra.mxu0 %v1095
      %1329 = vmatprep.subr.mxu0 0.0
      %1330 = vmatpush2.msra.mxu0 %v1094
      %1331 = vmatprep.subr.mxu0 0.0
      %1332 = vmatpush2.msra.mxu0 %v1093
      %1333 = vmatprep.subr.mxu0 0.0
      %1334 = vmatpush2.msra.mxu0 %v1092
      %1335 = vmatprep.subr.mxu0 0.0
      %1336 = vmatpush2.msra.mxu0 %v1091
      %1337 = vmatprep.subr.mxu0 0.0
      %1338 = vmatpush2.msra.mxu0 %v1090
      %1339 = vmatprep.subr.mxu0 0.0
      %1340 = vmatpush2.msra.mxu0 %v1089
      %1341 = vmatprep.subr.mxu0 0.0
      %1342 = vmatpush2.msra.mxu0 %v1088
      %1343 = vmatprep.subr.mxu0 0.0
      %1344 = vmatpush2.msra.mxu0 %v1087
      %1345 = vmatprep.subr.mxu0 0.0
      %1346 = vmatpush2.msra.mxu0 %v1086
      %1347 = vmatprep.subr.mxu0 0.0
      %1348 = vmatpush2.msra.mxu0 %v1085
      %1349 = vmatprep.subr.mxu0 0.0
      %1350 = vmatpush2.msra.mxu0 %v1084
      %1351 = vmatprep.subr.mxu0 0.0
      %1352 = vmatpush2.msra.mxu0 %v1083
      %1353 = vmatprep.mubr.f32.mxu0 %v957
      %1354 = vmatmul.mubr.f32.gmra.mxu0 %v956
      %v1355 = vpop.f32.mrf.mxu0
      %v1356 = vadd.f32 %v1246, %v1355
      %v1357 = vpop.f32.mrf.mxu0
      %1358 = vmatprep.mubr.f32.mxu0 %v966
      %1359 = vmatmul.mubr.f32.gmra.mxu0 %v965
      %v1360 = vpop.f32.mrf.mxu0
      %v1361 = vadd.f32 %v1251, %v1360
      %v1362 = vpop.f32.mrf.mxu0
      %1363 = vmatprep.mubr.f32.mxu0 %v975
      %1364 = vmatmul.mubr.f32.gmra.mxu0 %v974
      %v1365 = vpop.f32.mrf.mxu0
      %v1366 = vadd.f32 %v1256, %v1365
      %v1367 = vpop.f32.mrf.mxu0
      %1368 = vmatprep.mubr.f32.mxu0 %v984
      %1369 = vmatmul.mubr.f32.gmra.mxu0 %v983
      %v1370 = vpop.f32.mrf.mxu0
      %v1371 = vadd.f32 %v1261, %v1370
      %v1372 = vpop.f32.mrf.mxu0
      %1373 = vmatprep.mubr.f32.mxu0 %v993
      %1374 = vmatmul.mubr.f32.gmra.mxu0 %v992
      %v1375 = vpop.f32.mrf.mxu0
      %v1376 = vadd.f32 %v1266, %v1375
      %v1377 = vpop.f32.mrf.mxu0
      %1378 = vmatprep.mubr.f32.mxu0 %v1002
      %1379 = vmatmul.mubr.f32.gmra.mxu0 %v1001
      %v1380 = vpop.f32.mrf.mxu0
      %v1381 = vadd.f32 %v1271, %v1380
      %v1382 = vpop.f32.mrf.mxu0
      %1383 = vmatprep.mubr.f32.mxu0 %v1011
      %1384 = vmatmul.mubr.f32.gmra.mxu0 %v1010
      %v1385 = vpop.f32.mrf.mxu0
      %v1386 = vadd.f32 %v1276, %v1385
      %v1387 = vpop.f32.mrf.mxu0
      %1388 = vmatprep.mubr.f32.mxu0 %v1020
      %1389 = vmatmul.mubr.f32.gmra.mxu0 %v1019
      %v1390 = vpop.f32.mrf.mxu0
      %v1391 = vadd.f32 %v1281, %v1390
      %v1392 = vpop.f32.mrf.mxu0
      %1393 = vmatprep.mubr.f32.mxu0 %v1029
      %1394 = vmatmul.mubr.f32.gmra.mxu0 %v1028
      %v1395 = vpop.f32.mrf.mxu0
      %v1396 = vadd.f32 %v1286, %v1395
      %v1397 = vpop.f32.mrf.mxu0
      %1398 = vdwg.mxu0
      %1399 = vmatprep.subr.mxu0 0.0
      %1400 = vmatpush1.msra.mxu0 %v1114
      %1401 = vmatprep.subr.mxu0 0.0
      %1402 = vmatpush1.msra.mxu0 %v1113
      %1403 = vmatprep.subr.mxu0 0.0
      %1404 = vmatpush1.msra.mxu0 %v1112
      %1405 = vmatprep.subr.mxu0 0.0
      %1406 = vmatpush1.msra.mxu0 %v1111
      %1407 = vmatprep.subr.mxu0 0.0
      %1408 = vmatpush1.msra.mxu0 %v1110
      %1409 = vmatprep.subr.mxu0 0.0
      %1410 = vmatpush1.msra.mxu0 %v1109
      %1411 = vmatprep.subr.mxu0 0.0
      %1412 = vmatpush1.msra.mxu0 %v1108
      %1413 = vmatprep.subr.mxu0 0.0
      %1414 = vmatpush1.msra.mxu0 %v1107
      %1415 = vmatprep.subr.mxu0 0.0
      %1416 = vmatpush1.msra.mxu0 %v1106
      %1417 = vmatprep.subr.mxu0 0.0
      %1418 = vmatpush1.msra.mxu0 %v1105
      %1419 = vmatprep.subr.mxu0 0.0
      %1420 = vmatpush1.msra.mxu0 %v1104
      %1421 = vmatprep.subr.mxu0 0.0
      %1422 = vmatpush1.msra.mxu0 %v1103
      %1423 = vmatprep.subr.mxu0 0.0
      %1424 = vmatpush1.msra.mxu0 %v1102
      %1425 = vmatprep.subr.mxu0 0.0
      %1426 = vmatpush1.msra.mxu0 %v1101
      %1427 = vmatprep.subr.mxu0 0.0
      %1428 = vmatpush1.msra.mxu0 %v1100
      %1429 = vmatprep.subr.mxu0 0.0
      %1430 = vmatpush1.msra.mxu0 %v1099
      %1431 = vmatprep.subr.mxu0 0.0
      %1432 = vmatpush2.msra.mxu0 %v1130
      %1433 = vmatprep.subr.mxu0 0.0
      %1434 = vmatpush2.msra.mxu0 %v1129
      %1435 = vmatprep.subr.mxu0 0.0
      %1436 = vmatpush2.msra.mxu0 %v1128
      %1437 = vmatprep.subr.mxu0 0.0
      %1438 = vmatpush2.msra.mxu0 %v1127
      %1439 = vmatprep.subr.mxu0 0.0
      %1440 = vmatpush2.msra.mxu0 %v1126
      %1441 = vmatprep.subr.mxu0 0.0
      %1442 = vmatpush2.msra.mxu0 %v1125
      %1443 = vmatprep.subr.mxu0 0.0
      %1444 = vmatpush2.msra.mxu0 %v1124
      %1445 = vmatprep.subr.mxu0 0.0
      %1446 = vmatpush2.msra.mxu0 %v1123
      %1447 = vmatprep.subr.mxu0 0.0
      %1448 = vmatpush2.msra.mxu0 %v1122
      %1449 = vmatprep.subr.mxu0 0.0
      %1450 = vmatpush2.msra.mxu0 %v1121
      %1451 = vmatprep.subr.mxu0 0.0
      %1452 = vmatpush2.msra.mxu0 %v1120
      %1453 = vmatprep.subr.mxu0 0.0
      %1454 = vmatpush2.msra.mxu0 %v1119
      %1455 = vmatprep.subr.mxu0 0.0
      %1456 = vmatpush2.msra.mxu0 %v1118
      %1457 = vmatprep.subr.mxu0 0.0
      %1458 = vmatpush2.msra.mxu0 %v1117
      %1459 = vmatprep.subr.mxu0 0.0
      %1460 = vmatpush2.msra.mxu0 %v1116
      %1461 = vmatprep.subr.mxu0 0.0
      %1462 = vmatpush2.msra.mxu0 %v1115
      %1463 = vmatprep.mubr.f32.mxu0 %v959
      %1464 = vmatmul.mubr.f32.gmra.mxu0 %v958
      %v1465 = vpop.f32.mrf.mxu0
      %v1466 = vadd.f32 %v1356, %v1465
      %v1467 = vpop.f32.mrf.mxu0
      %1468 = vmatprep.mubr.f32.mxu0 %v968
      %1469 = vmatmul.mubr.f32.gmra.mxu0 %v967
      %v1470 = vpop.f32.mrf.mxu0
      %v1471 = vadd.f32 %v1361, %v1470
      %v1472 = vpop.f32.mrf.mxu0
      %1473 = vmatprep.mubr.f32.mxu0 %v977
      %1474 = vmatmul.mubr.f32.gmra.mxu0 %v976
      %v1475 = vpop.f32.mrf.mxu0
      %v1476 = vadd.f32 %v1366, %v1475
      %v1477 = vpop.f32.mrf.mxu0
      %1478 = vmatprep.mubr.f32.mxu0 %v986
      %1479 = vmatmul.mubr.f32.gmra.mxu0 %v985
      %v1480 = vpop.f32.mrf.mxu0
      %v1481 = vadd.f32 %v1371, %v1480
      %v1482 = vpop.f32.mrf.mxu0
      %1483 = vmatprep.mubr.f32.mxu0 %v995
      %1484 = vmatmul.mubr.f32.gmra.mxu0 %v994
      %v1485 = vpop.f32.mrf.mxu0
      %v1486 = vadd.f32 %v1376, %v1485
      %v1487 = vpop.f32.mrf.mxu0
      %1488 = vmatprep.mubr.f32.mxu0 %v1004
      %1489 = vmatmul.mubr.f32.gmra.mxu0 %v1003
      %v1490 = vpop.f32.mrf.mxu0
      %v1491 = vadd.f32 %v1381, %v1490
      %v1492 = vpop.f32.mrf.mxu0
      %1493 = vmatprep.mubr.f32.mxu0 %v1013
      %1494 = vmatmul.mubr.f32.gmra.mxu0 %v1012
      %v1495 = vpop.f32.mrf.mxu0
      %v1496 = vadd.f32 %v1386, %v1495
      %v1497 = vpop.f32.mrf.mxu0
      %1498 = vmatprep.mubr.f32.mxu0 %v1022
      %1499 = vmatmul.mubr.f32.gmra.mxu0 %v1021
      %v1500 = vpop.f32.mrf.mxu0
      %v1501 = vadd.f32 %v1391, %v1500
      %v1502 = vpop.f32.mrf.mxu0
      %1503 = vmatprep.mubr.f32.mxu0 %v1031
      %1504 = vmatmul.mubr.f32.gmra.mxu0 %v1030
      %v1505 = vpop.f32.mrf.mxu0
      %v1506 = vadd.f32 %v1396, %v1505
      %v1507 = vpop.f32.mrf.mxu0
      %1508 = vdwg.mxu0
      %1509 = vmatprep.subr.mxu0 0.0
      %1510 = vmatpush1.msra.mxu0 %v1146
      %1511 = vmatprep.subr.mxu0 0.0
      %1512 = vmatpush1.msra.mxu0 %v1145
      %1513 = vmatprep.subr.mxu0 0.0
      %1514 = vmatpush1.msra.mxu0 %v1144
      %1515 = vmatprep.subr.mxu0 0.0
      %1516 = vmatpush1.msra.mxu0 %v1143
      %1517 = vmatprep.subr.mxu0 0.0
      %1518 = vmatpush1.msra.mxu0 %v1142
      %1519 = vmatprep.subr.mxu0 0.0
      %1520 = vmatpush1.msra.mxu0 %v1141
      %1521 = vmatprep.subr.mxu0 0.0
      %1522 = vmatpush1.msra.mxu0 %v1140
      %1523 = vmatprep.subr.mxu0 0.0
      %1524 = vmatpush1.msra.mxu0 %v1139
      %1525 = vmatprep.subr.mxu0 0.0
      %1526 = vmatpush1.msra.mxu0 %v1138
      %1527 = vmatprep.subr.mxu0 0.0
      %1528 = vmatpush1.msra.mxu0 %v1137
      %1529 = vmatprep.subr.mxu0 0.0
      %1530 = vmatpush1.msra.mxu0 %v1136
      %1531 = vmatprep.subr.mxu0 0.0
      %1532 = vmatpush1.msra.mxu0 %v1135
      %1533 = vmatprep.subr.mxu0 0.0
      %1534 = vmatpush1.msra.mxu0 %v1134
      %1535 = vmatprep.subr.mxu0 0.0
      %1536 = vmatpush1.msra.mxu0 %v1133
      %1537 = vmatprep.subr.mxu0 0.0
      %1538 = vmatpush1.msra.mxu0 %v1132
      %1539 = vmatprep.subr.mxu0 0.0
      %1540 = vmatpush1.msra.mxu0 %v1131
      %1541 = vmatprep.subr.mxu0 0.0
      %1542 = vmatpush2.msra.mxu0 %v1162
      %1543 = vmatprep.subr.mxu0 0.0
      %1544 = vmatpush2.msra.mxu0 %v1161
      %1545 = vmatprep.subr.mxu0 0.0
      %1546 = vmatpush2.msra.mxu0 %v1160
      %1547 = vmatprep.subr.mxu0 0.0
      %1548 = vmatpush2.msra.mxu0 %v1159
      %1549 = vmatprep.subr.mxu0 0.0
      %1550 = vmatpush2.msra.mxu0 %v1158
      %1551 = vmatprep.subr.mxu0 0.0
      %1552 = vmatpush2.msra.mxu0 %v1157
      %1553 = vmatprep.subr.mxu0 0.0
      %1554 = vmatpush2.msra.mxu0 %v1156
      %1555 = vmatprep.subr.mxu0 0.0
      %1556 = vmatpush2.msra.mxu0 %v1155
      %1557 = vmatprep.subr.mxu0 0.0
      %1558 = vmatpush2.msra.mxu0 %v1154
      %1559 = vmatprep.subr.mxu0 0.0
      %1560 = vmatpush2.msra.mxu0 %v1153
      %1561 = vmatprep.subr.mxu0 0.0
      %1562 = vmatpush2.msra.mxu0 %v1152
      %1563 = vmatprep.subr.mxu0 0.0
      %1564 = vmatpush2.msra.mxu0 %v1151
      %1565 = vmatprep.subr.mxu0 0.0
      %1566 = vmatpush2.msra.mxu0 %v1150
      %1567 = vmatprep.subr.mxu0 0.0
      %1568 = vmatpush2.msra.mxu0 %v1149
      %1569 = vmatprep.subr.mxu0 0.0
      %1570 = vmatpush2.msra.mxu0 %v1148
      %1571 = vmatprep.subr.mxu0 0.0
      %1572 = vmatpush2.msra.mxu0 %v1147
      %1573 = vmatprep.mubr.f32.mxu0 %v961
      %1574 = vmatmul.mubr.f32.gmra.mxu0 %v960
      %v1575 = vpop.f32.mrf.mxu0
      %v1576 = vadd.f32 %v1466, %v1575
      %v1577 = vpop.f32.mrf.mxu0
      %1578 = vmatprep.mubr.f32.mxu0 %v970
      %1579 = vmatmul.mubr.f32.gmra.mxu0 %v969
      %v1580 = vpop.f32.mrf.mxu0
      %v1581 = vadd.f32 %v1471, %v1580
      %v1582 = vpop.f32.mrf.mxu0
      %1583 = vmatprep.mubr.f32.mxu0 %v979
      %1584 = vmatmul.mubr.f32.gmra.mxu0 %v978
      %v1585 = vpop.f32.mrf.mxu0
      %v1586 = vadd.f32 %v1476, %v1585
      %v1587 = vpop.f32.mrf.mxu0
      %1588 = vmatprep.mubr.f32.mxu0 %v988
      %1589 = vmatmul.mubr.f32.gmra.mxu0 %v987
      %v1590 = vpop.f32.mrf.mxu0
      %v1591 = vadd.f32 %v1481, %v1590
      %v1592 = vpop.f32.mrf.mxu0
      %1593 = vmatprep.mubr.f32.mxu0 %v997
      %1594 = vmatmul.mubr.f32.gmra.mxu0 %v996
      %v1595 = vpop.f32.mrf.mxu0
      %v1596 = vadd.f32 %v1486, %v1595
      %v1597 = vpop.f32.mrf.mxu0
      %1598 = vmatprep.mubr.f32.mxu0 %v1006
      %1599 = vmatmul.mubr.f32.gmra.mxu0 %v1005
      %v1600 = vpop.f32.mrf.mxu0
      %v1601 = vadd.f32 %v1491, %v1600
      %v1602 = vpop.f32.mrf.mxu0
      %1603 = vmatprep.mubr.f32.mxu0 %v1015
      %1604 = vmatmul.mubr.f32.gmra.mxu0 %v1014
      %v1605 = vpop.f32.mrf.mxu0
      %v1606 = vadd.f32 %v1496, %v1605
      %v1607 = vpop.f32.mrf.mxu0
      %1608 = vmatprep.mubr.f32.mxu0 %v1024
      %1609 = vmatmul.mubr.f32.gmra.mxu0 %v1023
      %v1610 = vpop.f32.mrf.mxu0
      %v1611 = vadd.f32 %v1501, %v1610
      %v1612 = vpop.f32.mrf.mxu0
      %1613 = vmatprep.mubr.f32.mxu0 %v1033
      %1614 = vmatmul.mubr.f32.gmra.mxu0 %v1032
      %v1615 = vpop.f32.mrf.mxu0
      %v1616 = vadd.f32 %v1506, %v1615
      %v1617 = vpop.f32.mrf.mxu0
      %1618 = vdwg.mxu0
      %1619 = vmatprep.subr.mxu0 0.0
      %1620 = vmatpush1.msra.mxu0 %v1178
      %1621 = vmatprep.subr.mxu0 0.0
      %1622 = vmatpush1.msra.mxu0 %v1177
      %1623 = vmatprep.subr.mxu0 0.0
      %1624 = vmatpush1.msra.mxu0 %v1176
      %1625 = vmatprep.subr.mxu0 0.0
      %1626 = vmatpush1.msra.mxu0 %v1175
      %1627 = vmatprep.subr.mxu0 0.0
      %1628 = vmatpush1.msra.mxu0 %v1174
      %1629 = vmatprep.subr.mxu0 0.0
      %1630 = vmatpush1.msra.mxu0 %v1173
      %1631 = vmatprep.subr.mxu0 0.0
      %1632 = vmatpush1.msra.mxu0 %v1172
      %1633 = vmatprep.subr.mxu0 0.0
      %1634 = vmatpush1.msra.mxu0 %v1171
      %1635 = vmatprep.subr.mxu0 0.0
      %1636 = vmatpush1.msra.mxu0 %v1170
      %1637 = vmatprep.subr.mxu0 0.0
      %1638 = vmatpush1.msra.mxu0 %v1169
      %1639 = vmatprep.subr.mxu0 0.0
      %1640 = vmatpush1.msra.mxu0 %v1168
      %1641 = vmatprep.subr.mxu0 0.0
      %1642 = vmatpush1.msra.mxu0 %v1167
      %1643 = vmatprep.subr.mxu0 0.0
      %1644 = vmatpush1.msra.mxu0 %v1166
      %1645 = vmatprep.subr.mxu0 0.0
      %1646 = vmatpush1.msra.mxu0 %v1165
      %1647 = vmatprep.subr.mxu0 0.0
      %1648 = vmatpush1.msra.mxu0 %v1164
      %1649 = vmatprep.subr.mxu0 0.0
      %1650 = vmatpush1.msra.mxu0 %v1163
      %1651 = vmatprep.subr.mxu0 0.0
      %1652 = vmatpush2.msra.mxu0 0.0
      %1653 = vmatprep.subr.mxu0 0.0
      %1654 = vmatpush2.msra.mxu0 0.0
      %1655 = vmatprep.subr.mxu0 0.0
      %1656 = vmatpush2.msra.mxu0 0.0
      %1657 = vmatprep.subr.mxu0 0.0
      %1658 = vmatpush2.msra.mxu0 0.0
      %1659 = vmatprep.subr.mxu0 0.0
      %1660 = vmatpush2.msra.mxu0 0.0
      %1661 = vmatprep.subr.mxu0 0.0
      %1662 = vmatpush2.msra.mxu0 0.0
      %1663 = vmatprep.subr.mxu0 0.0
      %1664 = vmatpush2.msra.mxu0 0.0
      %1665 = vmatprep.subr.mxu0 0.0
      %1666 = vmatpush2.msra.mxu0 0.0
      %1667 = vmatprep.subr.mxu0 0.0
      %1668 = vmatpush2.msra.mxu0 0.0
      %1669 = vmatprep.subr.mxu0 0.0
      %1670 = vmatpush2.msra.mxu0 0.0
      %1671 = vmatprep.subr.mxu0 0.0
      %1672 = vmatpush2.msra.mxu0 0.0
      %1673 = vmatprep.subr.mxu0 0.0
      %1674 = vmatpush2.msra.mxu0 0.0
      %1675 = vmatprep.subr.mxu0 0.0
      %1676 = vmatpush2.msra.mxu0 0.0
      %1677 = vmatprep.subr.mxu0 0.0
      %1678 = vmatpush2.msra.mxu0 0.0
      %1679 = vmatprep.subr.mxu0 0.0
      %1680 = vmatpush2.msra.mxu0 0.0
      %1681 = vmatprep.subr.mxu0 0.0
      %1682 = vmatpush2.msra.mxu0 0.0
      %1683 = vmatprep.mubr.f32.mxu0 0.0
      %1684 = vmatmul.mubr.f32.gmra.mxu0 %v962
      %v1685 = vpop.f32.mrf.mxu0
      %v1686 = vadd.f32 %v1576, %v1685
      %v1687 = vpop.f32.mrf.mxu0
      %1688 = vmatprep.mubr.f32.mxu0 0.0
      %1689 = vmatmul.mubr.f32.gmra.mxu0 %v971
      %v1690 = vpop.f32.mrf.mxu0
      %v1691 = vadd.f32 %v1581, %v1690
      %v1692 = vpop.f32.mrf.mxu0
      %1693 = vmatprep.mubr.f32.mxu0 0.0
      %1694 = vmatmul.mubr.f32.gmra.mxu0 %v980
      %v1695 = vpop.f32.mrf.mxu0
      %v1696 = vadd.f32 %v1586, %v1695
      %v1697 = vpop.f32.mrf.mxu0
      %1698 = vmatprep.mubr.f32.mxu0 0.0
      %1699 = vmatmul.mubr.f32.gmra.mxu0 %v989
      %v1700 = vpop.f32.mrf.mxu0
      %v1701 = vadd.f32 %v1591, %v1700
      %v1702 = vpop.f32.mrf.mxu0
      %1703 = vmatprep.mubr.f32.mxu0 0.0
      %1704 = vmatmul.mubr.f32.gmra.mxu0 %v998
      %v1705 = vpop.f32.mrf.mxu0
      %v1706 = vadd.f32 %v1596, %v1705
      %v1707 = vpop.f32.mrf.mxu0
      %1708 = vmatprep.mubr.f32.mxu0 0.0
      %1709 = vmatmul.mubr.f32.gmra.mxu0 %v1007
      %v1710 = vpop.f32.mrf.mxu0
      %v1711 = vadd.f32 %v1601, %v1710
      %v1712 = vpop.f32.mrf.mxu0
      %1713 = vmatprep.mubr.f32.mxu0 0.0
      %1714 = vmatmul.mubr.f32.gmra.mxu0 %v1016
      %v1715 = vpop.f32.mrf.mxu0
      %v1716 = vadd.f32 %v1606, %v1715
      %v1717 = vpop.f32.mrf.mxu0
      %1718 = vmatprep.mubr.f32.mxu0 0.0
      %1719 = vmatmul.mubr.f32.gmra.mxu0 %v1025
      %v1720 = vpop.f32.mrf.mxu0
      %v1721 = vadd.f32 %v1611, %v1720
      %v1722 = vpop.f32.mrf.mxu0
      %1723 = vmatprep.mubr.f32.mxu0 0.0
      %1724 = vmatmul.mubr.f32.gmra.mxu0 %v1034
      %v1725 = vpop.f32.mrf.mxu0
      %v1726 = vadd.f32 %v1616, %v1725
      %v1727 = vpop.f32.mrf.mxu0
      %1728 = vdwg.mxu0
      %1729 = vst [vmem:[%s594] sm:$0xff] %v1686
      %1730 = vst [vmem:[%s594 + $0x8] sm:$0xff] %v1691
      %1731 = vst [vmem:[%s594 + $0x10] sm:$0xff] %v1696
      %1732 = vst [vmem:[%s594 + $0x18] sm:$0xff] %v1701
      %1733 = vst [vmem:[%s594 + $0x20] sm:$0xff] %v1706
      %1734 = vst [vmem:[%s594 + $0x28] sm:$0xff] %v1711
      %1735 = vst [vmem:[%s594 + $0x30] sm:$0xff] %v1716
      %1736 = vst [vmem:[%s594 + $0x38] sm:$0xff] %v1721
      %1737 = vst [vmem:[%s594 + $0x40] sm:$0xff] %v1726
      %v1738 = vld [vmem:[%s574] sm:$0xff]
      %v1739 = vld [vmem:[%s574 + $0x8] sm:$0xff]
      %v1740 = vld [vmem:[%s574 + $0x10] sm:$0xff]
      %v1741 = vld [vmem:[%s574 + $0x18] sm:$0xff]
      %v1742 = vld [vmem:[%s574 + $0x20] sm:$0xff]
      %v1743 = vld [vmem:[%s574 + $0x28] sm:$0xff]
      %v1744 = vld [vmem:[%s574 + $0x30] sm:$0xff]
      %v1745 = vld [vmem:[%s574 + $0x38] sm:$0xff]
      %v1746 = vld [vmem:[%s574 + $0x40] sm:$0xff]
      %1748 = vset.pattern.permute.xlu0 0
      %1749 = vperm.xlu0 %1748, %v1738
      %v1750 = vpop.permute.xlu0 %1749
      %1753 = vset.pattern.permute.xlu0 0
      %1754 = vperm.xlu0 %1753, %v1739
      %v1755 = vpop.permute.xlu0 %1754
      %1758 = vset.pattern.permute.xlu0 0
      %1759 = vperm.xlu0 %1758, %v1740
      %v1760 = vpop.permute.xlu0 %1759
      %1763 = vset.pattern.permute.xlu0 0
      %1764 = vperm.xlu0 %1763, %v1741
      %v1765 = vpop.permute.xlu0 %1764
      %1768 = vset.pattern.permute.xlu0 0
      %1769 = vperm.xlu0 %1768, %v1742
      %v1770 = vpop.permute.xlu0 %1769
      %1773 = vset.pattern.permute.xlu0 0
      %1774 = vperm.xlu0 %1773, %v1743
      %v1775 = vpop.permute.xlu0 %1774
      %1778 = vset.pattern.permute.xlu0 0
      %1779 = vperm.xlu0 %1778, %v1744
      %v1780 = vpop.permute.xlu0 %1779
      %1783 = vset.pattern.permute.xlu0 0
      %1784 = vperm.xlu0 %1783, %v1745
      %v1785 = vpop.permute.xlu0 %1784
      %1788 = vset.pattern.permute.xlu0 0
      %1789 = vperm.xlu0 %1788, %v1746
      %v1790 = vpop.permute.xlu0 %1789
      %v1792 = vmul.f32 %v1686, %v1750
      %v1793 = vmul.f32 %v1691, %v1755
      %v1794 = vmul.f32 %v1696, %v1760
      %v1795 = vmul.f32 %v1701, %v1765
      %v1796 = vmul.f32 %v1706, %v1770
      %v1797 = vmul.f32 %v1711, %v1775
      %v1798 = vmul.f32 %v1716, %v1780
      %v1799 = vmul.f32 %v1721, %v1785
      %v1800 = vmul.f32 %v1726, %v1790
      %v1801 = vadd.f32 %v1792, %v1793
      %v1802 = vadd.f32 %v1801, %v1794
      %v1803 = vadd.f32 %v1802, %v1795
      %v1804 = vadd.f32 %v1803, %v1796
      %v1805 = vadd.f32 %v1804, %v1797
      %v1806 = vadd.f32 %v1805, %v1798
      %v1807 = vadd.f32 %v1806, %v1799
      %v1808 = vadd.f32 %v1807, %v1800
      %v1809 = vrot.slane %v1808, 4
      %v1810 = vadd.f32 %v1808, %v1809
      %v1811 = vrot.slane %v1810, 2
      %v1812 = vadd.f32 %v1810, %v1811
      %v1813 = vrot.slane %v1812, 1
      %v1814 = vadd.f32 %v1812, %v1813
      %1815 = vst [vmem:[%s598] sm:$0x1] %v1814
      %v1816 = vmul.f32 %v1792, %v1686
      %v1817 = vmul.f32 %v1793, %v1691
      %v1818 = vmul.f32 %v1794, %v1696
      %v1819 = vmul.f32 %v1795, %v1701
      %v1820 = vmul.f32 %v1796, %v1706
      %v1821 = vmul.f32 %v1797, %v1711
      %v1822 = vmul.f32 %v1798, %v1716
      %v1823 = vmul.f32 %v1799, %v1721
      %v1824 = vmul.f32 %v1800, %v1726
      %v1825 = vadd.f32 %v1816, %v1817
      %v1826 = vadd.f32 %v1825, %v1818
      %v1827 = vadd.f32 %v1826, %v1819
      %v1828 = vadd.f32 %v1827, %v1820
      %v1829 = vadd.f32 %v1828, %v1821
      %v1830 = vadd.f32 %v1829, %v1822
      %v1831 = vadd.f32 %v1830, %v1823
      %v1832 = vadd.f32 %v1831, %v1824
      %v1833 = vrot.slane %v1832, 4
      %v1834 = vadd.f32 %v1832, %v1833
      %v1835 = vrot.slane %v1834, 2
      %v1836 = vadd.f32 %v1834, %v1835
      %v1837 = vrot.slane %v1836, 1
      %v1838 = vadd.f32 %v1836, %v1837
      %1839 = vst [vmem:[%s601] sm:$0x1] %v1838
      %s1840 = smul.u32 9, %s22
      %p1841 = scmp.lt.s32.totalorder %s1840, 80
      %s1842 = scalar_select %p1841, %s1840, 80
      %s1843 = smul.addr %s1842, 8
      %s1844 = scalar_lea.vmem %s8, %s1843
      %p1845 = scmp.lt.s32.totalorder %s22, 8
      %s1846 = scalar_select %p1845, %s22, 8
      %s1847 = scalar_lea.vmem %s9, %s1846
      %p1848 = scmp.lt.s32.totalorder %s22, 8
      %s1849 = scalar_select %p1848, %s22, 8
      %s1850 = scalar_lea.vmem %s10, %s1849
      // Predicated region
      $region53: #{conv_block_forward.4} parent=51 // pred_check
        %p1851 = pneg %p270
      $region54: #{conv_block_forward.4} parent=51 // pred_check_branch
        %1853 = sbr.rel (%p1851) target = $region56
      $region55: #{conv_block_forward.4} parent=51 // pred_region
        %s1854 = smul.u32 9, %s22
      $region56: #{conv_block_forward.4} parent=51 // pred_fallthru
        _
      // Predicated region
      $region57: #{conv_block_forward.4} parent=51 // pred_check
        %p1855 = pneg %p296
      $region58: #{conv_block_forward.4} parent=51 // pred_check_branch
        %1857 = sbr.rel (%p1855) target = $region60
      $region59: #{conv_block_forward.4} parent=51 // pred_region
        _
      $region60: #{conv_block_forward.4} parent=51 // pred_fallthru
        _
      // Predicated region
      $region61: #{conv_block_forward.4} parent=51 // pred_check
        %p1858 = pneg %p322
      $region62: #{conv_block_forward.4} parent=51 // pred_check_branch
        %1860 = sbr.rel (%p1858) target = $region64
      $region63: #{conv_block_forward.4} parent=51 // pred_region
        _
      $region64: #{conv_block_forward.4} parent=51 // pred_fallthru
        _
    $region52: #{conv_block_forward.4} parent=5 // pred_fallthru
      _
    %p1861 = scmp.le.s32.totalorder 2, %s17
    // Predicated region
    $region65: #{conv_block_forward.4} parent=5 // pred_check
      %p1862 = pneg %p1861
    $region66: #{conv_block_forward.4} parent=5 // pred_check_branch
      %1864 = sbr.rel (%p1862) target = $region68
    $region67: #{conv_block_forward.4} parent=5 // pred_region
      %s1865 = ssub.s32 %s17, 2
      // Predicated region
      $region69: #{conv_block_forward.4} parent=67 // pred_check
        %p1866 = pneg %p276
      $region70: #{conv_block_forward.4} parent=67 // pred_check_branch
        %1868 = sbr.rel (%p1866) target = $region72
      $region71: #{conv_block_forward.4} parent=67 // pred_region
        %s1869 = smul.u32 9, %s23
        %p1870 = scmp.lt.s32.totalorder %s1869, 80
        %s1871 = scalar_select %p1870, %s1869, 80
        %s1872 = smul.addr %s1871, 8
        %s1873 = scalar_lea.vmem %s8, %s1872
      $region72: #{conv_block_forward.4} parent=67 // pred_fallthru
        _
      // Predicated region
      $region73: #{conv_block_forward.4} parent=67 // pred_check
        %p1874 = pneg %p302
      $region74: #{conv_block_forward.4} parent=67 // pred_check_branch
        %1876 = sbr.rel (%p1874) target = $region76
      $region75: #{conv_block_forward.4} parent=67 // pred_region
        %p1877 = scmp.lt.s32.totalorder %s23, 8
        %s1878 = scalar_select %p1877, %s23, 8
        %s1879 = scalar_lea.vmem %s9, %s1878
      $region76: #{conv_block_forward.4} parent=67 // pred_fallthru
        _
      // Predicated region
      $region77: #{conv_block_forward.4} parent=67 // pred_check
        %p1880 = pneg %p328
      $region78: #{conv_block_forward.4} parent=67 // pred_check_branch
        %1882 = sbr.rel (%p1880) target = $region80
      $region79: #{conv_block_forward.4} parent=67 // pred_region
        %p1883 = scmp.lt.s32.totalorder %s23, 8
        %s1884 = scalar_select %p1883, %s23, 8
        %s1885 = scalar_lea.vmem %s10, %s1884
      $region80: #{conv_block_forward.4} parent=67 // pred_fallthru
        _
    $region68: #{conv_block_forward.4} parent=5 // pred_fallthru
      _
  $region6: #{conv_block_forward.4} parent=0 // loop_footer
    %s21 = sadd.s32 1, %s17
  $region7: #{conv_block_forward.4} parent=0 // loop_footer_branch
    %16 = sbr.rel target = $region3
  $region8: #{conv_block_forward.4} parent=0 // loop_exit
    _

</llo_original>
